<compile_context>
chip_gen: v7x
topology: tpu7x:2x2x1
jax: 0.10.0
libtpu: 0.0.40
codegen_flags: <defaults>
</compile_context>

<pallas_src>
import functools

import jax
import jax.numpy as jnp
import numpy as np
from jax import lax
from jax.experimental import pallas as pl
from jax.experimental.pallas import tpu as pltpu


# ---------------------------------------------------------------------------
# small helpers used inside the kernels
# ---------------------------------------------------------------------------
def _layernorm(x, gamma, beta, eps=1e-5):
    mu = jnp.mean(x, axis=-1, keepdims=True)
    var = jnp.mean(jnp.square(x - mu), axis=-1, keepdims=True)
    return (x - mu) * lax.rsqrt(var + eps) * gamma + beta


def _bf16_dot(a, b):
    # bf16 operands on the MXU, f32 accumulation.
    return jnp.dot(a.astype(jnp.bfloat16), b.astype(jnp.bfloat16),
                   preferred_element_type=jnp.float32)


# ---------------------------------------------------------------------------
# Pallas kernels
# ---------------------------------------------------------------------------
def edge_block_kernel(
    src_ref, dst_ref,                       # scalar-prefetch (SMEM): edge endpoints
    efeat_ref, nfeat_ref,                   # (TE, Ce) edge tile, (N, Cn) resident nodes
    w1e_ref, w1s_ref, w1d_ref, b1_ref,      # Linear1 split over the concat chunks
    w2_ref, b2_ref, gamma_ref, beta_ref,    # Linear2 + LayerNorm affine
    eout_ref,                               # (TE, Ce) output tile
    gsrc_ref, gdst_ref,                     # (TE, Cn) f32 scratch (gathered endpoints)
):
    te = eout_ref.shape[0]
    e0 = pl.program_id(0) * te

    # Index-based gather of the endpoint node features (replaces the old
    # dense (E,N) one-hot matmul).
    def gather_row(j, carry):
        s = src_ref[e0 + j]
        d = dst_ref[e0 + j]
        gsrc_ref[pl.ds(j, 1), :] = nfeat_ref[pl.ds(s, 1), :]
        gdst_ref[pl.ds(j, 1), :] = nfeat_ref[pl.ds(d, 1), :]
        return carry

    lax.fori_loop(0, te, gather_row, 0)

    efeat = efeat_ref[...]                   # (TE, Ce) f32
    # Linear([e, n_src, n_dst]) split into three MXU matmuls (no in-kernel concat).
    h = (_bf16_dot(efeat, w1e_ref[...])
         + _bf16_dot(gsrc_ref[...], w1s_ref[...])
         + _bf16_dot(gdst_ref[...], w1d_ref[...])
         + b1_ref[...])
    h = h * jax.nn.sigmoid(h)                # SiLU
    o = _bf16_dot(h, w2_ref[...]) + b2_ref[...]
    o = _layernorm(o, gamma_ref[...], beta_ref[...])
    eout_ref[...] = (o + efeat).astype(eout_ref.dtype)   # residual


def node_block_kernel(
    inedge_ref, indeg_ref,                  # scalar-prefetch (SMEM): padded CSR table
    nfeat_ref, efeat_ref,                   # (TN, Cn) node tile, (E, Ce) resident edges
    w1a_ref, w1n_ref, b1_ref,               # Linear1 split over the concat chunks
    w2_ref, b2_ref, gamma_ref, beta_ref,    # Linear2 + LayerNorm affine
    nout_ref,                               # (TN, Cn) output tile
    agg_ref,                                # (TN, Ce) f32 scratch (scatter-sum result)
    *, max_deg,
):
    tn = nout_ref.shape[0]
    ce = agg_ref.shape[1]
    n0 = pl.program_id(0) * tn

    # Scatter-sum of incoming edge features, expressed as a per-node walk over
    # the precomputed incoming-edge list (O(E*C), no dense (N,E) matmul).
    def agg_node(r, carry):
        node = n0 + r
        deg = indeg_ref[node]
        base = node * max_deg

        def add_edge(d, acc):
            eid = inedge_ref[base + d]
            return acc + efeat_ref[pl.ds(eid, 1), :]

        agg_ref[pl.ds(r, 1), :] = lax.fori_loop(
            0, deg, add_edge, jnp.zeros((1, ce), jnp.float32))
        return carry

    lax.fori_loop(0, tn, agg_node, 0)

    nfeat = nfeat_ref[...]                   # (TN, Cn) f32
    h = (_bf16_dot(agg_ref[...], w1a_ref[...])
         + _bf16_dot(nfeat, w1n_ref[...])
         + b1_ref[...])
    h = h * jax.nn.sigmoid(h)                # SiLU
    o = _bf16_dot(h, w2_ref[...]) + b2_ref[...]
    o = _layernorm(o, gamma_ref[...], beta_ref[...])
    nout_ref[...] = (o + nfeat).astype(nout_ref.dtype)   # residual


# ---------------------------------------------------------------------------
# pallas_call wrappers (tiled, pipelined grids)
# ---------------------------------------------------------------------------
def run_edge_block(efeat, nfeat, src, dst, p, *, te):
    E, Ce = efeat.shape
    N, Cn = nfeat.shape
    H = p["w1e"].shape[1]
    assert E % te == 0

    const = lambda i, src, dst: (0, 0)       # resident blocks: DMA'd once
    tile_e = lambda i, src, dst: (i, 0)      # per-edge-tile blocks

    cost = pl.CostEstimate(
        flops=int(2 * E * H * (Ce + 2 * Cn) + 2 * E * H * Ce),
        transcendentals=int(E * H + E),
        bytes_accessed=int(4 * (2 * E * Ce + N * Cn)
                           + 2 * (Ce * H + 2 * Cn * H + H * Ce)
                           + 4 * (H + 3 * Ce)),
    )
    w = lambda x: x.astype(jnp.bfloat16)

    return pl.pallas_call(
        edge_block_kernel,
        out_shape=jax.ShapeDtypeStruct((E, Ce), efeat.dtype),
        grid_spec=pltpu.PrefetchScalarGridSpec(
            num_scalar_prefetch=2,
            grid=(E // te,),
            in_specs=[
                pl.BlockSpec((te, Ce), tile_e),   # efeat tile
                pl.BlockSpec((N, Cn), const),     # nfeat, VMEM-resident
                pl.BlockSpec((Ce, H), const),     # w1e
                pl.BlockSpec((Cn, H), const),     # w1s
                pl.BlockSpec((Cn, H), const),     # w1d
                pl.BlockSpec((1, H), const),      # b1
                pl.BlockSpec((H, Ce), const),     # w2
                pl.BlockSpec((1, Ce), const),     # b2
                pl.BlockSpec((1, Ce), const),     # gamma
                pl.BlockSpec((1, Ce), const),     # beta
            ],
            out_specs=pl.BlockSpec((te, Ce), tile_e),
            scratch_shapes=[pltpu.VMEM((te, Cn), jnp.float32),
                            pltpu.VMEM((te, Cn), jnp.float32)],
        ),
        compiler_params=pltpu.CompilerParams(dimension_semantics=("parallel",)),
        cost_estimate=cost,
    )(src, dst, efeat, nfeat,
      w(p["w1e"]), w(p["w1s"]), w(p["w1d"]), p["b1"],
      w(p["w2"]), p["b2"], p["gamma"], p["beta"])


def run_node_block(efeat, nfeat, in_edges_flat, in_deg, p, *, tn, max_deg):
    E, Ce = efeat.shape
    N, Cn = nfeat.shape
    H = p["w1a"].shape[1]
    assert N % tn == 0

    const = lambda i, ie, dg: (0, 0)
    tile_n = lambda i, ie, dg: (i, 0)

    cost = pl.CostEstimate(
        flops=int(2 * N * H * (Ce + Cn) + 2 * N * H * Cn + 2 * E * Ce),
        transcendentals=int(N * H + N),
        bytes_accessed=int(4 * (2 * N * Cn + E * Ce)
                           + 2 * (Ce * H + Cn * H + H * Cn)
                           + 4 * (H + 3 * Cn)),
    )
    w = lambda x: x.astype(jnp.bfloat16)
    kernel = functools.partial(node_block_kernel, max_deg=max_deg)

    return pl.pallas_call(
        kernel,
        out_shape=jax.ShapeDtypeStruct((N, Cn), nfeat.dtype),
        grid_spec=pltpu.PrefetchScalarGridSpec(
            num_scalar_prefetch=2,
            grid=(N // tn,),
            in_specs=[
                pl.BlockSpec((tn, Cn), tile_n),   # nfeat tile
                pl.BlockSpec((E, Ce), const),     # updated efeat, VMEM-resident
                pl.BlockSpec((Ce, H), const),     # w1a (aggregated-edge chunk)
                pl.BlockSpec((Cn, H), const),     # w1n
                pl.BlockSpec((1, H), const),      # b1
                pl.BlockSpec((H, Cn), const),     # w2
                pl.BlockSpec((1, Cn), const),     # b2
                pl.BlockSpec((1, Cn), const),     # gamma
                pl.BlockSpec((1, Cn), const),     # beta
            ],
            out_specs=pl.BlockSpec((tn, Cn), tile_n),
            scratch_shapes=[pltpu.VMEM((tn, Ce), jnp.float32)],
        ),
        compiler_params=pltpu.CompilerParams(dimension_semantics=("parallel",)),
        cost_estimate=cost,
    )(in_edges_flat, in_deg, nfeat, efeat,
      w(p["w1a"]), w(p["w1n"]), p["b1"],
      w(p["w2"]), p["b2"], p["gamma"], p["beta"])


@functools.partial(jax.jit, static_argnames=("max_deg", "te", "tn"))
def graphcast_processor_forward(efeat, nfeat, src, dst, in_edges_flat, in_deg,
                                layer_params, *, max_deg, te=128, tn=64):
    """Forward pass of GraphCastProcessor (aggregation='sum', hidden_layers=1)."""
    for lp in layer_params:
        efeat = run_edge_block(efeat, nfeat, src, dst, lp["edge"], te=te)
        nfeat = run_node_block(efeat, nfeat, in_edges_flat, in_deg, lp["node"],
                               tn=tn, max_deg=max_deg)
    return efeat, nfeat


# ---------------------------------------------------------------------------
# Pure-JAX reference (same math + same bf16 matmul policy, no Pallas)
# ---------------------------------------------------------------------------
def reference_forward(efeat, nfeat, src, dst, layer_params, num_nodes):
    def ln(x, g, b, eps=1e-5):
        mu = x.mean(-1, keepdims=True)
        var = ((x - mu) ** 2).mean(-1, keepdims=True)
        return (x - mu) / jnp.sqrt(var + eps) * g + b

    def mm(a, b):
        return jnp.dot(a.astype(jnp.bfloat16), b.astype(jnp.bfloat16),
                       preferred_element_type=jnp.float32)

    for lp in layer_params:
        p = lp["edge"]
        h = (mm(efeat, p["w1e"]) + mm(nfeat[src], p["w1s"])
             + mm(nfeat[dst], p["w1d"]) + p["b1"])
        h = jax.nn.silu(h)
        efeat = ln(mm(h, p["w2"]) + p["b2"], p["gamma"], p["beta"]) + efeat

        p = lp["node"]
        agg = jnp.zeros((num_nodes, efeat.shape[1]), efeat.dtype).at[dst].add(efeat)
        h = mm(agg, p["w1a"]) + mm(nfeat, p["w1n"]) + p["b1"]
        h = jax.nn.silu(h)
        nfeat = ln(mm(h, p["w2"]) + p["b2"], p["gamma"], p["beta"]) + nfeat
    return efeat, nfeat


# ---------------------------------------------------------------------------
# Parameter / graph-structure construction
# ---------------------------------------------------------------------------
def init_params(key, processor_layers, dim_nodes, dim_edges, hidden_dim):
    def rnd(k, shape, scale=0.1):
        return jax.random.normal(k, shape, jnp.float32) * scale

    layers = []
    for _ in range(processor_layers):
        keys = jax.random.split(key, 16)
        key = keys[0]
        edge = {
            "w1e": rnd(keys[1], (dim_edges, hidden_dim)),
            "w1s": rnd(keys[2], (dim_nodes, hidden_dim)),
            "w1d": rnd(keys[3], (dim_nodes, hidden_dim)),
            "b1": rnd(keys[4], (1, hidden_dim)),
            "w2": rnd(keys[5], (hidden_dim, dim_edges)),
            "b2": rnd(keys[6], (1, dim_edges)),
            "gamma": 1.0 + rnd(keys[7], (1, dim_edges)),
            "beta": rnd(keys[8], (1, dim_edges)),
        }
        node = {
            "w1a": rnd(keys[9], (dim_edges, hidden_dim)),
            "w1n": rnd(keys[10], (dim_nodes, hidden_dim)),
            "b1": rnd(keys[11], (1, hidden_dim)),
            "w2": rnd(keys[12], (hidden_dim, dim_nodes)),
            "b2": rnd(keys[13], (1, dim_nodes)),
            "gamma": 1.0 + rnd(keys[14], (1, dim_nodes)),
            "beta": rnd(keys[15], (1, dim_nodes)),
        }
        layers.append({"edge": edge, "node": node})
    return layers


def build_incoming_edge_table(dst, num_nodes):
    """Padded CSR-like table: for each node, the ids of its incoming edges."""
    dst_np = np.asarray(dst)
    deg = np.bincount(dst_np, minlength=num_nodes).astype(np.int32)
    max_deg = int(max(int(deg.max()), 1))
    in_edges = np.zeros((num_nodes, max_deg), dtype=np.int32)
    fill = np.zeros(num_nodes, dtype=np.int64)
    for e, d in enumerate(dst_np):
        in_edges[d, fill[d]] = e
        fill[d] += 1
    return jnp.asarray(in_edges.reshape(-1)), jnp.asarray(deg), max_deg


# ---------------------------------------------------------------------------
if __name__ == "__main__":
    # Small config consistent with the module (processor defaults scaled down):
    # 2 processor layers, lane-dense node/edge/hidden dims = 128,
    # hidden_layers = 1, aggregation = "sum".
    NUM_NODES, NUM_EDGES = 128, 256
    DIM_NODES = DIM_EDGES = HIDDEN = 128
    PROC_LAYERS = 2
    TILE_EDGES, TILE_NODES = 128, 64

    key = jax.random.PRNGKey(0)
    k_e, k_n, k_s, k_d, k_p = jax.random.split(key, 5)

    efeat = jax.random.normal(k_e, (NUM_EDGES, DIM_EDGES), jnp.float32)
    nfeat = jax.random.normal(k_n, (NUM_NODES, DIM_NODES), jnp.float32)
    src = jax.random.randint(k_s, (NUM_EDGES,), 0, NUM_NODES, jnp.int32)
    dst = jax.random.randint(k_d, (NUM_EDGES,), 0, NUM_NODES, jnp.int32)

    params = init_params(k_p, PROC_LAYERS, DIM_NODES, DIM_EDGES, HIDDEN)
    in_edges_flat, in_deg, max_deg = build_incoming_edge_table(dst, NUM_NODES)

    e_out, n_out = graphcast_processor_forward(
        efeat, nfeat, src, dst, in_edges_flat, in_deg, params,
        max_deg=max_deg, te=TILE_EDGES, tn=TILE_NODES)
    e_out = jax.block_until_ready(e_out)
    n_out = jax.block_until_ready(n_out)

    e_ref, n_ref = reference_forward(efeat, nfeat, src, dst, params, NUM_NODES)
    assert jnp.allclose(e_out, e_ref, atol=1e-2, rtol=1e-2), "edge feature mismatch"
    assert jnp.allclose(n_out, n_ref, atol=1e-2, rtol=1e-2), "node feature mismatch"

    print("KERNEL_OK")
</pallas_src>

<mosaic_0001>
module attributes {stable_mosaic.version = 11 : i64} {
  func.func @node_block_kernel(%arg0: i32, %arg1: memref<768xi32, #tpu.memory_space<smem>>, %arg2: memref<128xi32, #tpu.memory_space<smem>>, %arg3: memref<64x128xf32, #tpu.memory_space<vmem>>, %arg4: memref<256x128xf32, #tpu.memory_space<vmem>>, %arg5: memref<128x128xbf16, #tpu.memory_space<vmem>>, %arg6: memref<128x128xbf16, #tpu.memory_space<vmem>>, %arg7: memref<1x128xf32, #tpu.memory_space<vmem>>, %arg8: memref<128x128xbf16, #tpu.memory_space<vmem>>, %arg9: memref<1x128xf32, #tpu.memory_space<vmem>>, %arg10: memref<1x128xf32, #tpu.memory_space<vmem>>, %arg11: memref<1x128xf32, #tpu.memory_space<vmem>>, %arg12: memref<64x128xf32, #tpu.memory_space<vmem>>, %arg13: memref<64x128xf32, #tpu.memory_space<vmem>>) attributes {dimension_semantics = [#tpu.dimension_semantics<parallel>], iteration_bounds = array<i64: 2>, scalar_prefetch = 2 : i64, scratch_operands = 1 : i64, tpu.core_type = #tpu.core_type<tc>, window_params = [{transform_indices = @transform_0, window_bounds = array<i64: 64, 128>}, {pipeline_mode = #tpu.pipeline_mode<synchronous>, transform_indices = @transform_1, window_bounds = array<i64: 256, 128>}, {pipeline_mode = #tpu.pipeline_mode<synchronous>, transform_indices = @transform_2, window_bounds = array<i64: 128, 128>}, {pipeline_mode = #tpu.pipeline_mode<synchronous>, transform_indices = @transform_3, window_bounds = array<i64: 128, 128>}, {pipeline_mode = #tpu.pipeline_mode<synchronous>, transform_indices = @transform_4, window_bounds = array<i64: 1, 128>}, {pipeline_mode = #tpu.pipeline_mode<synchronous>, transform_indices = @transform_5, window_bounds = array<i64: 128, 128>}, {pipeline_mode = #tpu.pipeline_mode<synchronous>, transform_indices = @transform_6, window_bounds = array<i64: 1, 128>}, {pipeline_mode = #tpu.pipeline_mode<synchronous>, transform_indices = @transform_7, window_bounds = array<i64: 1, 128>}, {pipeline_mode = #tpu.pipeline_mode<synchronous>, transform_indices = @transform_8, window_bounds = array<i64: 1, 128>}, {transform_indices = @transform_9, window_bounds = array<i64: 64, 128>}]} {
    %c64_i32 = arith.constant 64 : i32
    %0 = arith.muli %arg0, %c64_i32 : i32
    %c0_i32 = arith.constant 0 : i32
    %c64_i32_0 = arith.constant 64 : i32
    %1 = arith.addi %c0_i32, %c64_i32_0 : i32
    %c1_i32 = arith.constant 1 : i32
    scf.for %arg14 = %c0_i32 to %1 step %c1_i32  : i32 {
      %52 = arith.addi %0, %arg14 : i32
      %53 = arith.index_cast %52 : i32 to index
      %54 = memref.load %arg2[%53] : memref<128xi32, #tpu.memory_space<smem>>
      %c6_i32 = arith.constant 6 : i32
      %55 = arith.muli %52, %c6_i32 : i32
      %cst_29 = arith.constant 0.000000e+00 : f32
      %56 = vector.broadcast %cst_29 : f32 to vector<1x128xf32>
      %c0_i32_30 = arith.constant 0 : i32
      %57 = arith.subi %54, %c0_i32_30 : i32
      %58 = arith.addi %c0_i32_30, %57 : i32
      %c1_i32_31 = arith.constant 1 : i32
      %59 = scf.for %arg15 = %c0_i32_30 to %58 step %c1_i32_31 iter_args(%arg16 = %56) -> (vector<1x128xf32>)  : i32 {
        %62 = arith.addi %55, %arg15 : i32
        %63 = arith.index_cast %62 : i32 to index
        %64 = memref.load %arg1[%63] : memref<768xi32, #tpu.memory_space<smem>>
        %65 = arith.index_cast %64 : i32 to index
        %c0_33 = arith.constant 0 : index
        %66 = vector.load %arg4[%65, %c0_33] : memref<256x128xf32, #tpu.memory_space<vmem>>, vector<1x128xf32>
        %67 = arith.addf %arg16, %66 : vector<1x128xf32>
        scf.yield %67 : vector<1x128xf32>
      }
      %60 = arith.index_cast %arg14 : i32 to index
      %c0_32 = arith.constant 0 : index
      %61 = vector.load %arg13[%60, %c0_32] : memref<64x128xf32, #tpu.memory_space<vmem>>, vector<1x128xf32>
      tpu.vector_store %arg13[%60, %c0_32], %59 {strides = array<i32>} : memref<64x128xf32, #tpu.memory_space<vmem>>, vector<1x128xf32>,
    }
    %c64_i32_1 = arith.constant 64 : i32
    %c0 = arith.constant 0 : index
    %c0_2 = arith.constant 0 : index
    %2 = vector.load %arg3[%c0, %c0_2] : memref<64x128xf32, #tpu.memory_space<vmem>>, vector<64x128xf32>
    %c0_3 = arith.constant 0 : index
    %c0_4 = arith.constant 0 : index
    %3 = vector.load %arg13[%c0_3, %c0_4] : memref<64x128xf32, #tpu.memory_space<vmem>>, vector<64x128xf32>
    %c0_5 = arith.constant 0 : index
    %c0_6 = arith.constant 0 : index
    %4 = vector.load %arg5[%c0_5, %c0_6] : memref<128x128xbf16, #tpu.memory_space<vmem>>, vector<128x128xbf16>
    %5 = arith.truncf %3 : vector<64x128xf32> to vector<64x128xbf16>
    %cst = arith.constant dense<0.000000e+00> : vector<64x128xf32>
    %6 = tpu.matmul %5, %4, %cst {dimension_numbers = #tpu.dot_dimension_numbers<[1], [0], [0], [1], [0, 0, 1, 1], [], []>} : vector<64x128xbf16>, vector<128x128xbf16>, vector<64x128xf32> -> vector<64x128xf32>
    %c0_7 = arith.constant 0 : index
    %c0_8 = arith.constant 0 : index
    %7 = vector.load %arg6[%c0_7, %c0_8] : memref<128x128xbf16, #tpu.memory_space<vmem>>, vector<128x128xbf16>
    %8 = arith.truncf %2 : vector<64x128xf32> to vector<64x128xbf16>
    %cst_9 = arith.constant dense<0.000000e+00> : vector<64x128xf32>
    %9 = tpu.matmul %8, %7, %cst_9 {dimension_numbers = #tpu.dot_dimension_numbers<[1], [0], [0], [1], [0, 0, 1, 1], [], []>} : vector<64x128xbf16>, vector<128x128xbf16>, vector<64x128xf32> -> vector<64x128xf32>
    %10 = arith.addf %6, %9 : vector<64x128xf32>
    %c0_10 = arith.constant 0 : index
    %c0_11 = arith.constant 0 : index
    %11 = vector.load %arg7[%c0_10, %c0_11] : memref<1x128xf32, #tpu.memory_space<vmem>>, vector<1x128xf32>
    %12 = vector.broadcast %11 : vector<1x128xf32> to vector<64x128xf32>
    %13 = arith.addf %10, %12 : vector<64x128xf32>
    %14 = arith.negf %13 : vector<64x128xf32>
    %15 = math.exp %14 : vector<64x128xf32>
    %cst_12 = arith.constant 1.000000e+00 : f32
    %16 = vector.broadcast %cst_12 : f32 to vector<64x128xf32>
    %17 = arith.addf %16, %15 : vector<64x128xf32>
    %18 = arith.divf %16, %17 : vector<64x128xf32>
    %19 = arith.mulf %13, %18 : vector<64x128xf32>
    %c0_13 = arith.constant 0 : index
    %c0_14 = arith.constant 0 : index
    %20 = vector.load %arg8[%c0_13, %c0_14] : memref<128x128xbf16, #tpu.memory_space<vmem>>, vector<128x128xbf16>
    %21 = arith.truncf %19 : vector<64x128xf32> to vector<64x128xbf16>
    %cst_15 = arith.constant dense<0.000000e+00> : vector<64x128xf32>
    %22 = tpu.matmul %21, %20, %cst_15 {dimension_numbers = #tpu.dot_dimension_numbers<[1], [0], [0], [1], [0, 0, 1, 1], [], []>} : vector<64x128xbf16>, vector<128x128xbf16>, vector<64x128xf32> -> vector<64x128xf32>
    %c0_16 = arith.constant 0 : index
    %c0_17 = arith.constant 0 : index
    %23 = vector.load %arg9[%c0_16, %c0_17] : memref<1x128xf32, #tpu.memory_space<vmem>>, vector<1x128xf32>
    %24 = vector.broadcast %23 : vector<1x128xf32> to vector<64x128xf32>
    %25 = arith.addf %22, %24 : vector<64x128xf32>
    %c0_18 = arith.constant 0 : index
    %c0_19 = arith.constant 0 : index
    %26 = vector.load %arg10[%c0_18, %c0_19] : memref<1x128xf32, #tpu.memory_space<vmem>>, vector<1x128xf32>
    %c0_20 = arith.constant 0 : index
    %c0_21 = arith.constant 0 : index
    %27 = vector.load %arg11[%c0_20, %c0_21] : memref<1x128xf32, #tpu.memory_space<vmem>>, vector<1x128xf32>
    %cst_22 = arith.constant dense<0.000000e+00> : vector<64xf32>
    %28 = vector.multi_reduction <add>, %25, %cst_22 [1] : vector<64x128xf32> to vector<64xf32>
    %29 = vector.shape_cast %28 : vector<64xf32> to vector<64x1xf32>
    %cst_23 = arith.constant 1.280000e+02 : f32
    %30 = vector.broadcast %cst_23 : f32 to vector<64x1xf32>
    %31 = arith.divf %29, %30 : vector<64x1xf32>
    %32 = vector.broadcast %31 : vector<64x1xf32> to vector<64x128xf32>
    %33 = arith.subf %25, %32 : vector<64x128xf32>
    %34 = arith.mulf %33, %33 : vector<64x128xf32>
    %cst_24 = arith.constant dense<0.000000e+00> : vector<64xf32>
    %35 = vector.multi_reduction <add>, %34, %cst_24 [1] : vector<64x128xf32> to vector<64xf32>
    %36 = vector.shape_cast %35 : vector<64xf32> to vector<64x1xf32>
    %cst_25 = arith.constant 1.280000e+02 : f32
    %37 = vector.broadcast %cst_25 : f32 to vector<64x1xf32>
    %38 = arith.divf %36, %37 : vector<64x1xf32>
    %39 = vector.broadcast %31 : vector<64x1xf32> to vector<64x128xf32>
    %40 = arith.subf %25, %39 : vector<64x128xf32>
    %cst_26 = arith.constant 9.99999974E-6 : f32
    %41 = vector.broadcast %cst_26 : f32 to vector<64x1xf32>
    %42 = arith.addf %38, %41 : vector<64x1xf32>
    %43 = math.rsqrt %42 : vector<64x1xf32>
    %44 = vector.broadcast %43 : vector<64x1xf32> to vector<64x128xf32>
    %45 = arith.mulf %40, %44 : vector<64x128xf32>
    %46 = vector.broadcast %26 : vector<1x128xf32> to vector<64x128xf32>
    %47 = arith.mulf %45, %46 : vector<64x128xf32>
    %48 = vector.broadcast %27 : vector<1x128xf32> to vector<64x128xf32>
    %49 = arith.addf %47, %48 : vector<64x128xf32>
    %50 = arith.addf %49, %2 : vector<64x128xf32>
    %c0_27 = arith.constant 0 : index
    %c0_28 = arith.constant 0 : index
    %51 = vector.load %arg12[%c0_27, %c0_28] : memref<64x128xf32, #tpu.memory_space<vmem>>, vector<64x128xf32>
    tpu.vector_store %arg12[%c0_27, %c0_28], %50 {strides = array<i32>} : memref<64x128xf32, #tpu.memory_space<vmem>>, vector<64x128xf32>,
    return
  }
  func.func @transform_0(%arg0: i32, %arg1: memref<768xi32, #tpu.memory_space<smem>>, %arg2: memref<128xi32, #tpu.memory_space<smem>>) -> (i32, i32) {
    %c0_i32 = arith.constant 0 : i32
    %c0_i32_0 = arith.constant 0 : i32
    return %arg0, %c0_i32 : i32, i32
  }
  func.func @transform_1(%arg0: i32, %arg1: memref<768xi32, #tpu.memory_space<smem>>, %arg2: memref<128xi32, #tpu.memory_space<smem>>) -> (i32, i32) {
    %c0_i32 = arith.constant 0 : i32
    %c0_i32_0 = arith.constant 0 : i32
    %c0_i32_1 = arith.constant 0 : i32
    return %c0_i32, %c0_i32_0 : i32, i32
  }
  func.func @transform_2(%arg0: i32, %arg1: memref<768xi32, #tpu.memory_space<smem>>, %arg2: memref<128xi32, #tpu.memory_space<smem>>) -> (i32, i32) {
    %c0_i32 = arith.constant 0 : i32
    %c0_i32_0 = arith.constant 0 : i32
    %c0_i32_1 = arith.constant 0 : i32
    return %c0_i32, %c0_i32_0 : i32, i32
  }
  func.func @transform_3(%arg0: i32, %arg1: memref<768xi32, #tpu.memory_space<smem>>, %arg2: memref<128xi32, #tpu.memory_space<smem>>) -> (i32, i32) {
    %c0_i32 = arith.constant 0 : i32
    %c0_i32_0 = arith.constant 0 : i32
    %c0_i32_1 = arith.constant 0 : i32
    return %c0_i32, %c0_i32_0 : i32, i32
  }
  func.func @transform_4(%arg0: i32, %arg1: memref<768xi32, #tpu.memory_space<smem>>, %arg2: memref<128xi32, #tpu.memory_space<smem>>) -> (i32, i32) {
    %c0_i32 = arith.constant 0 : i32
    %c0_i32_0 = arith.constant 0 : i32
    %c0_i32_1 = arith.constant 0 : i32
    return %c0_i32, %c0_i32_0 : i32, i32
  }
  func.func @transform_5(%arg0: i32, %arg1: memref<768xi32, #tpu.memory_space<smem>>, %arg2: memref<128xi32, #tpu.memory_space<smem>>) -> (i32, i32) {
    %c0_i32 = arith.constant 0 : i32
    %c0_i32_0 = arith.constant 0 : i32
    %c0_i32_1 = arith.constant 0 : i32
    return %c0_i32, %c0_i32_0 : i32, i32
  }
  func.func @transform_6(%arg0: i32, %arg1: memref<768xi32, #tpu.memory_space<smem>>, %arg2: memref<128xi32, #tpu.memory_space<smem>>) -> (i32, i32) {
    %c0_i32 = arith.constant 0 : i32
    %c0_i32_0 = arith.constant 0 : i32
    %c0_i32_1 = arith.constant 0 : i32
    return %c0_i32, %c0_i32_0 : i32, i32
  }
  func.func @transform_7(%arg0: i32, %arg1: memref<768xi32, #tpu.memory_space<smem>>, %arg2: memref<128xi32, #tpu.memory_space<smem>>) -> (i32, i32) {
    %c0_i32 = arith.constant 0 : i32
    %c0_i32_0 = arith.constant 0 : i32
    %c0_i32_1 = arith.constant 0 : i32
    return %c0_i32, %c0_i32_0 : i32, i32
  }
  func.func @transform_8(%arg0: i32, %arg1: memref<768xi32, #tpu.memory_space<smem>>, %arg2: memref<128xi32, #tpu.memory_space<smem>>) -> (i32, i32) {
    %c0_i32 = arith.constant 0 : i32
    %c0_i32_0 = arith.constant 0 : i32
    %c0_i32_1 = arith.constant 0 : i32
    return %c0_i32, %c0_i32_0 : i32, i32
  }
  func.func @transform_9(%arg0: i32, %arg1: memref<768xi32, #tpu.memory_space<smem>>, %arg2: memref<128xi32, #tpu.memory_space<smem>>) -> (i32, i32) {
    %c0_i32 = arith.constant 0 : i32
    %c0_i32_0 = arith.constant 0 : i32
    return %arg0, %c0_i32 : i32, i32
  }
}

module attributes {stable_mosaic.version = 11 : i64} {
  func.func @edge_block_kernel(%arg0: i32, %arg1: memref<256xi32, #tpu.memory_space<smem>>, %arg2: memref<256xi32, #tpu.memory_space<smem>>, %arg3: memref<128x128xf32, #tpu.memory_space<vmem>>, %arg4: memref<128x128xf32, #tpu.memory_space<vmem>>, %arg5: memref<128x128xbf16, #tpu.memory_space<vmem>>, %arg6: memref<128x128xbf16, #tpu.memory_space<vmem>>, %arg7: memref<128x128xbf16, #tpu.memory_space<vmem>>, %arg8: memref<1x128xf32, #tpu.memory_space<vmem>>, %arg9: memref<128x128xbf16, #tpu.memory_space<vmem>>, %arg10: memref<1x128xf32, #tpu.memory_space<vmem>>, %arg11: memref<1x128xf32, #tpu.memory_space<vmem>>, %arg12: memref<1x128xf32, #tpu.memory_space<vmem>>, %arg13: memref<128x128xf32, #tpu.memory_space<vmem>>, %arg14: memref<128x128xf32, #tpu.memory_space<vmem>>, %arg15: memref<128x128xf32, #tpu.memory_space<vmem>>) attributes {dimension_semantics = [#tpu.dimension_semantics<parallel>], iteration_bounds = array<i64: 2>, scalar_prefetch = 2 : i64, scratch_operands = 2 : i64, tpu.core_type = #tpu.core_type<tc>, window_params = [{transform_indices = @transform_0, window_bounds = array<i64: 128, 128>}, {pipeline_mode = #tpu.pipeline_mode<synchronous>, transform_indices = @transform_1, window_bounds = array<i64: 128, 128>}, {pipeline_mode = #tpu.pipeline_mode<synchronous>, transform_indices = @transform_2, window_bounds = array<i64: 128, 128>}, {pipeline_mode = #tpu.pipeline_mode<synchronous>, transform_indices = @transform_3, window_bounds = array<i64: 128, 128>}, {pipeline_mode = #tpu.pipeline_mode<synchronous>, transform_indices = @transform_4, window_bounds = array<i64: 128, 128>}, {pipeline_mode = #tpu.pipeline_mode<synchronous>, transform_indices = @transform_5, window_bounds = array<i64: 1, 128>}, {pipeline_mode = #tpu.pipeline_mode<synchronous>, transform_indices = @transform_6, window_bounds = array<i64: 128, 128>}, {pipeline_mode = #tpu.pipeline_mode<synchronous>, transform_indices = @transform_7, window_bounds = array<i64: 1, 128>}, {pipeline_mode = #tpu.pipeline_mode<synchronous>, transform_indices = @transform_8, window_bounds = array<i64: 1, 128>}, {pipeline_mode = #tpu.pipeline_mode<synchronous>, transform_indices = @transform_9, window_bounds = array<i64: 1, 128>}, {transform_indices = @transform_10, window_bounds = array<i64: 128, 128>}]} {
    %c128_i32 = arith.constant 128 : i32
    %0 = arith.muli %arg0, %c128_i32 : i32
    %c0_i32 = arith.constant 0 : i32
    %c128_i32_0 = arith.constant 128 : i32
    %1 = arith.addi %c0_i32, %c128_i32_0 : i32
    %c1_i32 = arith.constant 1 : i32
    scf.for %arg16 = %c0_i32 to %1 step %c1_i32  : i32 {
      %57 = arith.addi %0, %arg16 : i32
      %58 = arith.index_cast %57 : i32 to index
      %59 = memref.load %arg1[%58] : memref<256xi32, #tpu.memory_space<smem>>
      %60 = arith.addi %0, %arg16 : i32
      %61 = arith.index_cast %60 : i32 to index
      %62 = memref.load %arg2[%61] : memref<256xi32, #tpu.memory_space<smem>>
      %63 = arith.index_cast %59 : i32 to index
      %c0_34 = arith.constant 0 : index
      %64 = vector.load %arg4[%63, %c0_34] : memref<128x128xf32, #tpu.memory_space<vmem>>, vector<1x128xf32>
      %65 = arith.index_cast %arg16 : i32 to index
      %c0_35 = arith.constant 0 : index
      %66 = vector.load %arg14[%65, %c0_35] : memref<128x128xf32, #tpu.memory_space<vmem>>, vector<1x128xf32>
      tpu.vector_store %arg14[%65, %c0_35], %64 {strides = array<i32>} : memref<128x128xf32, #tpu.memory_space<vmem>>, vector<1x128xf32>,
      %67 = arith.index_cast %62 : i32 to index
      %c0_36 = arith.constant 0 : index
      %68 = vector.load %arg4[%67, %c0_36] : memref<128x128xf32, #tpu.memory_space<vmem>>, vector<1x128xf32>
      %69 = arith.index_cast %arg16 : i32 to index
      %c0_37 = arith.constant 0 : index
      %70 = vector.load %arg15[%69, %c0_37] : memref<128x128xf32, #tpu.memory_space<vmem>>, vector<1x128xf32>
      tpu.vector_store %arg15[%69, %c0_37], %68 {strides = array<i32>} : memref<128x128xf32, #tpu.memory_space<vmem>>, vector<1x128xf32>,
    }
    %c128_i32_1 = arith.constant 128 : i32
    %c0 = arith.constant 0 : index
    %c0_2 = arith.constant 0 : index
    %2 = vector.load %arg3[%c0, %c0_2] : memref<128x128xf32, #tpu.memory_space<vmem>>, vector<128x128xf32>
    %c0_3 = arith.constant 0 : index
    %c0_4 = arith.constant 0 : index
    %3 = vector.load %arg5[%c0_3, %c0_4] : memref<128x128xbf16, #tpu.memory_space<vmem>>, vector<128x128xbf16>
    %4 = arith.truncf %2 : vector<128x128xf32> to vector<128x128xbf16>
    %cst = arith.constant dense<0.000000e+00> : vector<128x128xf32>
    %5 = tpu.matmul %4, %3, %cst {dimension_numbers = #tpu.dot_dimension_numbers<[1], [0], [0], [1], [0, 0, 1, 1], [], []>} : vector<128x128xbf16>, vector<128x128xbf16>, vector<128x128xf32> -> vector<128x128xf32>
    %c0_5 = arith.constant 0 : index
    %c0_6 = arith.constant 0 : index
    %6 = vector.load %arg14[%c0_5, %c0_6] : memref<128x128xf32, #tpu.memory_space<vmem>>, vector<128x128xf32>
    %c0_7 = arith.constant 0 : index
    %c0_8 = arith.constant 0 : index
    %7 = vector.load %arg6[%c0_7, %c0_8] : memref<128x128xbf16, #tpu.memory_space<vmem>>, vector<128x128xbf16>
    %8 = arith.truncf %6 : vector<128x128xf32> to vector<128x128xbf16>
    %cst_9 = arith.constant dense<0.000000e+00> : vector<128x128xf32>
    %9 = tpu.matmul %8, %7, %cst_9 {dimension_numbers = #tpu.dot_dimension_numbers<[1], [0], [0], [1], [0, 0, 1, 1], [], []>} : vector<128x128xbf16>, vector<128x128xbf16>, vector<128x128xf32> -> vector<128x128xf32>
    %10 = arith.addf %5, %9 : vector<128x128xf32>
    %c0_10 = arith.constant 0 : index
    %c0_11 = arith.constant 0 : index
    %11 = vector.load %arg15[%c0_10, %c0_11] : memref<128x128xf32, #tpu.memory_space<vmem>>, vector<128x128xf32>
    %c0_12 = arith.constant 0 : index
    %c0_13 = arith.constant 0 : index
    %12 = vector.load %arg7[%c0_12, %c0_13] : memref<128x128xbf16, #tpu.memory_space<vmem>>, vector<128x128xbf16>
    %13 = arith.truncf %11 : vector<128x128xf32> to vector<128x128xbf16>
    %cst_14 = arith.constant dense<0.000000e+00> : vector<128x128xf32>
    %14 = tpu.matmul %13, %12, %cst_14 {dimension_numbers = #tpu.dot_dimension_numbers<[1], [0], [0], [1], [0, 0, 1, 1], [], []>} : vector<128x128xbf16>, vector<128x128xbf16>, vector<128x128xf32> -> vector<128x128xf32>
    %15 = arith.addf %10, %14 : vector<128x128xf32>
    %c0_15 = arith.constant 0 : index
    %c0_16 = arith.constant 0 : index
    %16 = vector.load %arg8[%c0_15, %c0_16] : memref<1x128xf32, #tpu.memory_space<vmem>>, vector<1x128xf32>
    %17 = vector.broadcast %16 : vector<1x128xf32> to vector<128x128xf32>
    %18 = arith.addf %15, %17 : vector<128x128xf32>
    %19 = arith.negf %18 : vector<128x128xf32>
    %20 = math.exp %19 : vector<128x128xf32>
    %cst_17 = arith.constant 1.000000e+00 : f32
    %21 = vector.broadcast %cst_17 : f32 to vector<128x128xf32>
    %22 = arith.addf %21, %20 : vector<128x128xf32>
    %23 = arith.divf %21, %22 : vector<128x128xf32>
    %24 = arith.mulf %18, %23 : vector<128x128xf32>
    %c0_18 = arith.constant 0 : index
    %c0_19 = arith.constant 0 : index
    %25 = vector.load %arg9[%c0_18, %c0_19] : memref<128x128xbf16, #tpu.memory_space<vmem>>, vector<128x128xbf16>
    %26 = arith.truncf %24 : vector<128x128xf32> to vector<128x128xbf16>
    %cst_20 = arith.constant dense<0.000000e+00> : vector<128x128xf32>
    %27 = tpu.matmul %26, %25, %cst_20 {dimension_numbers = #tpu.dot_dimension_numbers<[1], [0], [0], [1], [0, 0, 1, 1], [], []>} : vector<128x128xbf16>, vector<128x128xbf16>, vector<128x128xf32> -> vector<128x128xf32>
    %c0_21 = arith.constant 0 : index
    %c0_22 = arith.constant 0 : index
    %28 = vector.load %arg10[%c0_21, %c0_22] : memref<1x128xf32, #tpu.memory_space<vmem>>, vector<1x128xf32>
    %29 = vector.broadcast %28 : vector<1x128xf32> to vector<128x128xf32>
    %30 = arith.addf %27, %29 : vector<128x128xf32>
    %c0_23 = arith.constant 0 : index
    %c0_24 = arith.constant 0 : index
    %31 = vector.load %arg11[%c0_23, %c0_24] : memref<1x128xf32, #tpu.memory_space<vmem>>, vector<1x128xf32>
    %c0_25 = arith.constant 0 : index
    %c0_26 = arith.constant 0 : index
    %32 = vector.load %arg12[%c0_25, %c0_26] : memref<1x128xf32, #tpu.memory_space<vmem>>, vector<1x128xf32>
    %cst_27 = arith.constant dense<0.000000e+00> : vector<128xf32>
    %33 = vector.multi_reduction <add>, %30, %cst_27 [1] : vector<128x128xf32> to vector<128xf32>
    %34 = vector.shape_cast %33 : vector<128xf32> to vector<128x1xf32>
    %cst_28 = arith.constant 1.280000e+02 : f32
    %35 = vector.broadcast %cst_28 : f32 to vector<128x1xf32>
    %36 = arith.divf %34, %35 : vector<128x1xf32>
    %37 = vector.broadcast %36 : vector<128x1xf32> to vector<128x128xf32>
    %38 = arith.subf %30, %37 : vector<128x128xf32>
    %39 = arith.mulf %38, %38 : vector<128x128xf32>
    %cst_29 = arith.constant dense<0.000000e+00> : vector<128xf32>
    %40 = vector.multi_reduction <add>, %39, %cst_29 [1] : vector<128x128xf32> to vector<128xf32>
    %41 = vector.shape_cast %40 : vector<128xf32> to vector<128x1xf32>
    %cst_30 = arith.constant 1.280000e+02 : f32
    %42 = vector.broadcast %cst_30 : f32 to vector<128x1xf32>
    %43 = arith.divf %41, %42 : vector<128x1xf32>
    %44 = vector.broadcast %36 : vector<128x1xf32> to vector<128x128xf32>
    %45 = arith.subf %30, %44 : vector<128x128xf32>
    %cst_31 = arith.constant 9.99999974E-6 : f32
    %46 = vector.broadcast %cst_31 : f32 to vector<128x1xf32>
    %47 = arith.addf %43, %46 : vector<128x1xf32>
    %48 = math.rsqrt %47 : vector<128x1xf32>
    %49 = vector.broadcast %48 : vector<128x1xf32> to vector<128x128xf32>
    %50 = arith.mulf %45, %49 : vector<128x128xf32>
    %51 = vector.broadcast %31 : vector<1x128xf32> to vector<128x128xf32>
    %52 = arith.mulf %50, %51 : vector<128x128xf32>
    %53 = vector.broadcast %32 : vector<1x128xf32> to vector<128x128xf32>
    %54 = arith.addf %52, %53 : vector<128x128xf32>
    %55 = arith.addf %54, %2 : vector<128x128xf32>
    %c0_32 = arith.constant 0 : index
    %c0_33 = arith.constant 0 : index
    %56 = vector.load %arg13[%c0_32, %c0_33] : memref<128x128xf32, #tpu.memory_space<vmem>>, vector<128x128xf32>
    tpu.vector_store %arg13[%c0_32, %c0_33], %55 {strides = array<i32>} : memref<128x128xf32, #tpu.memory_space<vmem>>, vector<128x128xf32>,
    return
  }
  func.func @transform_0(%arg0: i32, %arg1: memref<256xi32, #tpu.memory_space<smem>>, %arg2: memref<256xi32, #tpu.memory_space<smem>>) -> (i32, i32) {
    %c0_i32 = arith.constant 0 : i32
    %c0_i32_0 = arith.constant 0 : i32
    return %arg0, %c0_i32 : i32, i32
  }
  func.func @transform_1(%arg0: i32, %arg1: memref<256xi32, #tpu.memory_space<smem>>, %arg2: memref<256xi32, #tpu.memory_space<smem>>) -> (i32, i32) {
    %c0_i32 = arith.constant 0 : i32
    %c0_i32_0 = arith.constant 0 : i32
    %c0_i32_1 = arith.constant 0 : i32
    return %c0_i32, %c0_i32_0 : i32, i32
  }
  func.func @transform_2(%arg0: i32, %arg1: memref<256xi32, #tpu.memory_space<smem>>, %arg2: memref<256xi32, #tpu.memory_space<smem>>) -> (i32, i32) {
    %c0_i32 = arith.constant 0 : i32
    %c0_i32_0 = arith.constant 0 : i32
    %c0_i32_1 = arith.constant 0 : i32
    return %c0_i32, %c0_i32_0 : i32, i32
  }
  func.func @transform_3(%arg0: i32, %arg1: memref<256xi32, #tpu.memory_space<smem>>, %arg2: memref<256xi32, #tpu.memory_space<smem>>) -> (i32, i32) {
    %c0_i32 = arith.constant 0 : i32
    %c0_i32_0 = arith.constant 0 : i32
    %c0_i32_1 = arith.constant 0 : i32
    return %c0_i32, %c0_i32_0 : i32, i32
  }
  func.func @transform_4(%arg0: i32, %arg1: memref<256xi32, #tpu.memory_space<smem>>, %arg2: memref<256xi32, #tpu.memory_space<smem>>) -> (i32, i32) {
    %c0_i32 = arith.constant 0 : i32
    %c0_i32_0 = arith.constant 0 : i32
    %c0_i32_1 = arith.constant 0 : i32
    return %c0_i32, %c0_i32_0 : i32, i32
  }
  func.func @transform_5(%arg0: i32, %arg1: memref<256xi32, #tpu.memory_space<smem>>, %arg2: memref<256xi32, #tpu.memory_space<smem>>) -> (i32, i32) {
    %c0_i32 = arith.constant 0 : i32
    %c0_i32_0 = arith.constant 0 : i32
    %c0_i32_1 = arith.constant 0 : i32
    return %c0_i32, %c0_i32_0 : i32, i32
  }
  func.func @transform_6(%arg0: i32, %arg1: memref<256xi32, #tpu.memory_space<smem>>, %arg2: memref<256xi32, #tpu.memory_space<smem>>) -> (i32, i32) {
    %c0_i32 = arith.constant 0 : i32
    %c0_i32_0 = arith.constant 0 : i32
    %c0_i32_1 = arith.constant 0 : i32
    return %c0_i32, %c0_i32_0 : i32, i32
  }
  func.func @transform_7(%arg0: i32, %arg1: memref<256xi32, #tpu.memory_space<smem>>, %arg2: memref<256xi32, #tpu.memory_space<smem>>) -> (i32, i32) {
    %c0_i32 = arith.constant 0 : i32
    %c0_i32_0 = arith.constant 0 : i32
    %c0_i32_1 = arith.constant 0 : i32
    return %c0_i32, %c0_i32_0 : i32, i32
  }
  func.func @transform_8(%arg0: i32, %arg1: memref<256xi32, #tpu.memory_space<smem>>, %arg2: memref<256xi32, #tpu.memory_space<smem>>) -> (i32, i32) {
    %c0_i32 = arith.constant 0 : i32
    %c0_i32_0 = arith.constant 0 : i32
    %c0_i32_1 = arith.constant 0 : i32
    return %c0_i32, %c0_i32_0 : i32, i32
  }
  func.func @transform_9(%arg0: i32, %arg1: memref<256xi32, #tpu.memory_space<smem>>, %arg2: memref<256xi32, #tpu.memory_space<smem>>) -> (i32, i32) {
    %c0_i32 = arith.constant 0 : i32
    %c0_i32_0 = arith.constant 0 : i32
    %c0_i32_1 = arith.constant 0 : i32
    return %c0_i32, %c0_i32_0 : i32, i32
  }
  func.func @transform_10(%arg0: i32, %arg1: memref<256xi32, #tpu.memory_space<smem>>, %arg2: memref<256xi32, #tpu.memory_space<smem>>) -> (i32, i32) {
    %c0_i32 = arith.constant 0 : i32
    %c0_i32_0 = arith.constant 0 : i32
    return %arg0, %c0_i32 : i32, i32
  }
}

module attributes {stable_mosaic.version = 11 : i64} {
  func.func @node_block_kernel(%arg0: i32, %arg1: memref<768xi32, #tpu.memory_space<smem>>, %arg2: memref<128xi32, #tpu.memory_space<smem>>, %arg3: memref<64x128xf32, #tpu.memory_space<vmem>>, %arg4: memref<256x128xf32, #tpu.memory_space<vmem>>, %arg5: memref<128x128xbf16, #tpu.memory_space<vmem>>, %arg6: memref<128x128xbf16, #tpu.memory_space<vmem>>, %arg7: memref<1x128xf32, #tpu.memory_space<vmem>>, %arg8: memref<128x128xbf16, #tpu.memory_space<vmem>>, %arg9: memref<1x128xf32, #tpu.memory_space<vmem>>, %arg10: memref<1x128xf32, #tpu.memory_space<vmem>>, %arg11: memref<1x128xf32, #tpu.memory_space<vmem>>, %arg12: memref<64x128xf32, #tpu.memory_space<vmem>>, %arg13: memref<64x128xf32, #tpu.memory_space<vmem>>) attributes {dimension_semantics = [#tpu.dimension_semantics<parallel>], iteration_bounds = array<i64: 2>, scalar_prefetch = 2 : i64, scratch_operands = 1 : i64, tpu.core_type = #tpu.core_type<tc>, window_params = [{transform_indices = @transform_0, window_bounds = array<i64: 64, 128>}, {pipeline_mode = #tpu.pipeline_mode<synchronous>, transform_indices = @transform_1, window_bounds = array<i64: 256, 128>}, {pipeline_mode = #tpu.pipeline_mode<synchronous>, transform_indices = @transform_2, window_bounds = array<i64: 128, 128>}, {pipeline_mode = #tpu.pipeline_mode<synchronous>, transform_indices = @transform_3, window_bounds = array<i64: 128, 128>}, {pipeline_mode = #tpu.pipeline_mode<synchronous>, transform_indices = @transform_4, window_bounds = array<i64: 1, 128>}, {pipeline_mode = #tpu.pipeline_mode<synchronous>, transform_indices = @transform_5, window_bounds = array<i64: 128, 128>}, {pipeline_mode = #tpu.pipeline_mode<synchronous>, transform_indices = @transform_6, window_bounds = array<i64: 1, 128>}, {pipeline_mode = #tpu.pipeline_mode<synchronous>, transform_indices = @transform_7, window_bounds = array<i64: 1, 128>}, {pipeline_mode = #tpu.pipeline_mode<synchronous>, transform_indices = @transform_8, window_bounds = array<i64: 1, 128>}, {transform_indices = @transform_9, window_bounds = array<i64: 64, 128>}]} {
    %c64_i32 = arith.constant 64 : i32
    %0 = arith.muli %arg0, %c64_i32 : i32
    %c0_i32 = arith.constant 0 : i32
    %c64_i32_0 = arith.constant 64 : i32
    %1 = arith.addi %c0_i32, %c64_i32_0 : i32
    %c1_i32 = arith.constant 1 : i32
    scf.for %arg14 = %c0_i32 to %1 step %c1_i32  : i32 {
      %52 = arith.addi %0, %arg14 : i32
      %53 = arith.index_cast %52 : i32 to index
      %54 = memref.load %arg2[%53] : memref<128xi32, #tpu.memory_space<smem>>
      %c6_i32 = arith.constant 6 : i32
      %55 = arith.muli %52, %c6_i32 : i32
      %cst_29 = arith.constant 0.000000e+00 : f32
      %56 = vector.broadcast %cst_29 : f32 to vector<1x128xf32>
      %c0_i32_30 = arith.constant 0 : i32
      %57 = arith.subi %54, %c0_i32_30 : i32
      %58 = arith.addi %c0_i32_30, %57 : i32
      %c1_i32_31 = arith.constant 1 : i32
      %59 = scf.for %arg15 = %c0_i32_30 to %58 step %c1_i32_31 iter_args(%arg16 = %56) -> (vector<1x128xf32>)  : i32 {
        %62 = arith.addi %55, %arg15 : i32
        %63 = arith.index_cast %62 : i32 to index
        %64 = memref.load %arg1[%63] : memref<768xi32, #tpu.memory_space<smem>>
        %65 = arith.index_cast %64 : i32 to index
        %c0_33 = arith.constant 0 : index
        %66 = vector.load %arg4[%65, %c0_33] : memref<256x128xf32, #tpu.memory_space<vmem>>, vector<1x128xf32>
        %67 = arith.addf %arg16, %66 : vector<1x128xf32>
        scf.yield %67 : vector<1x128xf32>
      }
      %60 = arith.index_cast %arg14 : i32 to index
      %c0_32 = arith.constant 0 : index
      %61 = vector.load %arg13[%60, %c0_32] : memref<64x128xf32, #tpu.memory_space<vmem>>, vector<1x128xf32>
      tpu.vector_store %arg13[%60, %c0_32], %59 {strides = array<i32>} : memref<64x128xf32, #tpu.memory_space<vmem>>, vector<1x128xf32>,
    }
    %c64_i32_1 = arith.constant 64 : i32
    %c0 = arith.constant 0 : index
    %c0_2 = arith.constant 0 : index
    %2 = vector.load %arg3[%c0, %c0_2] : memref<64x128xf32, #tpu.memory_space<vmem>>, vector<64x128xf32>
    %c0_3 = arith.constant 0 : index
    %c0_4 = arith.constant 0 : index
    %3 = vector.load %arg13[%c0_3, %c0_4] : memref<64x128xf32, #tpu.memory_space<vmem>>, vector<64x128xf32>
    %c0_5 = arith.constant 0 : index
    %c0_6 = arith.constant 0 : index
    %4 = vector.load %arg5[%c0_5, %c0_6] : memref<128x128xbf16, #tpu.memory_space<vmem>>, vector<128x128xbf16>
    %5 = arith.truncf %3 : vector<64x128xf32> to vector<64x128xbf16>
    %cst = arith.constant dense<0.000000e+00> : vector<64x128xf32>
    %6 = tpu.matmul %5, %4, %cst {dimension_numbers = #tpu.dot_dimension_numbers<[1], [0], [0], [1], [0, 0, 1, 1], [], []>} : vector<64x128xbf16>, vector<128x128xbf16>, vector<64x128xf32> -> vector<64x128xf32>
    %c0_7 = arith.constant 0 : index
    %c0_8 = arith.constant 0 : index
    %7 = vector.load %arg6[%c0_7, %c0_8] : memref<128x128xbf16, #tpu.memory_space<vmem>>, vector<128x128xbf16>
    %8 = arith.truncf %2 : vector<64x128xf32> to vector<64x128xbf16>
    %cst_9 = arith.constant dense<0.000000e+00> : vector<64x128xf32>
    %9 = tpu.matmul %8, %7, %cst_9 {dimension_numbers = #tpu.dot_dimension_numbers<[1], [0], [0], [1], [0, 0, 1, 1], [], []>} : vector<64x128xbf16>, vector<128x128xbf16>, vector<64x128xf32> -> vector<64x128xf32>
    %10 = arith.addf %6, %9 : vector<64x128xf32>
    %c0_10 = arith.constant 0 : index
    %c0_11 = arith.constant 0 : index
    %11 = vector.load %arg7[%c0_10, %c0_11] : memref<1x128xf32, #tpu.memory_space<vmem>>, vector<1x128xf32>
    %12 = vector.broadcast %11 : vector<1x128xf32> to vector<64x128xf32>
    %13 = arith.addf %10, %12 : vector<64x128xf32>
    %14 = arith.negf %13 : vector<64x128xf32>
    %15 = math.exp %14 : vector<64x128xf32>
    %cst_12 = arith.constant 1.000000e+00 : f32
    %16 = vector.broadcast %cst_12 : f32 to vector<64x128xf32>
    %17 = arith.addf %16, %15 : vector<64x128xf32>
    %18 = arith.divf %16, %17 : vector<64x128xf32>
    %19 = arith.mulf %13, %18 : vector<64x128xf32>
    %c0_13 = arith.constant 0 : index
    %c0_14 = arith.constant 0 : index
    %20 = vector.load %arg8[%c0_13, %c0_14] : memref<128x128xbf16, #tpu.memory_space<vmem>>, vector<128x128xbf16>
    %21 = arith.truncf %19 : vector<64x128xf32> to vector<64x128xbf16>
    %cst_15 = arith.constant dense<0.000000e+00> : vector<64x128xf32>
    %22 = tpu.matmul %21, %20, %cst_15 {dimension_numbers = #tpu.dot_dimension_numbers<[1], [0], [0], [1], [0, 0, 1, 1], [], []>} : vector<64x128xbf16>, vector<128x128xbf16>, vector<64x128xf32> -> vector<64x128xf32>
    %c0_16 = arith.constant 0 : index
    %c0_17 = arith.constant 0 : index
    %23 = vector.load %arg9[%c0_16, %c0_17] : memref<1x128xf32, #tpu.memory_space<vmem>>, vector<1x128xf32>
    %24 = vector.broadcast %23 : vector<1x128xf32> to vector<64x128xf32>
    %25 = arith.addf %22, %24 : vector<64x128xf32>
    %c0_18 = arith.constant 0 : index
    %c0_19 = arith.constant 0 : index
    %26 = vector.load %arg10[%c0_18, %c0_19] : memref<1x128xf32, #tpu.memory_space<vmem>>, vector<1x128xf32>
    %c0_20 = arith.constant 0 : index
    %c0_21 = arith.constant 0 : index
    %27 = vector.load %arg11[%c0_20, %c0_21] : memref<1x128xf32, #tpu.memory_space<vmem>>, vector<1x128xf32>
    %cst_22 = arith.constant dense<0.000000e+00> : vector<64xf32>
    %28 = vector.multi_reduction <add>, %25, %cst_22 [1] : vector<64x128xf32> to vector<64xf32>
    %29 = vector.shape_cast %28 : vector<64xf32> to vector<64x1xf32>
    %cst_23 = arith.constant 1.280000e+02 : f32
    %30 = vector.broadcast %cst_23 : f32 to vector<64x1xf32>
    %31 = arith.divf %29, %30 : vector<64x1xf32>
    %32 = vector.broadcast %31 : vector<64x1xf32> to vector<64x128xf32>
    %33 = arith.subf %25, %32 : vector<64x128xf32>
    %34 = arith.mulf %33, %33 : vector<64x128xf32>
    %cst_24 = arith.constant dense<0.000000e+00> : vector<64xf32>
    %35 = vector.multi_reduction <add>, %34, %cst_24 [1] : vector<64x128xf32> to vector<64xf32>
    %36 = vector.shape_cast %35 : vector<64xf32> to vector<64x1xf32>
    %cst_25 = arith.constant 1.280000e+02 : f32
    %37 = vector.broadcast %cst_25 : f32 to vector<64x1xf32>
    %38 = arith.divf %36, %37 : vector<64x1xf32>
    %39 = vector.broadcast %31 : vector<64x1xf32> to vector<64x128xf32>
    %40 = arith.subf %25, %39 : vector<64x128xf32>
    %cst_26 = arith.constant 9.99999974E-6 : f32
    %41 = vector.broadcast %cst_26 : f32 to vector<64x1xf32>
    %42 = arith.addf %38, %41 : vector<64x1xf32>
    %43 = math.rsqrt %42 : vector<64x1xf32>
    %44 = vector.broadcast %43 : vector<64x1xf32> to vector<64x128xf32>
    %45 = arith.mulf %40, %44 : vector<64x128xf32>
    %46 = vector.broadcast %26 : vector<1x128xf32> to vector<64x128xf32>
    %47 = arith.mulf %45, %46 : vector<64x128xf32>
    %48 = vector.broadcast %27 : vector<1x128xf32> to vector<64x128xf32>
    %49 = arith.addf %47, %48 : vector<64x128xf32>
    %50 = arith.addf %49, %2 : vector<64x128xf32>
    %c0_27 = arith.constant 0 : index
    %c0_28 = arith.constant 0 : index
    %51 = vector.load %arg12[%c0_27, %c0_28] : memref<64x128xf32, #tpu.memory_space<vmem>>, vector<64x128xf32>
    tpu.vector_store %arg12[%c0_27, %c0_28], %50 {strides = array<i32>} : memref<64x128xf32, #tpu.memory_space<vmem>>, vector<64x128xf32>,
    return
  }
  func.func @transform_0(%arg0: i32, %arg1: memref<768xi32, #tpu.memory_space<smem>>, %arg2: memref<128xi32, #tpu.memory_space<smem>>) -> (i32, i32) {
    %c0_i32 = arith.constant 0 : i32
    %c0_i32_0 = arith.constant 0 : i32
    return %arg0, %c0_i32 : i32, i32
  }
  func.func @transform_1(%arg0: i32, %arg1: memref<768xi32, #tpu.memory_space<smem>>, %arg2: memref<128xi32, #tpu.memory_space<smem>>) -> (i32, i32) {
    %c0_i32 = arith.constant 0 : i32
    %c0_i32_0 = arith.constant 0 : i32
    %c0_i32_1 = arith.constant 0 : i32
    return %c0_i32, %c0_i32_0 : i32, i32
  }
  func.func @transform_2(%arg0: i32, %arg1: memref<768xi32, #tpu.memory_space<smem>>, %arg2: memref<128xi32, #tpu.memory_space<smem>>) -> (i32, i32) {
    %c0_i32 = arith.constant 0 : i32
    %c0_i32_0 = arith.constant 0 : i32
    %c0_i32_1 = arith.constant 0 : i32
    return %c0_i32, %c0_i32_0 : i32, i32
  }
  func.func @transform_3(%arg0: i32, %arg1: memref<768xi32, #tpu.memory_space<smem>>, %arg2: memref<128xi32, #tpu.memory_space<smem>>) -> (i32, i32) {
    %c0_i32 = arith.constant 0 : i32
    %c0_i32_0 = arith.constant 0 : i32
    %c0_i32_1 = arith.constant 0 : i32
    return %c0_i32, %c0_i32_0 : i32, i32
  }
  func.func @transform_4(%arg0: i32, %arg1: memref<768xi32, #tpu.memory_space<smem>>, %arg2: memref<128xi32, #tpu.memory_space<smem>>) -> (i32, i32) {
    %c0_i32 = arith.constant 0 : i32
    %c0_i32_0 = arith.constant 0 : i32
    %c0_i32_1 = arith.constant 0 : i32
    return %c0_i32, %c0_i32_0 : i32, i32
  }
  func.func @transform_5(%arg0: i32, %arg1: memref<768xi32, #tpu.memory_space<smem>>, %arg2: memref<128xi32, #tpu.memory_space<smem>>) -> (i32, i32) {
    %c0_i32 = arith.constant 0 : i32
    %c0_i32_0 = arith.constant 0 : i32
    %c0_i32_1 = arith.constant 0 : i32
    return %c0_i32, %c0_i32_0 : i32, i32
  }
  func.func @transform_6(%arg0: i32, %arg1: memref<768xi32, #tpu.memory_space<smem>>, %arg2: memref<128xi32, #tpu.memory_space<smem>>) -> (i32, i32) {
    %c0_i32 = arith.constant 0 : i32
    %c0_i32_0 = arith.constant 0 : i32
    %c0_i32_1 = arith.constant 0 : i32
    return %c0_i32, %c0_i32_0 : i32, i32
  }
  func.func @transform_7(%arg0: i32, %arg1: memref<768xi32, #tpu.memory_space<smem>>, %arg2: memref<128xi32, #tpu.memory_space<smem>>) -> (i32, i32) {
    %c0_i32 = arith.constant 0 : i32
    %c0_i32_0 = arith.constant 0 : i32
    %c0_i32_1 = arith.constant 0 : i32
    return %c0_i32, %c0_i32_0 : i32, i32
  }
  func.func @transform_8(%arg0: i32, %arg1: memref<768xi32, #tpu.memory_space<smem>>, %arg2: memref<128xi32, #tpu.memory_space<smem>>) -> (i32, i32) {
    %c0_i32 = arith.constant 0 : i32
    %c0_i32_0 = arith.constant 0 : i32
    %c0_i32_1 = arith.constant 0 : i32
    return %c0_i32, %c0_i32_0 : i32, i32
  }
  func.func @transform_9(%arg0: i32, %arg1: memref<768xi32, #tpu.memory_space<smem>>, %arg2: memref<128xi32, #tpu.memory_space<smem>>) -> (i32, i32) {
    %c0_i32 = arith.constant 0 : i32
    %c0_i32_0 = arith.constant 0 : i32
    return %arg0, %c0_i32 : i32, i32
  }
}

</mosaic_0001>

<llo_original>
// kernel: graphcast_processor_forward.5
$region0: #{graphcast_processor_forward.5}
  #allocation0 [shape = 'u32[]', space=smem, size = 0x4, offset = 0x4, fixed_abs, tag = 'smem constant byte address 0x4 - core index']
  #allocation1 [shape = 'u32[144,128]{1,0:T(1,128)}', space=vmem, size = 0x12000, scoped, tag = 'internal scratch']
  #allocation2 [shape = 'f32[64,128]{1,0:T(8,128)}', space=vmem, size = 0x8000, scoped, tag = 'scratch operand']
  #allocation3 [shape = 's32[1]{0}', space=sflag, size = 0x4, scoped, tag = 'scoped memory for graphcast_processor_forward.5']
  #allocation4 [shape = 'u8[3072]{0}', space=smem, size = 0xc00, scoped, tag = 'prefetched SMEM operand 0']
  #allocation5 [shape = 'u8[512]{0}', space=smem, size = 0x200, scoped, tag = 'prefetched SMEM operand 1']
  %s0 = inlined_call_operand.vmem [shape: s32[768], index: 0, kind: input, shape index: {}]
  %s1 = inlined_call_operand.vmem [shape: s32[128], index: 1, kind: input, shape index: {}]
  %s2 = inlined_call_operand.vmem [shape: f32[128,128], index: 2, kind: input, shape index: {}]
  %s3 = inlined_call_operand.vmem [shape: f32[256,128], index: 3, kind: input, shape index: {}]
  %s4 = inlined_call_operand.vmem [shape: bf16[128,128], index: 4, kind: input, shape index: {}]
  %s5 = inlined_call_operand.vmem [shape: bf16[128,128], index: 5, kind: input, shape index: {}]
  %s6 = inlined_call_operand.vmem [shape: f32[1,128], index: 6, kind: input, shape index: {}]
  %s7 = inlined_call_operand.vmem [shape: bf16[128,128], index: 7, kind: input, shape index: {}]
  %s8 = inlined_call_operand.vmem [shape: f32[1,128], index: 8, kind: input, shape index: {}]
  %s9 = inlined_call_operand.vmem [shape: f32[1,128], index: 9, kind: input, shape index: {}]
  %s10 = inlined_call_operand.vmem [shape: f32[1,128], index: 10, kind: input, shape index: {}]
  %s11 = inlined_call_operand.vmem [shape: f32[128,128], index: 11, kind: output, shape index: {}]
  %s12 = sld [smem:[#allocation0]]
  $region83: #{graphcast_processor_forward.5} parent=0
    _
  %s14 = ssub.s32 1, %s12
  %s15 = scalar_select 0, %s14, %s12
  %s16 = sshll.u32 %s0, 4
  %s17 = int_to_ptr.vmem [resolvable:$true] %s16
  %19 = dma.vmem_to_smem %s17, 96, [#allocation4], [#allocation3]
  %s20 = sshll.u32 %s1, 4
  %s21 = int_to_ptr.vmem [resolvable:$true] %s20
  %23 = dma.vmem_to_smem %s21, 16, [#allocation5], [#allocation3]
  %24 = dma.done [#allocation3], 112
  %25 = sfence
  loop: start=0, step=1, limit=4
  $region2: #{graphcast_processor_forward.5} parent=0 // loop_pre_header
    _
  $region3: #{graphcast_processor_forward.5} parent=0 // loop_header
    %s27 = sphi 0, %s31
    %p28 = scmp.ge.s32.totalorder %s27, 4
    %s37 = sphi 0, %s39
    %s40 = sphi 0, %s37
    %s41 = sphi 0, %s40
    %s57 = sphi 0, %s41
    %s61 = sphi 0, %s61
    %s63 = sphi 0, %s61
    %s64 = sphi 0, %s63
    %s78 = sphi 0, %s64
    %s82 = sphi 0, %s82
    %s84 = sphi 0, %s82
    %s85 = sphi 0, %s84
    %s99 = sphi 0, %s85
    %s103 = sphi 0, %s103
    %s105 = sphi 0, %s103
    %s106 = sphi 0, %s105
    %s120 = sphi 0, %s106
    %s124 = sphi 0, %s124
    %s126 = sphi 0, %s124
    %s127 = sphi 0, %s126
    %s141 = sphi 0, %s127
    %s145 = sphi 0, %s145
    %s147 = sphi 0, %s145
    %s148 = sphi 0, %s147
    %s162 = sphi 0, %s148
    %s166 = sphi 0, %s166
    %s168 = sphi 0, %s166
    %s169 = sphi 0, %s168
    %s183 = sphi 0, %s169
    %s187 = sphi 0, %s187
    %s189 = sphi 0, %s187
    %s190 = sphi 0, %s189
    %s204 = sphi 0, %s190
    %s208 = sphi 0, %s208
    %s210 = sphi 0, %s208
    %s211 = sphi 0, %s210
    %s225 = sphi 0, %s211
    %s231 = sphi 0, %s233
    %s234 = sphi 0, %s231
    %s235 = sphi 0, %s234
    %s251 = sphi 0, %s235
  $region4: #{graphcast_processor_forward.5} parent=0 // loop_header_branch
    %30 = sbr.rel (%p28) target = $region8
  $region5: #{graphcast_processor_forward.5} parent=0 // loop_body
    %s32 = ssub.s32 %s27, 1
    %s33 = ssub.s32 %s27, 2
    %s34 = sadd.s32 %s27, 1
    %s35 = ssub.s32 %s27, %s34
    %p36 = scmp.eq.s32.totalorder %s35, 0
    %s38 = sadd.s32 %s37, 1
    %s39 = scalar_select %p36, %s37, %s38
    %p42 = pneg %p36
    %p43 = scmp.eq.s32.totalorder %s27, 1
    %p44 = por %p42, %p43
    %p45 = scmp.ne.s32.totalorder %s37, %s40
    %p46 = scmp.eq.s32.totalorder %s27, 0
    %p47 = por %p45, %p46
    %p48 = scmp.ne.s32.totalorder %s37, %s40
    %p49 = scmp.eq.s32.totalorder %s32, 1
    %p50 = por %p48, %p49
    %p51 = scmp.ne.s32.totalorder %s40, %s41
    %p52 = scmp.eq.s32.totalorder %s32, 0
    %p53 = por %p51, %p52
    %p54 = scmp.ne.s32.totalorder %s40, %s41
    %p55 = scmp.eq.s32.totalorder %s33, 1
    %p56 = por %p54, %p55
    %p58 = scmp.ne.s32.totalorder %s41, %s57
    %p59 = scmp.eq.s32.totalorder %s33, 0
    %p60 = por %p58, %p59
    %s62 = sadd.s32 %s61, 1
    %p65 = scmp.eq.s32.totalorder %s27, 1
    %p66 = scmp.ne.s32.totalorder %s61, %s63
    %p67 = scmp.eq.s32.totalorder %s27, 0
    %p68 = por %p66, %p67
    %p69 = scmp.ne.s32.totalorder %s61, %s63
    %p70 = scmp.eq.s32.totalorder %s32, 1
    %p71 = por %p69, %p70
    %p72 = scmp.ne.s32.totalorder %s63, %s64
    %p73 = scmp.eq.s32.totalorder %s32, 0
    %p74 = por %p72, %p73
    %p75 = scmp.ne.s32.totalorder %s63, %s64
    %p76 = scmp.eq.s32.totalorder %s33, 1
    %p77 = por %p75, %p76
    %p79 = scmp.ne.s32.totalorder %s64, %s78
    %p80 = scmp.eq.s32.totalorder %s33, 0
    %p81 = por %p79, %p80
    %s83 = sadd.s32 %s82, 1
    %p86 = scmp.eq.s32.totalorder %s27, 1
    %p87 = scmp.ne.s32.totalorder %s82, %s84
    %p88 = scmp.eq.s32.totalorder %s27, 0
    %p89 = por %p87, %p88
    %p90 = scmp.ne.s32.totalorder %s82, %s84
    %p91 = scmp.eq.s32.totalorder %s32, 1
    %p92 = por %p90, %p91
    %p93 = scmp.ne.s32.totalorder %s84, %s85
    %p94 = scmp.eq.s32.totalorder %s32, 0
    %p95 = por %p93, %p94
    %p96 = scmp.ne.s32.totalorder %s84, %s85
    %p97 = scmp.eq.s32.totalorder %s33, 1
    %p98 = por %p96, %p97
    %p100 = scmp.ne.s32.totalorder %s85, %s99
    %p101 = scmp.eq.s32.totalorder %s33, 0
    %p102 = por %p100, %p101
    %s104 = sadd.s32 %s103, 1
    %p107 = scmp.eq.s32.totalorder %s27, 1
    %p108 = scmp.ne.s32.totalorder %s103, %s105
    %p109 = scmp.eq.s32.totalorder %s27, 0
    %p110 = por %p108, %p109
    %p111 = scmp.ne.s32.totalorder %s103, %s105
    %p112 = scmp.eq.s32.totalorder %s32, 1
    %p113 = por %p111, %p112
    %p114 = scmp.ne.s32.totalorder %s105, %s106
    %p115 = scmp.eq.s32.totalorder %s32, 0
    %p116 = por %p114, %p115
    %p117 = scmp.ne.s32.totalorder %s105, %s106
    %p118 = scmp.eq.s32.totalorder %s33, 1
    %p119 = por %p117, %p118
    %p121 = scmp.ne.s32.totalorder %s106, %s120
    %p122 = scmp.eq.s32.totalorder %s33, 0
    %p123 = por %p121, %p122
    %s125 = sadd.s32 %s124, 1
    %p128 = scmp.eq.s32.totalorder %s27, 1
    %p129 = scmp.ne.s32.totalorder %s124, %s126
    %p130 = scmp.eq.s32.totalorder %s27, 0
    %p131 = por %p129, %p130
    %p132 = scmp.ne.s32.totalorder %s124, %s126
    %p133 = scmp.eq.s32.totalorder %s32, 1
    %p134 = por %p132, %p133
    %p135 = scmp.ne.s32.totalorder %s126, %s127
    %p136 = scmp.eq.s32.totalorder %s32, 0
    %p137 = por %p135, %p136
    %p138 = scmp.ne.s32.totalorder %s126, %s127
    %p139 = scmp.eq.s32.totalorder %s33, 1
    %p140 = por %p138, %p139
    %p142 = scmp.ne.s32.totalorder %s127, %s141
    %p143 = scmp.eq.s32.totalorder %s33, 0
    %p144 = por %p142, %p143
    %s146 = sadd.s32 %s145, 1
    %p149 = scmp.eq.s32.totalorder %s27, 1
    %p150 = scmp.ne.s32.totalorder %s145, %s147
    %p151 = scmp.eq.s32.totalorder %s27, 0
    %p152 = por %p150, %p151
    %p153 = scmp.ne.s32.totalorder %s145, %s147
    %p154 = scmp.eq.s32.totalorder %s32, 1
    %p155 = por %p153, %p154
    %p156 = scmp.ne.s32.totalorder %s147, %s148
    %p157 = scmp.eq.s32.totalorder %s32, 0
    %p158 = por %p156, %p157
    %p159 = scmp.ne.s32.totalorder %s147, %s148
    %p160 = scmp.eq.s32.totalorder %s33, 1
    %p161 = por %p159, %p160
    %p163 = scmp.ne.s32.totalorder %s148, %s162
    %p164 = scmp.eq.s32.totalorder %s33, 0
    %p165 = por %p163, %p164
    %s167 = sadd.s32 %s166, 1
    %p170 = scmp.eq.s32.totalorder %s27, 1
    %p171 = scmp.ne.s32.totalorder %s166, %s168
    %p172 = scmp.eq.s32.totalorder %s27, 0
    %p173 = por %p171, %p172
    %p174 = scmp.ne.s32.totalorder %s166, %s168
    %p175 = scmp.eq.s32.totalorder %s32, 1
    %p176 = por %p174, %p175
    %p177 = scmp.ne.s32.totalorder %s168, %s169
    %p178 = scmp.eq.s32.totalorder %s32, 0
    %p179 = por %p177, %p178
    %p180 = scmp.ne.s32.totalorder %s168, %s169
    %p181 = scmp.eq.s32.totalorder %s33, 1
    %p182 = por %p180, %p181
    %p184 = scmp.ne.s32.totalorder %s169, %s183
    %p185 = scmp.eq.s32.totalorder %s33, 0
    %p186 = por %p184, %p185
    %s188 = sadd.s32 %s187, 1
    %p191 = scmp.eq.s32.totalorder %s27, 1
    %p192 = scmp.ne.s32.totalorder %s187, %s189
    %p193 = scmp.eq.s32.totalorder %s27, 0
    %p194 = por %p192, %p193
    %p195 = scmp.ne.s32.totalorder %s187, %s189
    %p196 = scmp.eq.s32.totalorder %s32, 1
    %p197 = por %p195, %p196
    %p198 = scmp.ne.s32.totalorder %s189, %s190
    %p199 = scmp.eq.s32.totalorder %s32, 0
    %p200 = por %p198, %p199
    %p201 = scmp.ne.s32.totalorder %s189, %s190
    %p202 = scmp.eq.s32.totalorder %s33, 1
    %p203 = por %p201, %p202
    %p205 = scmp.ne.s32.totalorder %s190, %s204
    %p206 = scmp.eq.s32.totalorder %s33, 0
    %p207 = por %p205, %p206
    %s209 = sadd.s32 %s208, 1
    %p212 = scmp.eq.s32.totalorder %s27, 1
    %p213 = scmp.ne.s32.totalorder %s208, %s210
    %p214 = scmp.eq.s32.totalorder %s27, 0
    %p215 = por %p213, %p214
    %p216 = scmp.ne.s32.totalorder %s208, %s210
    %p217 = scmp.eq.s32.totalorder %s32, 1
    %p218 = por %p216, %p217
    %p219 = scmp.ne.s32.totalorder %s210, %s211
    %p220 = scmp.eq.s32.totalorder %s32, 0
    %p221 = por %p219, %p220
    %p222 = scmp.ne.s32.totalorder %s210, %s211
    %p223 = scmp.eq.s32.totalorder %s33, 1
    %p224 = por %p222, %p223
    %p226 = scmp.ne.s32.totalorder %s211, %s225
    %p227 = scmp.eq.s32.totalorder %s33, 0
    %p228 = por %p226, %p227
    %s229 = ssub.s32 %s27, %s34
    %p230 = scmp.eq.s32.totalorder %s229, 0
    %s232 = sadd.s32 %s231, 1
    %s233 = scalar_select %p230, %s231, %s232
    %p236 = pneg %p230
    %p237 = scmp.eq.s32.totalorder %s27, 1
    %p238 = por %p236, %p237
    %p239 = scmp.ne.s32.totalorder %s231, %s234
    %p240 = scmp.eq.s32.totalorder %s27, 0
    %p241 = por %p239, %p240
    %p242 = scmp.ne.s32.totalorder %s231, %s234
    %p243 = scmp.eq.s32.totalorder %s32, 1
    %p244 = por %p242, %p243
    %p245 = scmp.ne.s32.totalorder %s234, %s235
    %p246 = scmp.eq.s32.totalorder %s32, 0
    %p247 = por %p245, %p246
    %p248 = scmp.ne.s32.totalorder %s234, %s235
    %p249 = scmp.eq.s32.totalorder %s33, 1
    %p250 = por %p248, %p249
    %p252 = scmp.ne.s32.totalorder %s235, %s251
    %p253 = scmp.eq.s32.totalorder %s33, 0
    %p254 = por %p252, %p253
    %p255 = scmp.le.s32.totalorder 1, %s27
    %p256 = scmp.lt.s32.totalorder %s27, 3
    %p257 = pnand %p255, %p256
    %p258 = pneg %p257
    // Predicated region
    $region9: #{graphcast_processor_forward.5} parent=5 // pred_check
      _
    $region10: #{graphcast_processor_forward.5} parent=5 // pred_check_branch
      %260 = sbr.rel (%p257) target = $region12
    $region11: #{graphcast_processor_forward.5} parent=5 // pred_region
      %s261 = ssub.s32 %s27, 1
      // Predicated region
      $region13: #{graphcast_processor_forward.5} parent=11 // pred_check
        %p262 = pneg %p74
      $region14: #{graphcast_processor_forward.5} parent=11 // pred_check_branch
        %264 = sbr.rel (%p262) target = $region16
      $region15: #{graphcast_processor_forward.5} parent=11 // pred_region
        _
      $region16: #{graphcast_processor_forward.5} parent=11 // pred_fallthru
        _
      // Predicated region
      $region17: #{graphcast_processor_forward.5} parent=11 // pred_check
        %p265 = pneg %p95
      $region18: #{graphcast_processor_forward.5} parent=11 // pred_check_branch
        %267 = sbr.rel (%p265) target = $region20
      $region19: #{graphcast_processor_forward.5} parent=11 // pred_region
        _
      $region20: #{graphcast_processor_forward.5} parent=11 // pred_fallthru
        _
      // Predicated region
      $region21: #{graphcast_processor_forward.5} parent=11 // pred_check
        %p268 = pneg %p116
      $region22: #{graphcast_processor_forward.5} parent=11 // pred_check_branch
        %270 = sbr.rel (%p268) target = $region24
      $region23: #{graphcast_processor_forward.5} parent=11 // pred_region
        _
      $region24: #{graphcast_processor_forward.5} parent=11 // pred_fallthru
        _
      // Predicated region
      $region25: #{graphcast_processor_forward.5} parent=11 // pred_check
        %p271 = pneg %p137
      $region26: #{graphcast_processor_forward.5} parent=11 // pred_check_branch
        %273 = sbr.rel (%p271) target = $region28
      $region27: #{graphcast_processor_forward.5} parent=11 // pred_region
        _
      $region28: #{graphcast_processor_forward.5} parent=11 // pred_fallthru
        _
      // Predicated region
      $region29: #{graphcast_processor_forward.5} parent=11 // pred_check
        %p274 = pneg %p158
      $region30: #{graphcast_processor_forward.5} parent=11 // pred_check_branch
        %276 = sbr.rel (%p274) target = $region32
      $region31: #{graphcast_processor_forward.5} parent=11 // pred_region
        _
      $region32: #{graphcast_processor_forward.5} parent=11 // pred_fallthru
        _
      // Predicated region
      $region33: #{graphcast_processor_forward.5} parent=11 // pred_check
        %p277 = pneg %p179
      $region34: #{graphcast_processor_forward.5} parent=11 // pred_check_branch
        %279 = sbr.rel (%p277) target = $region36
      $region35: #{graphcast_processor_forward.5} parent=11 // pred_region
        _
      $region36: #{graphcast_processor_forward.5} parent=11 // pred_fallthru
        _
      // Predicated region
      $region37: #{graphcast_processor_forward.5} parent=11 // pred_check
        %p280 = pneg %p200
      $region38: #{graphcast_processor_forward.5} parent=11 // pred_check_branch
        %282 = sbr.rel (%p280) target = $region40
      $region39: #{graphcast_processor_forward.5} parent=11 // pred_region
        _
      $region40: #{graphcast_processor_forward.5} parent=11 // pred_fallthru
        _
      // Predicated region
      $region41: #{graphcast_processor_forward.5} parent=11 // pred_check
        %p283 = pneg %p221
      $region42: #{graphcast_processor_forward.5} parent=11 // pred_check_branch
        %285 = sbr.rel (%p283) target = $region44
      $region43: #{graphcast_processor_forward.5} parent=11 // pred_region
        _
      $region44: #{graphcast_processor_forward.5} parent=11 // pred_fallthru
        _
    $region12: #{graphcast_processor_forward.5} parent=5 // pred_fallthru
      _
    %p286 = scmp.lt.s32.totalorder %s27, 2
    // Predicated region
    $region45: #{graphcast_processor_forward.5} parent=5 // pred_check
      %p287 = pneg %p286
    $region46: #{graphcast_processor_forward.5} parent=5 // pred_check_branch
      %289 = sbr.rel (%p287) target = $region48
    $region47: #{graphcast_processor_forward.5} parent=5 // pred_region
      // Predicated region
      $region49: #{graphcast_processor_forward.5} parent=47 // pred_check
        %p290 = pneg %p47
      $region50: #{graphcast_processor_forward.5} parent=47 // pred_check_branch
        %292 = sbr.rel (%p290) target = $region52
      $region51: #{graphcast_processor_forward.5} parent=47 // pred_region
        %s293 = smul.u32 8, %s27
        %p294 = scmp.lt.s32.totalorder %s293, 15
        %s295 = scalar_select %p294, %s293, 15
        %s296 = smul.addr %s295, 8
        %s297 = scalar_lea.vmem %s2, %s296
        %s298 = smul.u32 8, %s27
      $region52: #{graphcast_processor_forward.5} parent=47 // pred_fallthru
        _
    $region48: #{graphcast_processor_forward.5} parent=5 // pred_fallthru
      _
    %p299 = scmp.le.s32.totalorder 1, %s27
    %p300 = scmp.lt.s32.totalorder %s27, 3
    %p301 = pnand %p299, %p300
    %p302 = pneg %p301
    // Predicated region
    $region53: #{graphcast_processor_forward.5} parent=5 // pred_check
      _
    $region54: #{graphcast_processor_forward.5} parent=5 // pred_check_branch
      %304 = sbr.rel (%p301) target = $region56
    $region55: #{graphcast_processor_forward.5} parent=5 // pred_region
      %s305 = ssub.s32 %s27, 1
      %s306 = smul.u32 8, %s32
      %p307 = scmp.lt.s32.totalorder %s306, 15
      %s308 = scalar_select %p307, %s306, 15
      %s309 = smul.addr %s308, 8
      %s310 = scalar_lea.vmem %s2, %s309
      %p311 = pneg %p53
      %p312 = pneg %p50
      %p313 = pneg %p74
      %p314 = pneg %p71
      %p315 = pneg %p95
      %p316 = pneg %p92
      %p317 = pneg %p116
      %p318 = pneg %p113
      %p319 = pneg %p137
      %p320 = pneg %p134
      %p321 = pneg %p158
      %p322 = pneg %p155
      %p323 = pneg %p179
      %p324 = pneg %p176
      %p325 = pneg %p200
      %p326 = pneg %p197
      %p327 = pneg %p221
      %p328 = pneg %p218
      %p329 = pneg %p247
      %p330 = pneg %p244
      %s331 = smul.u32 8, %s32
      %p332 = scmp.lt.s32.totalorder %s331, 15
      %s333 = scalar_select %p332, %s331, 15
      %s334 = smul.addr %s333, 8
      %s335 = scalar_lea.vmem %s11, %s334
      %s336 = smul.u32 8, %s32
      %p337 = scmp.lt.s32.totalorder %s336, 15
      %s338 = scalar_select %p337, %s336, 15
      %s339 = smul.addr %s338, 8
      %s340 = scalar_lea.vmem %s2, %s339
      %s341 = smul.u32 8, %s32
      %s342 = smul.u32 8, %s32
      %p343 = scmp.lt.s32.totalorder %s342, 15
      %s344 = scalar_select %p343, %s342, 15
      %s345 = smul.addr %s344, 8
      %s346 = scalar_lea.vmem %s11, %s345
      %s347 = smul.u32 8, %s32
      %s349 = smul.u32 %s32, 64
      loop: start=0, step=1, limit=64
      $region57: #{graphcast_processor_forward.5} parent=55 // loop_pre_header
        _
      $region58: #{graphcast_processor_forward.5} parent=55 // loop_header
        %s351 = sphi 0, %s355
        %p352 = scmp.ge.s32.totalorder %s351, 64
      $region59: #{graphcast_processor_forward.5} parent=55 // loop_header_branch
        %354 = sbr.rel (%p352) target = $region63
      $region60: #{graphcast_processor_forward.5} parent=55 // loop_body
        %s356 = sadd.s32 %s349, %s351
        %s357 = sld [smem:[#allocation5 + %s356]]
        %s358 = smul.u32 %s356, 6
        // While loop
        $region64: #{graphcast_processor_forward.5} parent=60 // loop_pre_header
          _
        $region65: #{graphcast_processor_forward.5} parent=60 // loop_header
          %s360 = sphi 0, %s362
          %p361 = scmp.ge.s32.totalorder %s360, %s357
          %v365 = vphi 0.0, %v370
        $region66: #{graphcast_processor_forward.5} parent=60 // loop_header_branch
          %364 = sbr.rel (%p361) target = $region70
        $region67: #{graphcast_processor_forward.5} parent=60 // loop_body
          %s366 = sadd.s32 %s358, %s360
          %s367 = sld [smem:[#allocation4 + %s366]]
          %s368 = scalar_lea.vmem %s3, %s367
          %v369 = vld [vmem:[%s368] sm:$0x1]
          %v370 = vadd.f32 %v365, %v369
        $region68: #{graphcast_processor_forward.5} parent=60 // loop_footer
          %s362 = sadd.s32 %s360, 1
        $region69: #{graphcast_processor_forward.5} parent=60 // loop_footer_branch
          %359 = sbr.rel target = $region65
        $region70: #{graphcast_processor_forward.5} parent=60 // loop_exit
          _
        %s371 = scalar_lea.vmem [#allocation2], %s351
        %372 = vst [vmem:[%s371] sm:$0x1] %v365
      $region61: #{graphcast_processor_forward.5} parent=55 // loop_footer
        %s355 = sadd.s32 1, %s351
      $region62: #{graphcast_processor_forward.5} parent=55 // loop_footer_branch
        %350 = sbr.rel target = $region58
      $region63: #{graphcast_processor_forward.5} parent=55 // loop_exit
        _
      %v373 = vld [vmem:[%s340] sm:$0xff]
      %v374 = vld [vmem:[%s340 + $0x8] sm:$0xff]
      %v375 = vld [vmem:[%s340 + $0x10] sm:$0xff]
      %v376 = vld [vmem:[%s340 + $0x18] sm:$0xff]
      %v377 = vld [vmem:[%s340 + $0x20] sm:$0xff]
      %v378 = vld [vmem:[%s340 + $0x28] sm:$0xff]
      %v379 = vld [vmem:[%s340 + $0x30] sm:$0xff]
      %v380 = vld [vmem:[%s340 + $0x38] sm:$0xff]
      %v381 = vld [vmem:[#allocation2] sm:$0xff]
      %v382 = vld [vmem:[#allocation2 + $0x8] sm:$0xff]
      %v383 = vld [vmem:[#allocation2 + $0x10] sm:$0xff]
      %v384 = vld [vmem:[#allocation2 + $0x18] sm:$0xff]
      %v385 = vld [vmem:[#allocation2 + $0x20] sm:$0xff]
      %v386 = vld [vmem:[#allocation2 + $0x28] sm:$0xff]
      %v387 = vld [vmem:[#allocation2 + $0x30] sm:$0xff]
      %v388 = vld [vmem:[#allocation2 + $0x38] sm:$0xff]
      %v389 = vld [vmem:[%s4] sm:$0xf]
      %v390 = vld [vmem:[%s4 + $0x4] sm:$0xf]
      %v391 = vld [vmem:[%s4 + $0x8] sm:$0xf]
      %v392 = vld [vmem:[%s4 + $0xc] sm:$0xf]
      %v393 = vld [vmem:[%s4 + $0x10] sm:$0xf]
      %v394 = vld [vmem:[%s4 + $0x14] sm:$0xf]
      %v395 = vld [vmem:[%s4 + $0x18] sm:$0xf]
      %v396 = vld [vmem:[%s4 + $0x1c] sm:$0xf]
      %v397 = vld [vmem:[%s4 + $0x20] sm:$0xf]
      %v398 = vld [vmem:[%s4 + $0x24] sm:$0xf]
      %v399 = vld [vmem:[%s4 + $0x28] sm:$0xf]
      %v400 = vld [vmem:[%s4 + $0x2c] sm:$0xf]
      %v401 = vld [vmem:[%s4 + $0x30] sm:$0xf]
      %v402 = vld [vmem:[%s4 + $0x34] sm:$0xf]
      %v403 = vld [vmem:[%s4 + $0x38] sm:$0xf]
      %v404 = vld [vmem:[%s4 + $0x3c] sm:$0xf]
      %v405 = vpack.c.bf16 %v382, %v381
      %v406 = vpack.c.bf16 %v384, %v383
      %v407 = vpack.c.bf16 %v386, %v385
      %v408 = vpack.c.bf16 %v388, %v387
      %v409 = vld [vmem:[%s5] sm:$0xf]
      %v410 = vld [vmem:[%s5 + $0x4] sm:$0xf]
      %v411 = vld [vmem:[%s5 + $0x8] sm:$0xf]
      %v412 = vld [vmem:[%s5 + $0xc] sm:$0xf]
      %v413 = vld [vmem:[%s5 + $0x10] sm:$0xf]
      %v414 = vld [vmem:[%s5 + $0x14] sm:$0xf]
      %v415 = vld [vmem:[%s5 + $0x18] sm:$0xf]
      %v416 = vld [vmem:[%s5 + $0x1c] sm:$0xf]
      %v417 = vld [vmem:[%s5 + $0x20] sm:$0xf]
      %v418 = vld [vmem:[%s5 + $0x24] sm:$0xf]
      %v419 = vld [vmem:[%s5 + $0x28] sm:$0xf]
      %v420 = vld [vmem:[%s5 + $0x2c] sm:$0xf]
      %v421 = vld [vmem:[%s5 + $0x30] sm:$0xf]
      %v422 = vld [vmem:[%s5 + $0x34] sm:$0xf]
      %v423 = vld [vmem:[%s5 + $0x38] sm:$0xf]
      %v424 = vld [vmem:[%s5 + $0x3c] sm:$0xf]
      %v425 = vpack.c.bf16 %v374, %v373
      %v426 = vpack.c.bf16 %v376, %v375
      %v427 = vpack.c.bf16 %v378, %v377
      %v428 = vpack.c.bf16 %v380, %v379
      %v445 = vunpack.c.l.b16 %v409
      %v446 = vunpack.c.l.b16 %v410
      %v447 = vunpack.c.l.b16 %v411
      %v448 = vunpack.c.l.b16 %v412
      %v449 = vunpack.c.l.b16 %v413
      %v450 = vunpack.c.l.b16 %v414
      %v451 = vunpack.c.l.b16 %v415
      %v452 = vunpack.c.l.b16 %v416
      %v453 = vunpack.c.l.b16 %v417
      %v454 = vunpack.c.l.b16 %v418
      %v455 = vunpack.c.l.b16 %v419
      %v456 = vunpack.c.l.b16 %v420
      %v457 = vunpack.c.l.b16 %v421
      %v458 = vunpack.c.l.b16 %v422
      %v459 = vunpack.c.l.b16 %v423
      %v460 = vunpack.c.l.b16 %v424
      %v461 = vpack.c.b16 %v446, %v445
      %v462 = vpack.c.b16 %v448, %v447
      %v463 = vpack.c.b16 %v450, %v449
      %v464 = vpack.c.b16 %v452, %v451
      %v465 = vpack.c.b16 %v454, %v453
      %v466 = vpack.c.b16 %v456, %v455
      %v467 = vpack.c.b16 %v458, %v457
      %v468 = vpack.c.b16 %v460, %v459
      %477 = vmatprep.subr.bf16.mxu0 0
      %478 = vmatpush1.bf16.msra.mxu0 %v461
      %479 = vmatprep.subr.bf16.mxu0 0
      %480 = vmatpush1.bf16.msra.mxu0 %v462
      %481 = vmatprep.subr.bf16.mxu0 0
      %482 = vmatpush1.bf16.msra.mxu0 %v463
      %483 = vmatprep.subr.bf16.mxu0 0
      %484 = vmatpush1.bf16.msra.mxu0 %v464
      %485 = vmatprep.subr.bf16.mxu0 0
      %486 = vmatpush1.bf16.msra.mxu0 %v465
      %487 = vmatprep.subr.bf16.mxu0 0
      %488 = vmatpush1.bf16.msra.mxu0 %v466
      %489 = vmatprep.subr.bf16.mxu0 0
      %490 = vmatpush1.bf16.msra.mxu0 %v467
      %491 = vmatprep.subr.bf16.mxu0 0
      %492 = vmatpush1.bf16.msra.mxu0 %v468
      %493 = vmatprep.subr.bf16.mxu0 0
      %494 = vmatpush1.bf16.msra.mxu0 0
      %495 = vmatprep.subr.bf16.mxu0 0
      %496 = vmatpush1.bf16.msra.mxu0 0
      %497 = vmatprep.subr.bf16.mxu0 0
      %498 = vmatpush1.bf16.msra.mxu0 0
      %499 = vmatprep.subr.bf16.mxu0 0
      %500 = vmatpush1.bf16.msra.mxu0 0
      %501 = vmatprep.subr.bf16.mxu0 0
      %502 = vmatpush1.bf16.msra.mxu0 0
      %503 = vmatprep.subr.bf16.mxu0 0
      %504 = vmatpush1.bf16.msra.mxu0 0
      %505 = vmatprep.subr.bf16.mxu0 0
      %506 = vmatpush1.bf16.msra.mxu0 0
      %507 = vmatprep.subr.bf16.mxu0 0
      %508 = vmatpush1.bf16.msra.mxu0 0
      %509 = vmatprep.mubr.bf16.mxu0 0
      %510 = vmatmul.mubr.bf16.gmra.mrb[0].mxu0 %v425
      %v511 = vpop.f32.mrb[0].mxu0
      %v512 = vadd.f32 0.0, %v511
      %v513 = vpop.f32.mrb[0].mxu0
      %v514 = vpop.f32.mrb[0].mxu0
      %v515 = vadd.f32 0.0, %v514
      %v516 = vpop.f32.mrb[0].mxu0
      %517 = vmatprep.mubr.bf16.mxu0 0
      %518 = vmatmul.mubr.bf16.gmra.mrb[0].mxu0 %v426
      %v519 = vpop.f32.mrb[0].mxu0
      %v520 = vadd.f32 0.0, %v519
      %v521 = vpop.f32.mrb[0].mxu0
      %v522 = vpop.f32.mrb[0].mxu0
      %v523 = vadd.f32 0.0, %v522
      %v524 = vpop.f32.mrb[0].mxu0
      %525 = vmatprep.mubr.bf16.mxu0 0
      %526 = vmatmul.mubr.bf16.gmra.mrb[0].mxu0 %v427
      %v527 = vpop.f32.mrb[0].mxu0
      %v528 = vadd.f32 0.0, %v527
      %v529 = vpop.f32.mrb[0].mxu0
      %v530 = vpop.f32.mrb[0].mxu0
      %v531 = vadd.f32 0.0, %v530
      %v532 = vpop.f32.mrb[0].mxu0
      %533 = vmatprep.mubr.bf16.mxu0 0
      %534 = vmatmul.mubr.bf16.gmra.mrb[0].mxu0 %v428
      %v535 = vpop.f32.mrb[0].mxu0
      %v536 = vadd.f32 0.0, %v535
      %v537 = vpop.f32.mrb[0].mxu0
      %v538 = vpop.f32.mrb[0].mxu0
      %v539 = vadd.f32 0.0, %v538
      %v540 = vpop.f32.mrb[0].mxu0
      %541 = vdwg.mxu0
      %v558 = vunpack.c.l.b16 %v389
      %v559 = vunpack.c.l.b16 %v390
      %v560 = vunpack.c.l.b16 %v391
      %v561 = vunpack.c.l.b16 %v392
      %v562 = vunpack.c.l.b16 %v393
      %v563 = vunpack.c.l.b16 %v394
      %v564 = vunpack.c.l.b16 %v395
      %v565 = vunpack.c.l.b16 %v396
      %v566 = vunpack.c.l.b16 %v397
      %v567 = vunpack.c.l.b16 %v398
      %v568 = vunpack.c.l.b16 %v399
      %v569 = vunpack.c.l.b16 %v400
      %v570 = vunpack.c.l.b16 %v401
      %v571 = vunpack.c.l.b16 %v402
      %v572 = vunpack.c.l.b16 %v403
      %v573 = vunpack.c.l.b16 %v404
      %v574 = vpack.c.b16 %v559, %v558
      %v575 = vpack.c.b16 %v561, %v560
      %v576 = vpack.c.b16 %v563, %v562
      %v577 = vpack.c.b16 %v565, %v564
      %v578 = vpack.c.b16 %v567, %v566
      %v579 = vpack.c.b16 %v569, %v568
      %v580 = vpack.c.b16 %v571, %v570
      %v581 = vpack.c.b16 %v573, %v572
      %590 = vmatprep.subr.bf16.mxu0 0
      %591 = vmatpush1.bf16.msra.mxu0 %v574
      %592 = vmatprep.subr.bf16.mxu0 0
      %593 = vmatpush1.bf16.msra.mxu0 %v575
      %594 = vmatprep.subr.bf16.mxu0 0
      %595 = vmatpush1.bf16.msra.mxu0 %v576
      %596 = vmatprep.subr.bf16.mxu0 0
      %597 = vmatpush1.bf16.msra.mxu0 %v577
      %598 = vmatprep.subr.bf16.mxu0 0
      %599 = vmatpush1.bf16.msra.mxu0 %v578
      %600 = vmatprep.subr.bf16.mxu0 0
      %601 = vmatpush1.bf16.msra.mxu0 %v579
      %602 = vmatprep.subr.bf16.mxu0 0
      %603 = vmatpush1.bf16.msra.mxu0 %v580
      %604 = vmatprep.subr.bf16.mxu0 0
      %605 = vmatpush1.bf16.msra.mxu0 %v581
      %606 = vmatprep.subr.bf16.mxu0 0
      %607 = vmatpush1.bf16.msra.mxu0 0
      %608 = vmatprep.subr.bf16.mxu0 0
      %609 = vmatpush1.bf16.msra.mxu0 0
      %610 = vmatprep.subr.bf16.mxu0 0
      %611 = vmatpush1.bf16.msra.mxu0 0
      %612 = vmatprep.subr.bf16.mxu0 0
      %613 = vmatpush1.bf16.msra.mxu0 0
      %614 = vmatprep.subr.bf16.mxu0 0
      %615 = vmatpush1.bf16.msra.mxu0 0
      %616 = vmatprep.subr.bf16.mxu0 0
      %617 = vmatpush1.bf16.msra.mxu0 0
      %618 = vmatprep.subr.bf16.mxu0 0
      %619 = vmatpush1.bf16.msra.mxu0 0
      %620 = vmatprep.subr.bf16.mxu0 0
      %621 = vmatpush1.bf16.msra.mxu0 0
      %622 = vmatprep.mubr.bf16.mxu0 0
      %623 = vmatmul.mubr.bf16.gmra.mrb[0].mxu0 %v405
      %v624 = vpop.f32.mrb[0].mxu0
      %v625 = vadd.f32 %v512, %v624
      %v626 = vpop.f32.mrb[0].mxu0
      %v627 = vpop.f32.mrb[0].mxu0
      %v628 = vadd.f32 %v515, %v627
      %v629 = vpop.f32.mrb[0].mxu0
      %630 = vmatprep.mubr.bf16.mxu0 0
      %631 = vmatmul.mubr.bf16.gmra.mrb[0].mxu0 %v406
      %v632 = vpop.f32.mrb[0].mxu0
      %v633 = vadd.f32 %v520, %v632
      %v634 = vpop.f32.mrb[0].mxu0
      %v635 = vpop.f32.mrb[0].mxu0
      %v636 = vadd.f32 %v523, %v635
      %v637 = vpop.f32.mrb[0].mxu0
      %638 = vmatprep.mubr.bf16.mxu0 0
      %639 = vmatmul.mubr.bf16.gmra.mrb[0].mxu0 %v407
      %v640 = vpop.f32.mrb[0].mxu0
      %v641 = vadd.f32 %v528, %v640
      %v642 = vpop.f32.mrb[0].mxu0
      %v643 = vpop.f32.mrb[0].mxu0
      %v644 = vadd.f32 %v531, %v643
      %v645 = vpop.f32.mrb[0].mxu0
      %646 = vmatprep.mubr.bf16.mxu0 0
      %647 = vmatmul.mubr.bf16.gmra.mrb[0].mxu0 %v408
      %v648 = vpop.f32.mrb[0].mxu0
      %v649 = vadd.f32 %v536, %v648
      %v650 = vpop.f32.mrb[0].mxu0
      %v651 = vpop.f32.mrb[0].mxu0
      %v652 = vadd.f32 %v539, %v651
      %v653 = vpop.f32.mrb[0].mxu0
      %654 = vdwg.mxu0
      %v655 = vld [vmem:[%s6] sm:$0x1]
      %v657 = vlaneseq
      %v658 = vshrl.u32 %v657, 7
      %v659 = vsub.s32 0, %v658
      %v660 = vrot.slane %v655, %v659
      %v662 = vadd.f32 %v625, %v660
      %v663 = vadd.f32 %v628, %v660
      %v664 = vadd.f32 %v633, %v660
      %v665 = vadd.f32 %v636, %v660
      %v666 = vadd.f32 %v641, %v660
      %v667 = vadd.f32 %v644, %v660
      %v668 = vadd.f32 %v649, %v660
      %v669 = vadd.f32 %v652, %v660
      %v670 = vxor.u32 %v662, 2147483648
      %v671 = vxor.u32 %v663, 2147483648
      %v672 = vxor.u32 %v664, 2147483648
      %v673 = vxor.u32 %v665, 2147483648
      %v674 = vxor.u32 %v666, 2147483648
      %v675 = vxor.u32 %v667, 2147483648
      %v676 = vxor.u32 %v668, 2147483648
      %v677 = vxor.u32 %v669, 2147483648
      %v678 = vmul.f32 %v670, 1.442695
      %v679 = vpow.pop %v678
      %v680 = vmul.f32 %v671, 1.442695
      %v681 = vpow.pop %v680
      %v682 = vmul.f32 %v672, 1.442695
      %v683 = vpow.pop %v682
      %v684 = vmul.f32 %v673, 1.442695
      %v685 = vpow.pop %v684
      %v686 = vmul.f32 %v674, 1.442695
      %v687 = vpow.pop %v686
      %v688 = vmul.f32 %v675, 1.442695
      %v689 = vpow.pop %v688
      %v690 = vmul.f32 %v676, 1.442695
      %v691 = vpow.pop %v690
      %v692 = vmul.f32 %v677, 1.442695
      %v693 = vpow.pop %v692
      %v694 = vadd.f32 %v679, 1.0
      %v695 = vadd.f32 %v681, 1.0
      %v696 = vadd.f32 %v683, 1.0
      %v697 = vadd.f32 %v685, 1.0
      %v698 = vadd.f32 %v687, 1.0
      %v699 = vadd.f32 %v689, 1.0
      %v700 = vadd.f32 %v691, 1.0
      %v701 = vadd.f32 %v693, 1.0
      %v702 = vrcp.pop %v694
      %v703 = vmul.f32 1.0, %v702
      %v704 = vrcp.pop %v695
      %v705 = vmul.f32 1.0, %v704
      %v706 = vrcp.pop %v696
      %v707 = vmul.f32 1.0, %v706
      %v708 = vrcp.pop %v697
      %v709 = vmul.f32 1.0, %v708
      %v710 = vrcp.pop %v698
      %v711 = vmul.f32 1.0, %v710
      %v712 = vrcp.pop %v699
      %v713 = vmul.f32 1.0, %v712
      %v714 = vrcp.pop %v700
      %v715 = vmul.f32 1.0, %v714
      %v716 = vrcp.pop %v701
      %v717 = vmul.f32 1.0, %v716
      %v718 = vmul.f32 %v662, %v703
      %v719 = vmul.f32 %v663, %v705
      %v720 = vmul.f32 %v664, %v707
      %v721 = vmul.f32 %v665, %v709
      %v722 = vmul.f32 %v666, %v711
      %v723 = vmul.f32 %v667, %v713
      %v724 = vmul.f32 %v668, %v715
      %v725 = vmul.f32 %v669, %v717
      %v726 = vld [vmem:[%s7] sm:$0xf]
      %v727 = vld [vmem:[%s7 + $0x4] sm:$0xf]
      %v728 = vld [vmem:[%s7 + $0x8] sm:$0xf]
      %v729 = vld [vmem:[%s7 + $0xc] sm:$0xf]
      %v730 = vld [vmem:[%s7 + $0x10] sm:$0xf]
      %v731 = vld [vmem:[%s7 + $0x14] sm:$0xf]
      %v732 = vld [vmem:[%s7 + $0x18] sm:$0xf]
      %v733 = vld [vmem:[%s7 + $0x1c] sm:$0xf]
      %v734 = vld [vmem:[%s7 + $0x20] sm:$0xf]
      %v735 = vld [vmem:[%s7 + $0x24] sm:$0xf]
      %v736 = vld [vmem:[%s7 + $0x28] sm:$0xf]
      %v737 = vld [vmem:[%s7 + $0x2c] sm:$0xf]
      %v738 = vld [vmem:[%s7 + $0x30] sm:$0xf]
      %v739 = vld [vmem:[%s7 + $0x34] sm:$0xf]
      %v740 = vld [vmem:[%s7 + $0x38] sm:$0xf]
      %v741 = vld [vmem:[%s7 + $0x3c] sm:$0xf]
      %v742 = vpack.c.bf16 %v719, %v718
      %v743 = vpack.c.bf16 %v721, %v720
      %v744 = vpack.c.bf16 %v723, %v722
      %v745 = vpack.c.bf16 %v725, %v724
      %v746 = vld [vmem:[%s8] sm:$0x1]
      %v748 = vlaneseq
      %v749 = vshrl.u32 %v748, 7
      %v750 = vsub.s32 0, %v749
      %v751 = vrot.slane %v746, %v750
      %v769 = vunpack.c.l.b16 %v726
      %v770 = vunpack.c.l.b16 %v727
      %v771 = vunpack.c.l.b16 %v728
      %v772 = vunpack.c.l.b16 %v729
      %v773 = vunpack.c.l.b16 %v730
      %v774 = vunpack.c.l.b16 %v731
      %v775 = vunpack.c.l.b16 %v732
      %v776 = vunpack.c.l.b16 %v733
      %v777 = vunpack.c.l.b16 %v734
      %v778 = vunpack.c.l.b16 %v735
      %v779 = vunpack.c.l.b16 %v736
      %v780 = vunpack.c.l.b16 %v737
      %v781 = vunpack.c.l.b16 %v738
      %v782 = vunpack.c.l.b16 %v739
      %v783 = vunpack.c.l.b16 %v740
      %v784 = vunpack.c.l.b16 %v741
      %v785 = vpack.c.b16 %v770, %v769
      %v786 = vpack.c.b16 %v772, %v771
      %v787 = vpack.c.b16 %v774, %v773
      %v788 = vpack.c.b16 %v776, %v775
      %v789 = vpack.c.b16 %v778, %v777
      %v790 = vpack.c.b16 %v780, %v779
      %v791 = vpack.c.b16 %v782, %v781
      %v792 = vpack.c.b16 %v784, %v783
      %801 = vmatprep.subr.bf16.mxu0 0
      %802 = vmatpush1.bf16.msra.mxu0 %v785
      %803 = vmatprep.subr.bf16.mxu0 0
      %804 = vmatpush1.bf16.msra.mxu0 %v786
      %805 = vmatprep.subr.bf16.mxu0 0
      %806 = vmatpush1.bf16.msra.mxu0 %v787
      %807 = vmatprep.subr.bf16.mxu0 0
      %808 = vmatpush1.bf16.msra.mxu0 %v788
      %809 = vmatprep.subr.bf16.mxu0 0
      %810 = vmatpush1.bf16.msra.mxu0 %v789
      %811 = vmatprep.subr.bf16.mxu0 0
      %812 = vmatpush1.bf16.msra.mxu0 %v790
      %813 = vmatprep.subr.bf16.mxu0 0
      %814 = vmatpush1.bf16.msra.mxu0 %v791
      %815 = vmatprep.subr.bf16.mxu0 0
      %816 = vmatpush1.bf16.msra.mxu0 %v792
      %817 = vmatprep.subr.bf16.mxu0 0
      %818 = vmatpush1.bf16.msra.mxu0 0
      %819 = vmatprep.subr.bf16.mxu0 0
      %820 = vmatpush1.bf16.msra.mxu0 0
      %821 = vmatprep.subr.bf16.mxu0 0
      %822 = vmatpush1.bf16.msra.mxu0 0
      %823 = vmatprep.subr.bf16.mxu0 0
      %824 = vmatpush1.bf16.msra.mxu0 0
      %825 = vmatprep.subr.bf16.mxu0 0
      %826 = vmatpush1.bf16.msra.mxu0 0
      %827 = vmatprep.subr.bf16.mxu0 0
      %828 = vmatpush1.bf16.msra.mxu0 0
      %829 = vmatprep.subr.bf16.mxu0 0
      %830 = vmatpush1.bf16.msra.mxu0 0
      %831 = vmatprep.subr.bf16.mxu0 0
      %832 = vmatpush1.bf16.msra.mxu0 0
      %833 = vmatprep.mubr.bf16.mxu0 0
      %834 = vmatmul.mubr.bf16.gmra.mrb[0].mxu0 %v742
      %v835 = vpop.f32.mrb[0].mxu0
      %v836 = vadd.f32 %v751, %v835
      %v837 = vpop.f32.mrb[0].mxu0
      %v838 = vpop.f32.mrb[0].mxu0
      %v839 = vadd.f32 %v751, %v838
      %v840 = vpop.f32.mrb[0].mxu0
      %841 = vmatprep.mubr.bf16.mxu0 0
      %842 = vmatmul.mubr.bf16.gmra.mrb[0].mxu0 %v743
      %v843 = vpop.f32.mrb[0].mxu0
      %v844 = vadd.f32 %v751, %v843
      %v845 = vpop.f32.mrb[0].mxu0
      %v846 = vpop.f32.mrb[0].mxu0
      %v847 = vadd.f32 %v751, %v846
      %v848 = vpop.f32.mrb[0].mxu0
      %849 = vmatprep.mubr.bf16.mxu0 0
      %850 = vmatmul.mubr.bf16.gmra.mrb[0].mxu0 %v744
      %v851 = vpop.f32.mrb[0].mxu0
      %v852 = vadd.f32 %v751, %v851
      %v853 = vpop.f32.mrb[0].mxu0
      %v854 = vpop.f32.mrb[0].mxu0
      %v855 = vadd.f32 %v751, %v854
      %v856 = vpop.f32.mrb[0].mxu0
      %857 = vmatprep.mubr.bf16.mxu0 0
      %858 = vmatmul.mubr.bf16.gmra.mrb[0].mxu0 %v745
      %v859 = vpop.f32.mrb[0].mxu0
      %v860 = vadd.f32 %v751, %v859
      %v861 = vpop.f32.mrb[0].mxu0
      %v862 = vpop.f32.mrb[0].mxu0
      %v863 = vadd.f32 %v751, %v862
      %v864 = vpop.f32.mrb[0].mxu0
      %865 = vdwg.mxu0
      %v866 = vld [vmem:[%s9] sm:$0x1]
      %v867 = vld [vmem:[%s10] sm:$0x1]
      %868 = vadd.xlane.f32.xlu0 %v836
      %v869 = vpop.xlane.xlu0 %868
      %870 = vadd.xlane.f32.xlu0 %v839
      %v871 = vpop.xlane.xlu0 %870
      %872 = vadd.xlane.f32.xlu0 %v844
      %v873 = vpop.xlane.xlu0 %872
      %874 = vadd.xlane.f32.xlu0 %v847
      %v875 = vpop.xlane.xlu0 %874
      %876 = vadd.xlane.f32.xlu0 %v852
      %v877 = vpop.xlane.xlu0 %876
      %878 = vadd.xlane.f32.xlu0 %v855
      %v879 = vpop.xlane.xlu0 %878
      %880 = vadd.xlane.f32.xlu0 %v860
      %v881 = vpop.xlane.xlu0 %880
      %882 = vadd.xlane.f32.xlu0 %v863
      %v883 = vpop.xlane.xlu0 %882
      %v884 = vrcp.pop 128.0
      %v885 = vmul.f32 %v869, %v884
      %v886 = vmul.f32 %v871, %v884
      %v887 = vmul.f32 %v873, %v884
      %v888 = vmul.f32 %v875, %v884
      %v889 = vmul.f32 %v877, %v884
      %v890 = vmul.f32 %v879, %v884
      %v891 = vmul.f32 %v881, %v884
      %v892 = vmul.f32 %v883, %v884
      %v893 = vsub.f32 %v836, %v885
      %v894 = vsub.f32 %v839, %v886
      %v895 = vsub.f32 %v844, %v887
      %v896 = vsub.f32 %v847, %v888
      %v897 = vsub.f32 %v852, %v889
      %v898 = vsub.f32 %v855, %v890
      %v899 = vsub.f32 %v860, %v891
      %v900 = vsub.f32 %v863, %v892
      %v901 = vmul.f32 %v893, %v893
      %v902 = vmul.f32 %v894, %v894
      %v903 = vmul.f32 %v895, %v895
      %v904 = vmul.f32 %v896, %v896
      %v905 = vmul.f32 %v897, %v897
      %v906 = vmul.f32 %v898, %v898
      %v907 = vmul.f32 %v899, %v899
      %v908 = vmul.f32 %v900, %v900
      %909 = vadd.xlane.f32.xlu0 %v901
      %v910 = vpop.xlane.xlu0 %909
      %911 = vadd.xlane.f32.xlu0 %v902
      %v912 = vpop.xlane.xlu0 %911
      %913 = vadd.xlane.f32.xlu0 %v903
      %v914 = vpop.xlane.xlu0 %913
      %915 = vadd.xlane.f32.xlu0 %v904
      %v916 = vpop.xlane.xlu0 %915
      %917 = vadd.xlane.f32.xlu0 %v905
      %v918 = vpop.xlane.xlu0 %917
      %919 = vadd.xlane.f32.xlu0 %v906
      %v920 = vpop.xlane.xlu0 %919
      %921 = vadd.xlane.f32.xlu0 %v907
      %v922 = vpop.xlane.xlu0 %921
      %923 = vadd.xlane.f32.xlu0 %v908
      %v924 = vpop.xlane.xlu0 %923
      %v925 = vmul.f32 %v910, %v884
      %v926 = vmul.f32 %v912, %v884
      %v927 = vmul.f32 %v914, %v884
      %v928 = vmul.f32 %v916, %v884
      %v929 = vmul.f32 %v918, %v884
      %v930 = vmul.f32 %v920, %v884
      %v931 = vmul.f32 %v922, %v884
      %v932 = vmul.f32 %v924, %v884
      %v933 = vadd.f32 %v925, 1e-05
      %v934 = vadd.f32 %v926, 1e-05
      %v935 = vadd.f32 %v927, 1e-05
      %v936 = vadd.f32 %v928, 1e-05
      %v937 = vadd.f32 %v929, 1e-05
      %v938 = vadd.f32 %v930, 1e-05
      %v939 = vadd.f32 %v931, 1e-05
      %v940 = vadd.f32 %v932, 1e-05
      %v941 = vrsqrt.pop %v933
      %v942 = vrsqrt.pop %v934
      %v943 = vrsqrt.pop %v935
      %v944 = vrsqrt.pop %v936
      %v945 = vrsqrt.pop %v937
      %v946 = vrsqrt.pop %v938
      %v947 = vrsqrt.pop %v939
      %v948 = vrsqrt.pop %v940
      %v949 = vmul.f32 %v893, %v941
      %v950 = vmul.f32 %v894, %v942
      %v951 = vmul.f32 %v895, %v943
      %v952 = vmul.f32 %v896, %v944
      %v953 = vmul.f32 %v897, %v945
      %v954 = vmul.f32 %v898, %v946
      %v955 = vmul.f32 %v899, %v947
      %v956 = vmul.f32 %v900, %v948
      %v958 = vlaneseq
      %v959 = vshrl.u32 %v958, 7
      %v960 = vsub.s32 0, %v959
      %v961 = vrot.slane %v866, %v960
      %v963 = vmul.f32 %v949, %v961
      %v964 = vmul.f32 %v950, %v961
      %v965 = vmul.f32 %v951, %v961
      %v966 = vmul.f32 %v952, %v961
      %v967 = vmul.f32 %v953, %v961
      %v968 = vmul.f32 %v954, %v961
      %v969 = vmul.f32 %v955, %v961
      %v970 = vmul.f32 %v956, %v961
      %v972 = vlaneseq
      %v973 = vshrl.u32 %v972, 7
      %v974 = vsub.s32 0, %v973
      %v975 = vrot.slane %v867, %v974
      %v977 = vadd.f32 %v963, %v975
      %v978 = vadd.f32 %v964, %v975
      %v979 = vadd.f32 %v965, %v975
      %v980 = vadd.f32 %v966, %v975
      %v981 = vadd.f32 %v967, %v975
      %v982 = vadd.f32 %v968, %v975
      %v983 = vadd.f32 %v969, %v975
      %v984 = vadd.f32 %v970, %v975
      %v985 = vadd.f32 %v977, %v373
      %v986 = vadd.f32 %v978, %v374
      %v987 = vadd.f32 %v979, %v375
      %v988 = vadd.f32 %v980, %v376
      %v989 = vadd.f32 %v981, %v377
      %v990 = vadd.f32 %v982, %v378
      %v991 = vadd.f32 %v983, %v379
      %v992 = vadd.f32 %v984, %v380
      %993 = vst [vmem:[%s346] sm:$0xff] %v985
      %994 = vst [vmem:[%s346 + $0x8] sm:$0xff] %v986
      %995 = vst [vmem:[%s346 + $0x10] sm:$0xff] %v987
      %996 = vst [vmem:[%s346 + $0x18] sm:$0xff] %v988
      %997 = vst [vmem:[%s346 + $0x20] sm:$0xff] %v989
      %998 = vst [vmem:[%s346 + $0x28] sm:$0xff] %v990
      %999 = vst [vmem:[%s346 + $0x30] sm:$0xff] %v991
      %1000 = vst [vmem:[%s346 + $0x38] sm:$0xff] %v992
      %s1001 = smul.u32 8, %s32
      %p1002 = scmp.lt.s32.totalorder %s1001, 15
      %s1003 = scalar_select %p1002, %s1001, 15
      %s1004 = smul.addr %s1003, 8
      %s1005 = scalar_lea.vmem %s11, %s1004
      // Predicated region
      $region71: #{graphcast_processor_forward.5} parent=55 // pred_check
        %p1006 = pneg %p244
      $region72: #{graphcast_processor_forward.5} parent=55 // pred_check_branch
        %1008 = sbr.rel (%p1006) target = $region74
      $region73: #{graphcast_processor_forward.5} parent=55 // pred_region
        %s1009 = smul.u32 8, %s32
      $region74: #{graphcast_processor_forward.5} parent=55 // pred_fallthru
        _
    $region56: #{graphcast_processor_forward.5} parent=5 // pred_fallthru
      _
    %p1010 = scmp.le.s32.totalorder 2, %s27
    // Predicated region
    $region75: #{graphcast_processor_forward.5} parent=5 // pred_check
      %p1011 = pneg %p1010
    $region76: #{graphcast_processor_forward.5} parent=5 // pred_check_branch
      %1013 = sbr.rel (%p1011) target = $region78
    $region77: #{graphcast_processor_forward.5} parent=5 // pred_region
      %s1014 = ssub.s32 %s27, 2
      // Predicated region
      $region79: #{graphcast_processor_forward.5} parent=77 // pred_check
        %p1015 = pneg %p250
      $region80: #{graphcast_processor_forward.5} parent=77 // pred_check_branch
        %1017 = sbr.rel (%p1015) target = $region82
      $region81: #{graphcast_processor_forward.5} parent=77 // pred_region
        %s1018 = smul.u32 8, %s33
        %p1019 = scmp.lt.s32.totalorder %s1018, 15
        %s1020 = scalar_select %p1019, %s1018, 15
        %s1021 = smul.addr %s1020, 8
        %s1022 = scalar_lea.vmem %s11, %s1021
      $region82: #{graphcast_processor_forward.5} parent=77 // pred_fallthru
        _
    $region78: #{graphcast_processor_forward.5} parent=5 // pred_fallthru
      _
  $region6: #{graphcast_processor_forward.5} parent=0 // loop_footer
    %s31 = sadd.s32 1, %s27
  $region7: #{graphcast_processor_forward.5} parent=0 // loop_footer_branch
    %26 = sbr.rel target = $region3
  $region8: #{graphcast_processor_forward.5} parent=0 // loop_exit
    _

// kernel: graphcast_processor_forward.7
$region0: #{graphcast_processor_forward.7}
  #allocation0 [shape = 'u32[]', space=smem, size = 0x4, offset = 0x4, fixed_abs, tag = 'smem constant byte address 0x4 - core index']
  #allocation1 [shape = 'u32[144,128]{1,0:T(1,128)}', space=vmem, size = 0x12000, scoped, tag = 'internal scratch']
  #allocation2 [shape = 'f32[64,128]{1,0:T(8,128)}', space=vmem, size = 0x8000, scoped, tag = 'scratch operand']
  #allocation3 [shape = 's32[1]{0}', space=sflag, size = 0x4, scoped, tag = 'scoped memory for graphcast_processor_forward.7']
  #allocation4 [shape = 'u8[3072]{0}', space=smem, size = 0xc00, scoped, tag = 'prefetched SMEM operand 0']
  #allocation5 [shape = 'u8[512]{0}', space=smem, size = 0x200, scoped, tag = 'prefetched SMEM operand 1']
  %s0 = inlined_call_operand.vmem [shape: s32[768], index: 0, kind: input, shape index: {}]
  %s1 = inlined_call_operand.vmem [shape: s32[128], index: 1, kind: input, shape index: {}]
  %s2 = inlined_call_operand.vmem [shape: f32[128,128], index: 2, kind: input, shape index: {}]
  %s3 = inlined_call_operand.vmem [shape: f32[256,128], index: 3, kind: input, shape index: {}]
  %s4 = inlined_call_operand.vmem [shape: bf16[128,128], index: 4, kind: input, shape index: {}]
  %s5 = inlined_call_operand.vmem [shape: bf16[128,128], index: 5, kind: input, shape index: {}]
  %s6 = inlined_call_operand.vmem [shape: f32[1,128], index: 6, kind: input, shape index: {}]
  %s7 = inlined_call_operand.vmem [shape: bf16[128,128], index: 7, kind: input, shape index: {}]
  %s8 = inlined_call_operand.vmem [shape: f32[1,128], index: 8, kind: input, shape index: {}]
  %s9 = inlined_call_operand.vmem [shape: f32[1,128], index: 9, kind: input, shape index: {}]
  %s10 = inlined_call_operand.vmem [shape: f32[1,128], index: 10, kind: input, shape index: {}]
  %s11 = inlined_call_operand.hbm [shape: f32[128,128], index: 11, kind: output, shape index: {}]
  %s12 = sld [smem:[#allocation0]]
  $region83: #{graphcast_processor_forward.7} parent=0
    _
  %s14 = ssub.s32 1, %s12
  %s15 = scalar_select 0, %s14, %s12
  %s16 = sshll.u32 %s0, 4
  %s17 = int_to_ptr.vmem [resolvable:$true] %s16
  %19 = dma.vmem_to_smem %s17, 96, [#allocation4], [#allocation3]
  %s20 = sshll.u32 %s1, 4
  %s21 = int_to_ptr.vmem [resolvable:$true] %s20
  %23 = dma.vmem_to_smem %s21, 16, [#allocation5], [#allocation3]
  %24 = dma.done [#allocation3], 112
  %25 = sfence
  $region1: #{graphcast_processor_forward.7} parent=0
    #allocation6 [shape = 'u8[65536]{0}', space=vmem, size = 0x10000, scoped, tag = 'output window, operand 0']
    #allocation7 [shape = 's32[2]{0}', space=sflag, size = 0x8, scoped, tag = 'scoped memory for graphcast_processor_forward.7']
    %26 = vsyncpa [#allocation7], 0
    %s27 = scalar_lea.sflag [#allocation7], 1
    %28 = vsyncpa %s27, 0
    loop: start=0, step=1, limit=4
    $region2: #{graphcast_processor_forward.7} parent=1 // loop_pre_header
      _
    $region3: #{graphcast_processor_forward.7} parent=1 // loop_header
      %s30 = sphi 0, %s34
      %p31 = scmp.ge.s32.totalorder %s30, 4
      %s40 = sphi 0, %s42
      %s43 = sphi 0, %s40
      %s44 = sphi 0, %s43
      %s60 = sphi 0, %s44
      %s64 = sphi 0, %s64
      %s66 = sphi 0, %s64
      %s67 = sphi 0, %s66
      %s81 = sphi 0, %s67
      %s85 = sphi 0, %s85
      %s87 = sphi 0, %s85
      %s88 = sphi 0, %s87
      %s102 = sphi 0, %s88
      %s106 = sphi 0, %s106
      %s108 = sphi 0, %s106
      %s109 = sphi 0, %s108
      %s123 = sphi 0, %s109
      %s127 = sphi 0, %s127
      %s129 = sphi 0, %s127
      %s130 = sphi 0, %s129
      %s144 = sphi 0, %s130
      %s148 = sphi 0, %s148
      %s150 = sphi 0, %s148
      %s151 = sphi 0, %s150
      %s165 = sphi 0, %s151
      %s169 = sphi 0, %s169
      %s171 = sphi 0, %s169
      %s172 = sphi 0, %s171
      %s186 = sphi 0, %s172
      %s190 = sphi 0, %s190
      %s192 = sphi 0, %s190
      %s193 = sphi 0, %s192
      %s207 = sphi 0, %s193
      %s211 = sphi 0, %s211
      %s213 = sphi 0, %s211
      %s214 = sphi 0, %s213
      %s228 = sphi 0, %s214
      %s234 = sphi 0, %s236
      %s237 = sphi 0, %s234
      %s238 = sphi 0, %s237
      %s254 = sphi 0, %s238
    $region4: #{graphcast_processor_forward.7} parent=1 // loop_header_branch
      %33 = sbr.rel (%p31) target = $region8
    $region5: #{graphcast_processor_forward.7} parent=1 // loop_body
      %s35 = ssub.s32 %s30, 1
      %s36 = ssub.s32 %s30, 2
      %s37 = sadd.s32 %s30, 1
      %s38 = ssub.s32 %s30, %s37
      %p39 = scmp.eq.s32.totalorder %s38, 0
      %s41 = sadd.s32 %s40, 1
      %s42 = scalar_select %p39, %s40, %s41
      %p45 = pneg %p39
      %p46 = scmp.eq.s32.totalorder %s30, 1
      %p47 = por %p45, %p46
      %p48 = scmp.ne.s32.totalorder %s40, %s43
      %p49 = scmp.eq.s32.totalorder %s30, 0
      %p50 = por %p48, %p49
      %p51 = scmp.ne.s32.totalorder %s40, %s43
      %p52 = scmp.eq.s32.totalorder %s35, 1
      %p53 = por %p51, %p52
      %p54 = scmp.ne.s32.totalorder %s43, %s44
      %p55 = scmp.eq.s32.totalorder %s35, 0
      %p56 = por %p54, %p55
      %p57 = scmp.ne.s32.totalorder %s43, %s44
      %p58 = scmp.eq.s32.totalorder %s36, 1
      %p59 = por %p57, %p58
      %p61 = scmp.ne.s32.totalorder %s44, %s60
      %p62 = scmp.eq.s32.totalorder %s36, 0
      %p63 = por %p61, %p62
      %s65 = sadd.s32 %s64, 1
      %p68 = scmp.eq.s32.totalorder %s30, 1
      %p69 = scmp.ne.s32.totalorder %s64, %s66
      %p70 = scmp.eq.s32.totalorder %s30, 0
      %p71 = por %p69, %p70
      %p72 = scmp.ne.s32.totalorder %s64, %s66
      %p73 = scmp.eq.s32.totalorder %s35, 1
      %p74 = por %p72, %p73
      %p75 = scmp.ne.s32.totalorder %s66, %s67
      %p76 = scmp.eq.s32.totalorder %s35, 0
      %p77 = por %p75, %p76
      %p78 = scmp.ne.s32.totalorder %s66, %s67
      %p79 = scmp.eq.s32.totalorder %s36, 1
      %p80 = por %p78, %p79
      %p82 = scmp.ne.s32.totalorder %s67, %s81
      %p83 = scmp.eq.s32.totalorder %s36, 0
      %p84 = por %p82, %p83
      %s86 = sadd.s32 %s85, 1
      %p89 = scmp.eq.s32.totalorder %s30, 1
      %p90 = scmp.ne.s32.totalorder %s85, %s87
      %p91 = scmp.eq.s32.totalorder %s30, 0
      %p92 = por %p90, %p91
      %p93 = scmp.ne.s32.totalorder %s85, %s87
      %p94 = scmp.eq.s32.totalorder %s35, 1
      %p95 = por %p93, %p94
      %p96 = scmp.ne.s32.totalorder %s87, %s88
      %p97 = scmp.eq.s32.totalorder %s35, 0
      %p98 = por %p96, %p97
      %p99 = scmp.ne.s32.totalorder %s87, %s88
      %p100 = scmp.eq.s32.totalorder %s36, 1
      %p101 = por %p99, %p100
      %p103 = scmp.ne.s32.totalorder %s88, %s102
      %p104 = scmp.eq.s32.totalorder %s36, 0
      %p105 = por %p103, %p104
      %s107 = sadd.s32 %s106, 1
      %p110 = scmp.eq.s32.totalorder %s30, 1
      %p111 = scmp.ne.s32.totalorder %s106, %s108
      %p112 = scmp.eq.s32.totalorder %s30, 0
      %p113 = por %p111, %p112
      %p114 = scmp.ne.s32.totalorder %s106, %s108
      %p115 = scmp.eq.s32.totalorder %s35, 1
      %p116 = por %p114, %p115
      %p117 = scmp.ne.s32.totalorder %s108, %s109
      %p118 = scmp.eq.s32.totalorder %s35, 0
      %p119 = por %p117, %p118
      %p120 = scmp.ne.s32.totalorder %s108, %s109
      %p121 = scmp.eq.s32.totalorder %s36, 1
      %p122 = por %p120, %p121
      %p124 = scmp.ne.s32.totalorder %s109, %s123
      %p125 = scmp.eq.s32.totalorder %s36, 0
      %p126 = por %p124, %p125
      %s128 = sadd.s32 %s127, 1
      %p131 = scmp.eq.s32.totalorder %s30, 1
      %p132 = scmp.ne.s32.totalorder %s127, %s129
      %p133 = scmp.eq.s32.totalorder %s30, 0
      %p134 = por %p132, %p133
      %p135 = scmp.ne.s32.totalorder %s127, %s129
      %p136 = scmp.eq.s32.totalorder %s35, 1
      %p137 = por %p135, %p136
      %p138 = scmp.ne.s32.totalorder %s129, %s130
      %p139 = scmp.eq.s32.totalorder %s35, 0
      %p140 = por %p138, %p139
      %p141 = scmp.ne.s32.totalorder %s129, %s130
      %p142 = scmp.eq.s32.totalorder %s36, 1
      %p143 = por %p141, %p142
      %p145 = scmp.ne.s32.totalorder %s130, %s144
      %p146 = scmp.eq.s32.totalorder %s36, 0
      %p147 = por %p145, %p146
      %s149 = sadd.s32 %s148, 1
      %p152 = scmp.eq.s32.totalorder %s30, 1
      %p153 = scmp.ne.s32.totalorder %s148, %s150
      %p154 = scmp.eq.s32.totalorder %s30, 0
      %p155 = por %p153, %p154
      %p156 = scmp.ne.s32.totalorder %s148, %s150
      %p157 = scmp.eq.s32.totalorder %s35, 1
      %p158 = por %p156, %p157
      %p159 = scmp.ne.s32.totalorder %s150, %s151
      %p160 = scmp.eq.s32.totalorder %s35, 0
      %p161 = por %p159, %p160
      %p162 = scmp.ne.s32.totalorder %s150, %s151
      %p163 = scmp.eq.s32.totalorder %s36, 1
      %p164 = por %p162, %p163
      %p166 = scmp.ne.s32.totalorder %s151, %s165
      %p167 = scmp.eq.s32.totalorder %s36, 0
      %p168 = por %p166, %p167
      %s170 = sadd.s32 %s169, 1
      %p173 = scmp.eq.s32.totalorder %s30, 1
      %p174 = scmp.ne.s32.totalorder %s169, %s171
      %p175 = scmp.eq.s32.totalorder %s30, 0
      %p176 = por %p174, %p175
      %p177 = scmp.ne.s32.totalorder %s169, %s171
      %p178 = scmp.eq.s32.totalorder %s35, 1
      %p179 = por %p177, %p178
      %p180 = scmp.ne.s32.totalorder %s171, %s172
      %p181 = scmp.eq.s32.totalorder %s35, 0
      %p182 = por %p180, %p181
      %p183 = scmp.ne.s32.totalorder %s171, %s172
      %p184 = scmp.eq.s32.totalorder %s36, 1
      %p185 = por %p183, %p184
      %p187 = scmp.ne.s32.totalorder %s172, %s186
      %p188 = scmp.eq.s32.totalorder %s36, 0
      %p189 = por %p187, %p188
      %s191 = sadd.s32 %s190, 1
      %p194 = scmp.eq.s32.totalorder %s30, 1
      %p195 = scmp.ne.s32.totalorder %s190, %s192
      %p196 = scmp.eq.s32.totalorder %s30, 0
      %p197 = por %p195, %p196
      %p198 = scmp.ne.s32.totalorder %s190, %s192
      %p199 = scmp.eq.s32.totalorder %s35, 1
      %p200 = por %p198, %p199
      %p201 = scmp.ne.s32.totalorder %s192, %s193
      %p202 = scmp.eq.s32.totalorder %s35, 0
      %p203 = por %p201, %p202
      %p204 = scmp.ne.s32.totalorder %s192, %s193
      %p205 = scmp.eq.s32.totalorder %s36, 1
      %p206 = por %p204, %p205
      %p208 = scmp.ne.s32.totalorder %s193, %s207
      %p209 = scmp.eq.s32.totalorder %s36, 0
      %p210 = por %p208, %p209
      %s212 = sadd.s32 %s211, 1
      %p215 = scmp.eq.s32.totalorder %s30, 1
      %p216 = scmp.ne.s32.totalorder %s211, %s213
      %p217 = scmp.eq.s32.totalorder %s30, 0
      %p218 = por %p216, %p217
      %p219 = scmp.ne.s32.totalorder %s211, %s213
      %p220 = scmp.eq.s32.totalorder %s35, 1
      %p221 = por %p219, %p220
      %p222 = scmp.ne.s32.totalorder %s213, %s214
      %p223 = scmp.eq.s32.totalorder %s35, 0
      %p224 = por %p222, %p223
      %p225 = scmp.ne.s32.totalorder %s213, %s214
      %p226 = scmp.eq.s32.totalorder %s36, 1
      %p227 = por %p225, %p226
      %p229 = scmp.ne.s32.totalorder %s214, %s228
      %p230 = scmp.eq.s32.totalorder %s36, 0
      %p231 = por %p229, %p230
      %s232 = ssub.s32 %s30, %s37
      %p233 = scmp.eq.s32.totalorder %s232, 0
      %s235 = sadd.s32 %s234, 1
      %s236 = scalar_select %p233, %s234, %s235
      %p239 = pneg %p233
      %p240 = scmp.eq.s32.totalorder %s30, 1
      %p241 = por %p239, %p240
      %p242 = scmp.ne.s32.totalorder %s234, %s237
      %p243 = scmp.eq.s32.totalorder %s30, 0
      %p244 = por %p242, %p243
      %p245 = scmp.ne.s32.totalorder %s234, %s237
      %p246 = scmp.eq.s32.totalorder %s35, 1
      %p247 = por %p245, %p246
      %p248 = scmp.ne.s32.totalorder %s237, %s238
      %p249 = scmp.eq.s32.totalorder %s35, 0
      %p250 = por %p248, %p249
      %p251 = scmp.ne.s32.totalorder %s237, %s238
      %p252 = scmp.eq.s32.totalorder %s36, 1
      %p253 = por %p251, %p252
      %p255 = scmp.ne.s32.totalorder %s238, %s254
      %p256 = scmp.eq.s32.totalorder %s36, 0
      %p257 = por %p255, %p256
      %p258 = scmp.le.s32.totalorder 1, %s30
      %p259 = scmp.lt.s32.totalorder %s30, 3
      %p260 = pnand %p258, %p259
      %p261 = pneg %p260
      // Predicated region
      $region9: #{graphcast_processor_forward.7} parent=5 // pred_check
        _
      $region10: #{graphcast_processor_forward.7} parent=5 // pred_check_branch
        %263 = sbr.rel (%p260) target = $region12
      $region11: #{graphcast_processor_forward.7} parent=5 // pred_region
        %s264 = ssub.s32 %s30, 1
        // Predicated region
        $region13: #{graphcast_processor_forward.7} parent=11 // pred_check
          %p265 = pneg %p77
        $region14: #{graphcast_processor_forward.7} parent=11 // pred_check_branch
          %267 = sbr.rel (%p265) target = $region16
        $region15: #{graphcast_processor_forward.7} parent=11 // pred_region
          _
        $region16: #{graphcast_processor_forward.7} parent=11 // pred_fallthru
          _
        // Predicated region
        $region17: #{graphcast_processor_forward.7} parent=11 // pred_check
          %p268 = pneg %p98
        $region18: #{graphcast_processor_forward.7} parent=11 // pred_check_branch
          %270 = sbr.rel (%p268) target = $region20
        $region19: #{graphcast_processor_forward.7} parent=11 // pred_region
          _
        $region20: #{graphcast_processor_forward.7} parent=11 // pred_fallthru
          _
        // Predicated region
        $region21: #{graphcast_processor_forward.7} parent=11 // pred_check
          %p271 = pneg %p119
        $region22: #{graphcast_processor_forward.7} parent=11 // pred_check_branch
          %273 = sbr.rel (%p271) target = $region24
        $region23: #{graphcast_processor_forward.7} parent=11 // pred_region
          _
        $region24: #{graphcast_processor_forward.7} parent=11 // pred_fallthru
          _
        // Predicated region
        $region25: #{graphcast_processor_forward.7} parent=11 // pred_check
          %p274 = pneg %p140
        $region26: #{graphcast_processor_forward.7} parent=11 // pred_check_branch
          %276 = sbr.rel (%p274) target = $region28
        $region27: #{graphcast_processor_forward.7} parent=11 // pred_region
          _
        $region28: #{graphcast_processor_forward.7} parent=11 // pred_fallthru
          _
        // Predicated region
        $region29: #{graphcast_processor_forward.7} parent=11 // pred_check
          %p277 = pneg %p161
        $region30: #{graphcast_processor_forward.7} parent=11 // pred_check_branch
          %279 = sbr.rel (%p277) target = $region32
        $region31: #{graphcast_processor_forward.7} parent=11 // pred_region
          _
        $region32: #{graphcast_processor_forward.7} parent=11 // pred_fallthru
          _
        // Predicated region
        $region33: #{graphcast_processor_forward.7} parent=11 // pred_check
          %p280 = pneg %p182
        $region34: #{graphcast_processor_forward.7} parent=11 // pred_check_branch
          %282 = sbr.rel (%p280) target = $region36
        $region35: #{graphcast_processor_forward.7} parent=11 // pred_region
          _
        $region36: #{graphcast_processor_forward.7} parent=11 // pred_fallthru
          _
        // Predicated region
        $region37: #{graphcast_processor_forward.7} parent=11 // pred_check
          %p283 = pneg %p203
        $region38: #{graphcast_processor_forward.7} parent=11 // pred_check_branch
          %285 = sbr.rel (%p283) target = $region40
        $region39: #{graphcast_processor_forward.7} parent=11 // pred_region
          _
        $region40: #{graphcast_processor_forward.7} parent=11 // pred_fallthru
          _
        // Predicated region
        $region41: #{graphcast_processor_forward.7} parent=11 // pred_check
          %p286 = pneg %p224
        $region42: #{graphcast_processor_forward.7} parent=11 // pred_check_branch
          %288 = sbr.rel (%p286) target = $region44
        $region43: #{graphcast_processor_forward.7} parent=11 // pred_region
          _
        $region44: #{graphcast_processor_forward.7} parent=11 // pred_fallthru
          _
      $region12: #{graphcast_processor_forward.7} parent=5 // pred_fallthru
        _
      %p289 = scmp.lt.s32.totalorder %s30, 2
      // Predicated region
      $region45: #{graphcast_processor_forward.7} parent=5 // pred_check
        %p290 = pneg %p289
      $region46: #{graphcast_processor_forward.7} parent=5 // pred_check_branch
        %292 = sbr.rel (%p290) target = $region48
      $region47: #{graphcast_processor_forward.7} parent=5 // pred_region
        // Predicated region
        $region49: #{graphcast_processor_forward.7} parent=47 // pred_check
          %p293 = pneg %p50
        $region50: #{graphcast_processor_forward.7} parent=47 // pred_check_branch
          %295 = sbr.rel (%p293) target = $region52
        $region51: #{graphcast_processor_forward.7} parent=47 // pred_region
          %s296 = smul.u32 8, %s30
          %p297 = scmp.lt.s32.totalorder %s296, 15
          %s298 = scalar_select %p297, %s296, 15
          %s299 = smul.addr %s298, 8
          %s300 = scalar_lea.vmem %s2, %s299
          %s301 = smul.u32 8, %s30
        $region52: #{graphcast_processor_forward.7} parent=47 // pred_fallthru
          _
      $region48: #{graphcast_processor_forward.7} parent=5 // pred_fallthru
        _
      %p302 = scmp.le.s32.totalorder 1, %s30
      %p303 = scmp.lt.s32.totalorder %s30, 3
      %p304 = pnand %p302, %p303
      %p305 = pneg %p304
      // Predicated region
      $region53: #{graphcast_processor_forward.7} parent=5 // pred_check
        _
      $region54: #{graphcast_processor_forward.7} parent=5 // pred_check_branch
        %307 = sbr.rel (%p304) target = $region56
      $region55: #{graphcast_processor_forward.7} parent=5 // pred_region
        %s308 = ssub.s32 %s30, 1
        %s309 = smul.u32 8, %s35
        %p310 = scmp.lt.s32.totalorder %s309, 15
        %s311 = scalar_select %p310, %s309, 15
        %s312 = smul.addr %s311, 8
        %s313 = scalar_lea.vmem %s2, %s312
        %p314 = pneg %p56
        %p315 = pneg %p53
        %p316 = pneg %p77
        %p317 = pneg %p74
        %p318 = pneg %p98
        %p319 = pneg %p95
        %p320 = pneg %p119
        %p321 = pneg %p116
        %p322 = pneg %p140
        %p323 = pneg %p137
        %p324 = pneg %p161
        %p325 = pneg %p158
        %p326 = pneg %p182
        %p327 = pneg %p179
        %p328 = pneg %p203
        %p329 = pneg %p200
        %p330 = pneg %p224
        %p331 = pneg %p221
        %p332 = pneg %p250
        %p333 = pneg %p247
        %s334 = sand.u32 %s237, 1
        %s335 = scalar_lea.sflag [#allocation7], %s334
        %s336 = sand.u32 %s237, 1
        %s337 = smul.addr %s336, 64
        %s338 = scalar_lea.vmem [#allocation6], %s337
        %s339 = smul.u32 8, %s35
        %p340 = scmp.lt.s32.totalorder %s339, 15
        %s341 = scalar_select %p340, %s339, 15
        %s342 = smul.addr %s341, 8
        %s343 = scalar_lea.vmem %s2, %s342
        %s344 = smul.u32 8, %s35
        %s345 = smul.u32 8, %s35
        %s347 = smul.u32 %s35, 64
        loop: start=0, step=1, limit=64
        $region57: #{graphcast_processor_forward.7} parent=55 // loop_pre_header
          _
        $region58: #{graphcast_processor_forward.7} parent=55 // loop_header
          %s349 = sphi 0, %s353
          %p350 = scmp.ge.s32.totalorder %s349, 64
        $region59: #{graphcast_processor_forward.7} parent=55 // loop_header_branch
          %352 = sbr.rel (%p350) target = $region63
        $region60: #{graphcast_processor_forward.7} parent=55 // loop_body
          %s354 = sadd.s32 %s347, %s349
          %s355 = sld [smem:[#allocation5 + %s354]]
          %s356 = smul.u32 %s354, 6
          // While loop
          $region64: #{graphcast_processor_forward.7} parent=60 // loop_pre_header
            _
          $region65: #{graphcast_processor_forward.7} parent=60 // loop_header
            %s358 = sphi 0, %s360
            %p359 = scmp.ge.s32.totalorder %s358, %s355
            %v363 = vphi 0.0, %v368
          $region66: #{graphcast_processor_forward.7} parent=60 // loop_header_branch
            %362 = sbr.rel (%p359) target = $region70
          $region67: #{graphcast_processor_forward.7} parent=60 // loop_body
            %s364 = sadd.s32 %s356, %s358
            %s365 = sld [smem:[#allocation4 + %s364]]
            %s366 = scalar_lea.vmem %s3, %s365
            %v367 = vld [vmem:[%s366] sm:$0x1]
            %v368 = vadd.f32 %v363, %v367
          $region68: #{graphcast_processor_forward.7} parent=60 // loop_footer
            %s360 = sadd.s32 %s358, 1
          $region69: #{graphcast_processor_forward.7} parent=60 // loop_footer_branch
            %357 = sbr.rel target = $region65
          $region70: #{graphcast_processor_forward.7} parent=60 // loop_exit
            _
          %s369 = scalar_lea.vmem [#allocation2], %s349
          %370 = vst [vmem:[%s369] sm:$0x1] %v363
        $region61: #{graphcast_processor_forward.7} parent=55 // loop_footer
          %s353 = sadd.s32 1, %s349
        $region62: #{graphcast_processor_forward.7} parent=55 // loop_footer_branch
          %348 = sbr.rel target = $region58
        $region63: #{graphcast_processor_forward.7} parent=55 // loop_exit
          _
        %v371 = vld [vmem:[%s343] sm:$0xff]
        %v372 = vld [vmem:[%s343 + $0x8] sm:$0xff]
        %v373 = vld [vmem:[%s343 + $0x10] sm:$0xff]
        %v374 = vld [vmem:[%s343 + $0x18] sm:$0xff]
        %v375 = vld [vmem:[%s343 + $0x20] sm:$0xff]
        %v376 = vld [vmem:[%s343 + $0x28] sm:$0xff]
        %v377 = vld [vmem:[%s343 + $0x30] sm:$0xff]
        %v378 = vld [vmem:[%s343 + $0x38] sm:$0xff]
        %v379 = vld [vmem:[#allocation2] sm:$0xff]
        %v380 = vld [vmem:[#allocation2 + $0x8] sm:$0xff]
        %v381 = vld [vmem:[#allocation2 + $0x10] sm:$0xff]
        %v382 = vld [vmem:[#allocation2 + $0x18] sm:$0xff]
        %v383 = vld [vmem:[#allocation2 + $0x20] sm:$0xff]
        %v384 = vld [vmem:[#allocation2 + $0x28] sm:$0xff]
        %v385 = vld [vmem:[#allocation2 + $0x30] sm:$0xff]
        %v386 = vld [vmem:[#allocation2 + $0x38] sm:$0xff]
        %v387 = vld [vmem:[%s4] sm:$0xf]
        %v388 = vld [vmem:[%s4 + $0x4] sm:$0xf]
        %v389 = vld [vmem:[%s4 + $0x8] sm:$0xf]
        %v390 = vld [vmem:[%s4 + $0xc] sm:$0xf]
        %v391 = vld [vmem:[%s4 + $0x10] sm:$0xf]
        %v392 = vld [vmem:[%s4 + $0x14] sm:$0xf]
        %v393 = vld [vmem:[%s4 + $0x18] sm:$0xf]
        %v394 = vld [vmem:[%s4 + $0x1c] sm:$0xf]
        %v395 = vld [vmem:[%s4 + $0x20] sm:$0xf]
        %v396 = vld [vmem:[%s4 + $0x24] sm:$0xf]
        %v397 = vld [vmem:[%s4 + $0x28] sm:$0xf]
        %v398 = vld [vmem:[%s4 + $0x2c] sm:$0xf]
        %v399 = vld [vmem:[%s4 + $0x30] sm:$0xf]
        %v400 = vld [vmem:[%s4 + $0x34] sm:$0xf]
        %v401 = vld [vmem:[%s4 + $0x38] sm:$0xf]
        %v402 = vld [vmem:[%s4 + $0x3c] sm:$0xf]
        %v403 = vpack.c.bf16 %v380, %v379
        %v404 = vpack.c.bf16 %v382, %v381
        %v405 = vpack.c.bf16 %v384, %v383
        %v406 = vpack.c.bf16 %v386, %v385
        %v407 = vld [vmem:[%s5] sm:$0xf]
        %v408 = vld [vmem:[%s5 + $0x4] sm:$0xf]
        %v409 = vld [vmem:[%s5 + $0x8] sm:$0xf]
        %v410 = vld [vmem:[%s5 + $0xc] sm:$0xf]
        %v411 = vld [vmem:[%s5 + $0x10] sm:$0xf]
        %v412 = vld [vmem:[%s5 + $0x14] sm:$0xf]
        %v413 = vld [vmem:[%s5 + $0x18] sm:$0xf]
        %v414 = vld [vmem:[%s5 + $0x1c] sm:$0xf]
        %v415 = vld [vmem:[%s5 + $0x20] sm:$0xf]
        %v416 = vld [vmem:[%s5 + $0x24] sm:$0xf]
        %v417 = vld [vmem:[%s5 + $0x28] sm:$0xf]
        %v418 = vld [vmem:[%s5 + $0x2c] sm:$0xf]
        %v419 = vld [vmem:[%s5 + $0x30] sm:$0xf]
        %v420 = vld [vmem:[%s5 + $0x34] sm:$0xf]
        %v421 = vld [vmem:[%s5 + $0x38] sm:$0xf]
        %v422 = vld [vmem:[%s5 + $0x3c] sm:$0xf]
        %v423 = vpack.c.bf16 %v372, %v371
        %v424 = vpack.c.bf16 %v374, %v373
        %v425 = vpack.c.bf16 %v376, %v375
        %v426 = vpack.c.bf16 %v378, %v377
        %v443 = vunpack.c.l.b16 %v407
        %v444 = vunpack.c.l.b16 %v408
        %v445 = vunpack.c.l.b16 %v409
        %v446 = vunpack.c.l.b16 %v410
        %v447 = vunpack.c.l.b16 %v411
        %v448 = vunpack.c.l.b16 %v412
        %v449 = vunpack.c.l.b16 %v413
        %v450 = vunpack.c.l.b16 %v414
        %v451 = vunpack.c.l.b16 %v415
        %v452 = vunpack.c.l.b16 %v416
        %v453 = vunpack.c.l.b16 %v417
        %v454 = vunpack.c.l.b16 %v418
        %v455 = vunpack.c.l.b16 %v419
        %v456 = vunpack.c.l.b16 %v420
        %v457 = vunpack.c.l.b16 %v421
        %v458 = vunpack.c.l.b16 %v422
        %v459 = vpack.c.b16 %v444, %v443
        %v460 = vpack.c.b16 %v446, %v445
        %v461 = vpack.c.b16 %v448, %v447
        %v462 = vpack.c.b16 %v450, %v449
        %v463 = vpack.c.b16 %v452, %v451
        %v464 = vpack.c.b16 %v454, %v453
        %v465 = vpack.c.b16 %v456, %v455
        %v466 = vpack.c.b16 %v458, %v457
        %475 = vmatprep.subr.bf16.mxu0 0
        %476 = vmatpush1.bf16.msra.mxu0 %v459
        %477 = vmatprep.subr.bf16.mxu0 0
        %478 = vmatpush1.bf16.msra.mxu0 %v460
        %479 = vmatprep.subr.bf16.mxu0 0
        %480 = vmatpush1.bf16.msra.mxu0 %v461
        %481 = vmatprep.subr.bf16.mxu0 0
        %482 = vmatpush1.bf16.msra.mxu0 %v462
        %483 = vmatprep.subr.bf16.mxu0 0
        %484 = vmatpush1.bf16.msra.mxu0 %v463
        %485 = vmatprep.subr.bf16.mxu0 0
        %486 = vmatpush1.bf16.msra.mxu0 %v464
        %487 = vmatprep.subr.bf16.mxu0 0
        %488 = vmatpush1.bf16.msra.mxu0 %v465
        %489 = vmatprep.subr.bf16.mxu0 0
        %490 = vmatpush1.bf16.msra.mxu0 %v466
        %491 = vmatprep.subr.bf16.mxu0 0
        %492 = vmatpush1.bf16.msra.mxu0 0
        %493 = vmatprep.subr.bf16.mxu0 0
        %494 = vmatpush1.bf16.msra.mxu0 0
        %495 = vmatprep.subr.bf16.mxu0 0
        %496 = vmatpush1.bf16.msra.mxu0 0
        %497 = vmatprep.subr.bf16.mxu0 0
        %498 = vmatpush1.bf16.msra.mxu0 0
        %499 = vmatprep.subr.bf16.mxu0 0
        %500 = vmatpush1.bf16.msra.mxu0 0
        %501 = vmatprep.subr.bf16.mxu0 0
        %502 = vmatpush1.bf16.msra.mxu0 0
        %503 = vmatprep.subr.bf16.mxu0 0
        %504 = vmatpush1.bf16.msra.mxu0 0
        %505 = vmatprep.subr.bf16.mxu0 0
        %506 = vmatpush1.bf16.msra.mxu0 0
        %507 = vmatprep.mubr.bf16.mxu0 0
        %508 = vmatmul.mubr.bf16.gmra.mrb[0].mxu0 %v423
        %v509 = vpop.f32.mrb[0].mxu0
        %v510 = vadd.f32 0.0, %v509
        %v511 = vpop.f32.mrb[0].mxu0
        %v512 = vpop.f32.mrb[0].mxu0
        %v513 = vadd.f32 0.0, %v512
        %v514 = vpop.f32.mrb[0].mxu0
        %515 = vmatprep.mubr.bf16.mxu0 0
        %516 = vmatmul.mubr.bf16.gmra.mrb[0].mxu0 %v424
        %v517 = vpop.f32.mrb[0].mxu0
        %v518 = vadd.f32 0.0, %v517
        %v519 = vpop.f32.mrb[0].mxu0
        %v520 = vpop.f32.mrb[0].mxu0
        %v521 = vadd.f32 0.0, %v520
        %v522 = vpop.f32.mrb[0].mxu0
        %523 = vmatprep.mubr.bf16.mxu0 0
        %524 = vmatmul.mubr.bf16.gmra.mrb[0].mxu0 %v425
        %v525 = vpop.f32.mrb[0].mxu0
        %v526 = vadd.f32 0.0, %v525
        %v527 = vpop.f32.mrb[0].mxu0
        %v528 = vpop.f32.mrb[0].mxu0
        %v529 = vadd.f32 0.0, %v528
        %v530 = vpop.f32.mrb[0].mxu0
        %531 = vmatprep.mubr.bf16.mxu0 0
        %532 = vmatmul.mubr.bf16.gmra.mrb[0].mxu0 %v426
        %v533 = vpop.f32.mrb[0].mxu0
        %v534 = vadd.f32 0.0, %v533
        %v535 = vpop.f32.mrb[0].mxu0
        %v536 = vpop.f32.mrb[0].mxu0
        %v537 = vadd.f32 0.0, %v536
        %v538 = vpop.f32.mrb[0].mxu0
        %539 = vdwg.mxu0
        %v556 = vunpack.c.l.b16 %v387
        %v557 = vunpack.c.l.b16 %v388
        %v558 = vunpack.c.l.b16 %v389
        %v559 = vunpack.c.l.b16 %v390
        %v560 = vunpack.c.l.b16 %v391
        %v561 = vunpack.c.l.b16 %v392
        %v562 = vunpack.c.l.b16 %v393
        %v563 = vunpack.c.l.b16 %v394
        %v564 = vunpack.c.l.b16 %v395
        %v565 = vunpack.c.l.b16 %v396
        %v566 = vunpack.c.l.b16 %v397
        %v567 = vunpack.c.l.b16 %v398
        %v568 = vunpack.c.l.b16 %v399
        %v569 = vunpack.c.l.b16 %v400
        %v570 = vunpack.c.l.b16 %v401
        %v571 = vunpack.c.l.b16 %v402
        %v572 = vpack.c.b16 %v557, %v556
        %v573 = vpack.c.b16 %v559, %v558
        %v574 = vpack.c.b16 %v561, %v560
        %v575 = vpack.c.b16 %v563, %v562
        %v576 = vpack.c.b16 %v565, %v564
        %v577 = vpack.c.b16 %v567, %v566
        %v578 = vpack.c.b16 %v569, %v568
        %v579 = vpack.c.b16 %v571, %v570
        %588 = vmatprep.subr.bf16.mxu0 0
        %589 = vmatpush1.bf16.msra.mxu0 %v572
        %590 = vmatprep.subr.bf16.mxu0 0
        %591 = vmatpush1.bf16.msra.mxu0 %v573
        %592 = vmatprep.subr.bf16.mxu0 0
        %593 = vmatpush1.bf16.msra.mxu0 %v574
        %594 = vmatprep.subr.bf16.mxu0 0
        %595 = vmatpush1.bf16.msra.mxu0 %v575
        %596 = vmatprep.subr.bf16.mxu0 0
        %597 = vmatpush1.bf16.msra.mxu0 %v576
        %598 = vmatprep.subr.bf16.mxu0 0
        %599 = vmatpush1.bf16.msra.mxu0 %v577
        %600 = vmatprep.subr.bf16.mxu0 0
        %601 = vmatpush1.bf16.msra.mxu0 %v578
        %602 = vmatprep.subr.bf16.mxu0 0
        %603 = vmatpush1.bf16.msra.mxu0 %v579
        %604 = vmatprep.subr.bf16.mxu0 0
        %605 = vmatpush1.bf16.msra.mxu0 0
        %606 = vmatprep.subr.bf16.mxu0 0
        %607 = vmatpush1.bf16.msra.mxu0 0
        %608 = vmatprep.subr.bf16.mxu0 0
        %609 = vmatpush1.bf16.msra.mxu0 0
        %610 = vmatprep.subr.bf16.mxu0 0
        %611 = vmatpush1.bf16.msra.mxu0 0
        %612 = vmatprep.subr.bf16.mxu0 0
        %613 = vmatpush1.bf16.msra.mxu0 0
        %614 = vmatprep.subr.bf16.mxu0 0
        %615 = vmatpush1.bf16.msra.mxu0 0
        %616 = vmatprep.subr.bf16.mxu0 0
        %617 = vmatpush1.bf16.msra.mxu0 0
        %618 = vmatprep.subr.bf16.mxu0 0
        %619 = vmatpush1.bf16.msra.mxu0 0
        %620 = vmatprep.mubr.bf16.mxu0 0
        %621 = vmatmul.mubr.bf16.gmra.mrb[0].mxu0 %v403
        %v622 = vpop.f32.mrb[0].mxu0
        %v623 = vadd.f32 %v510, %v622
        %v624 = vpop.f32.mrb[0].mxu0
        %v625 = vpop.f32.mrb[0].mxu0
        %v626 = vadd.f32 %v513, %v625
        %v627 = vpop.f32.mrb[0].mxu0
        %628 = vmatprep.mubr.bf16.mxu0 0
        %629 = vmatmul.mubr.bf16.gmra.mrb[0].mxu0 %v404
        %v630 = vpop.f32.mrb[0].mxu0
        %v631 = vadd.f32 %v518, %v630
        %v632 = vpop.f32.mrb[0].mxu0
        %v633 = vpop.f32.mrb[0].mxu0
        %v634 = vadd.f32 %v521, %v633
        %v635 = vpop.f32.mrb[0].mxu0
        %636 = vmatprep.mubr.bf16.mxu0 0
        %637 = vmatmul.mubr.bf16.gmra.mrb[0].mxu0 %v405
        %v638 = vpop.f32.mrb[0].mxu0
        %v639 = vadd.f32 %v526, %v638
        %v640 = vpop.f32.mrb[0].mxu0
        %v641 = vpop.f32.mrb[0].mxu0
        %v642 = vadd.f32 %v529, %v641
        %v643 = vpop.f32.mrb[0].mxu0
        %644 = vmatprep.mubr.bf16.mxu0 0
        %645 = vmatmul.mubr.bf16.gmra.mrb[0].mxu0 %v406
        %v646 = vpop.f32.mrb[0].mxu0
        %v647 = vadd.f32 %v534, %v646
        %v648 = vpop.f32.mrb[0].mxu0
        %v649 = vpop.f32.mrb[0].mxu0
        %v650 = vadd.f32 %v537, %v649
        %v651 = vpop.f32.mrb[0].mxu0
        %652 = vdwg.mxu0
        %v653 = vld [vmem:[%s6] sm:$0x1]
        %v655 = vlaneseq
        %v656 = vshrl.u32 %v655, 7
        %v657 = vsub.s32 0, %v656
        %v658 = vrot.slane %v653, %v657
        %v660 = vadd.f32 %v623, %v658
        %v661 = vadd.f32 %v626, %v658
        %v662 = vadd.f32 %v631, %v658
        %v663 = vadd.f32 %v634, %v658
        %v664 = vadd.f32 %v639, %v658
        %v665 = vadd.f32 %v642, %v658
        %v666 = vadd.f32 %v647, %v658
        %v667 = vadd.f32 %v650, %v658
        %v668 = vxor.u32 %v660, 2147483648
        %v669 = vxor.u32 %v661, 2147483648
        %v670 = vxor.u32 %v662, 2147483648
        %v671 = vxor.u32 %v663, 2147483648
        %v672 = vxor.u32 %v664, 2147483648
        %v673 = vxor.u32 %v665, 2147483648
        %v674 = vxor.u32 %v666, 2147483648
        %v675 = vxor.u32 %v667, 2147483648
        %v676 = vmul.f32 %v668, 1.442695
        %v677 = vpow.pop %v676
        %v678 = vmul.f32 %v669, 1.442695
        %v679 = vpow.pop %v678
        %v680 = vmul.f32 %v670, 1.442695
        %v681 = vpow.pop %v680
        %v682 = vmul.f32 %v671, 1.442695
        %v683 = vpow.pop %v682
        %v684 = vmul.f32 %v672, 1.442695
        %v685 = vpow.pop %v684
        %v686 = vmul.f32 %v673, 1.442695
        %v687 = vpow.pop %v686
        %v688 = vmul.f32 %v674, 1.442695
        %v689 = vpow.pop %v688
        %v690 = vmul.f32 %v675, 1.442695
        %v691 = vpow.pop %v690
        %v692 = vadd.f32 %v677, 1.0
        %v693 = vadd.f32 %v679, 1.0
        %v694 = vadd.f32 %v681, 1.0
        %v695 = vadd.f32 %v683, 1.0
        %v696 = vadd.f32 %v685, 1.0
        %v697 = vadd.f32 %v687, 1.0
        %v698 = vadd.f32 %v689, 1.0
        %v699 = vadd.f32 %v691, 1.0
        %v700 = vrcp.pop %v692
        %v701 = vmul.f32 1.0, %v700
        %v702 = vrcp.pop %v693
        %v703 = vmul.f32 1.0, %v702
        %v704 = vrcp.pop %v694
        %v705 = vmul.f32 1.0, %v704
        %v706 = vrcp.pop %v695
        %v707 = vmul.f32 1.0, %v706
        %v708 = vrcp.pop %v696
        %v709 = vmul.f32 1.0, %v708
        %v710 = vrcp.pop %v697
        %v711 = vmul.f32 1.0, %v710
        %v712 = vrcp.pop %v698
        %v713 = vmul.f32 1.0, %v712
        %v714 = vrcp.pop %v699
        %v715 = vmul.f32 1.0, %v714
        %v716 = vmul.f32 %v660, %v701
        %v717 = vmul.f32 %v661, %v703
        %v718 = vmul.f32 %v662, %v705
        %v719 = vmul.f32 %v663, %v707
        %v720 = vmul.f32 %v664, %v709
        %v721 = vmul.f32 %v665, %v711
        %v722 = vmul.f32 %v666, %v713
        %v723 = vmul.f32 %v667, %v715
        %v724 = vld [vmem:[%s7] sm:$0xf]
        %v725 = vld [vmem:[%s7 + $0x4] sm:$0xf]
        %v726 = vld [vmem:[%s7 + $0x8] sm:$0xf]
        %v727 = vld [vmem:[%s7 + $0xc] sm:$0xf]
        %v728 = vld [vmem:[%s7 + $0x10] sm:$0xf]
        %v729 = vld [vmem:[%s7 + $0x14] sm:$0xf]
        %v730 = vld [vmem:[%s7 + $0x18] sm:$0xf]
        %v731 = vld [vmem:[%s7 + $0x1c] sm:$0xf]
        %v732 = vld [vmem:[%s7 + $0x20] sm:$0xf]
        %v733 = vld [vmem:[%s7 + $0x24] sm:$0xf]
        %v734 = vld [vmem:[%s7 + $0x28] sm:$0xf]
        %v735 = vld [vmem:[%s7 + $0x2c] sm:$0xf]
        %v736 = vld [vmem:[%s7 + $0x30] sm:$0xf]
        %v737 = vld [vmem:[%s7 + $0x34] sm:$0xf]
        %v738 = vld [vmem:[%s7 + $0x38] sm:$0xf]
        %v739 = vld [vmem:[%s7 + $0x3c] sm:$0xf]
        %v740 = vpack.c.bf16 %v717, %v716
        %v741 = vpack.c.bf16 %v719, %v718
        %v742 = vpack.c.bf16 %v721, %v720
        %v743 = vpack.c.bf16 %v723, %v722
        %v744 = vld [vmem:[%s8] sm:$0x1]
        %v746 = vlaneseq
        %v747 = vshrl.u32 %v746, 7
        %v748 = vsub.s32 0, %v747
        %v749 = vrot.slane %v744, %v748
        %v767 = vunpack.c.l.b16 %v724
        %v768 = vunpack.c.l.b16 %v725
        %v769 = vunpack.c.l.b16 %v726
        %v770 = vunpack.c.l.b16 %v727
        %v771 = vunpack.c.l.b16 %v728
        %v772 = vunpack.c.l.b16 %v729
        %v773 = vunpack.c.l.b16 %v730
        %v774 = vunpack.c.l.b16 %v731
        %v775 = vunpack.c.l.b16 %v732
        %v776 = vunpack.c.l.b16 %v733
        %v777 = vunpack.c.l.b16 %v734
        %v778 = vunpack.c.l.b16 %v735
        %v779 = vunpack.c.l.b16 %v736
        %v780 = vunpack.c.l.b16 %v737
        %v781 = vunpack.c.l.b16 %v738
        %v782 = vunpack.c.l.b16 %v739
        %v783 = vpack.c.b16 %v768, %v767
        %v784 = vpack.c.b16 %v770, %v769
        %v785 = vpack.c.b16 %v772, %v771
        %v786 = vpack.c.b16 %v774, %v773
        %v787 = vpack.c.b16 %v776, %v775
        %v788 = vpack.c.b16 %v778, %v777
        %v789 = vpack.c.b16 %v780, %v779
        %v790 = vpack.c.b16 %v782, %v781
        %799 = vmatprep.subr.bf16.mxu0 0
        %800 = vmatpush1.bf16.msra.mxu0 %v783
        %801 = vmatprep.subr.bf16.mxu0 0
        %802 = vmatpush1.bf16.msra.mxu0 %v784
        %803 = vmatprep.subr.bf16.mxu0 0
        %804 = vmatpush1.bf16.msra.mxu0 %v785
        %805 = vmatprep.subr.bf16.mxu0 0
        %806 = vmatpush1.bf16.msra.mxu0 %v786
        %807 = vmatprep.subr.bf16.mxu0 0
        %808 = vmatpush1.bf16.msra.mxu0 %v787
        %809 = vmatprep.subr.bf16.mxu0 0
        %810 = vmatpush1.bf16.msra.mxu0 %v788
        %811 = vmatprep.subr.bf16.mxu0 0
        %812 = vmatpush1.bf16.msra.mxu0 %v789
        %813 = vmatprep.subr.bf16.mxu0 0
        %814 = vmatpush1.bf16.msra.mxu0 %v790
        %815 = vmatprep.subr.bf16.mxu0 0
        %816 = vmatpush1.bf16.msra.mxu0 0
        %817 = vmatprep.subr.bf16.mxu0 0
        %818 = vmatpush1.bf16.msra.mxu0 0
        %819 = vmatprep.subr.bf16.mxu0 0
        %820 = vmatpush1.bf16.msra.mxu0 0
        %821 = vmatprep.subr.bf16.mxu0 0
        %822 = vmatpush1.bf16.msra.mxu0 0
        %823 = vmatprep.subr.bf16.mxu0 0
        %824 = vmatpush1.bf16.msra.mxu0 0
        %825 = vmatprep.subr.bf16.mxu0 0
        %826 = vmatpush1.bf16.msra.mxu0 0
        %827 = vmatprep.subr.bf16.mxu0 0
        %828 = vmatpush1.bf16.msra.mxu0 0
        %829 = vmatprep.subr.bf16.mxu0 0
        %830 = vmatpush1.bf16.msra.mxu0 0
        %831 = vmatprep.mubr.bf16.mxu0 0
        %832 = vmatmul.mubr.bf16.gmra.mrb[0].mxu0 %v740
        %v833 = vpop.f32.mrb[0].mxu0
        %v834 = vadd.f32 %v749, %v833
        %v835 = vpop.f32.mrb[0].mxu0
        %v836 = vpop.f32.mrb[0].mxu0
        %v837 = vadd.f32 %v749, %v836
        %v838 = vpop.f32.mrb[0].mxu0
        %839 = vmatprep.mubr.bf16.mxu0 0
        %840 = vmatmul.mubr.bf16.gmra.mrb[0].mxu0 %v741
        %v841 = vpop.f32.mrb[0].mxu0
        %v842 = vadd.f32 %v749, %v841
        %v843 = vpop.f32.mrb[0].mxu0
        %v844 = vpop.f32.mrb[0].mxu0
        %v845 = vadd.f32 %v749, %v844
        %v846 = vpop.f32.mrb[0].mxu0
        %847 = vmatprep.mubr.bf16.mxu0 0
        %848 = vmatmul.mubr.bf16.gmra.mrb[0].mxu0 %v742
        %v849 = vpop.f32.mrb[0].mxu0
        %v850 = vadd.f32 %v749, %v849
        %v851 = vpop.f32.mrb[0].mxu0
        %v852 = vpop.f32.mrb[0].mxu0
        %v853 = vadd.f32 %v749, %v852
        %v854 = vpop.f32.mrb[0].mxu0
        %855 = vmatprep.mubr.bf16.mxu0 0
        %856 = vmatmul.mubr.bf16.gmra.mrb[0].mxu0 %v743
        %v857 = vpop.f32.mrb[0].mxu0
        %v858 = vadd.f32 %v749, %v857
        %v859 = vpop.f32.mrb[0].mxu0
        %v860 = vpop.f32.mrb[0].mxu0
        %v861 = vadd.f32 %v749, %v860
        %v862 = vpop.f32.mrb[0].mxu0
        %863 = vdwg.mxu0
        %v864 = vld [vmem:[%s9] sm:$0x1]
        %v865 = vld [vmem:[%s10] sm:$0x1]
        %866 = vadd.xlane.f32.xlu0 %v834
        %v867 = vpop.xlane.xlu0 %866
        %868 = vadd.xlane.f32.xlu0 %v837
        %v869 = vpop.xlane.xlu0 %868
        %870 = vadd.xlane.f32.xlu0 %v842
        %v871 = vpop.xlane.xlu0 %870
        %872 = vadd.xlane.f32.xlu0 %v845
        %v873 = vpop.xlane.xlu0 %872
        %874 = vadd.xlane.f32.xlu0 %v850
        %v875 = vpop.xlane.xlu0 %874
        %876 = vadd.xlane.f32.xlu0 %v853
        %v877 = vpop.xlane.xlu0 %876
        %878 = vadd.xlane.f32.xlu0 %v858
        %v879 = vpop.xlane.xlu0 %878
        %880 = vadd.xlane.f32.xlu0 %v861
        %v881 = vpop.xlane.xlu0 %880
        %v882 = vrcp.pop 128.0
        %v883 = vmul.f32 %v867, %v882
        %v884 = vmul.f32 %v869, %v882
        %v885 = vmul.f32 %v871, %v882
        %v886 = vmul.f32 %v873, %v882
        %v887 = vmul.f32 %v875, %v882
        %v888 = vmul.f32 %v877, %v882
        %v889 = vmul.f32 %v879, %v882
        %v890 = vmul.f32 %v881, %v882
        %v891 = vsub.f32 %v834, %v883
        %v892 = vsub.f32 %v837, %v884
        %v893 = vsub.f32 %v842, %v885
        %v894 = vsub.f32 %v845, %v886
        %v895 = vsub.f32 %v850, %v887
        %v896 = vsub.f32 %v853, %v888
        %v897 = vsub.f32 %v858, %v889
        %v898 = vsub.f32 %v861, %v890
        %v899 = vmul.f32 %v891, %v891
        %v900 = vmul.f32 %v892, %v892
        %v901 = vmul.f32 %v893, %v893
        %v902 = vmul.f32 %v894, %v894
        %v903 = vmul.f32 %v895, %v895
        %v904 = vmul.f32 %v896, %v896
        %v905 = vmul.f32 %v897, %v897
        %v906 = vmul.f32 %v898, %v898
        %907 = vadd.xlane.f32.xlu0 %v899
        %v908 = vpop.xlane.xlu0 %907
        %909 = vadd.xlane.f32.xlu0 %v900
        %v910 = vpop.xlane.xlu0 %909
        %911 = vadd.xlane.f32.xlu0 %v901
        %v912 = vpop.xlane.xlu0 %911
        %913 = vadd.xlane.f32.xlu0 %v902
        %v914 = vpop.xlane.xlu0 %913
        %915 = vadd.xlane.f32.xlu0 %v903
        %v916 = vpop.xlane.xlu0 %915
        %917 = vadd.xlane.f32.xlu0 %v904
        %v918 = vpop.xlane.xlu0 %917
        %919 = vadd.xlane.f32.xlu0 %v905
        %v920 = vpop.xlane.xlu0 %919
        %921 = vadd.xlane.f32.xlu0 %v906
        %v922 = vpop.xlane.xlu0 %921
        %v923 = vmul.f32 %v908, %v882
        %v924 = vmul.f32 %v910, %v882
        %v925 = vmul.f32 %v912, %v882
        %v926 = vmul.f32 %v914, %v882
        %v927 = vmul.f32 %v916, %v882
        %v928 = vmul.f32 %v918, %v882
        %v929 = vmul.f32 %v920, %v882
        %v930 = vmul.f32 %v922, %v882
        %v931 = vadd.f32 %v923, 1e-05
        %v932 = vadd.f32 %v924, 1e-05
        %v933 = vadd.f32 %v925, 1e-05
        %v934 = vadd.f32 %v926, 1e-05
        %v935 = vadd.f32 %v927, 1e-05
        %v936 = vadd.f32 %v928, 1e-05
        %v937 = vadd.f32 %v929, 1e-05
        %v938 = vadd.f32 %v930, 1e-05
        %v939 = vrsqrt.pop %v931
        %v940 = vrsqrt.pop %v932
        %v941 = vrsqrt.pop %v933
        %v942 = vrsqrt.pop %v934
        %v943 = vrsqrt.pop %v935
        %v944 = vrsqrt.pop %v936
        %v945 = vrsqrt.pop %v937
        %v946 = vrsqrt.pop %v938
        %v947 = vmul.f32 %v891, %v939
        %v948 = vmul.f32 %v892, %v940
        %v949 = vmul.f32 %v893, %v941
        %v950 = vmul.f32 %v894, %v942
        %v951 = vmul.f32 %v895, %v943
        %v952 = vmul.f32 %v896, %v944
        %v953 = vmul.f32 %v897, %v945
        %v954 = vmul.f32 %v898, %v946
        %v956 = vlaneseq
        %v957 = vshrl.u32 %v956, 7
        %v958 = vsub.s32 0, %v957
        %v959 = vrot.slane %v864, %v958
        %v961 = vmul.f32 %v947, %v959
        %v962 = vmul.f32 %v948, %v959
        %v963 = vmul.f32 %v949, %v959
        %v964 = vmul.f32 %v950, %v959
        %v965 = vmul.f32 %v951, %v959
        %v966 = vmul.f32 %v952, %v959
        %v967 = vmul.f32 %v953, %v959
        %v968 = vmul.f32 %v954, %v959
        %v970 = vlaneseq
        %v971 = vshrl.u32 %v970, 7
        %v972 = vsub.s32 0, %v971
        %v973 = vrot.slane %v865, %v972
        %v975 = vadd.f32 %v961, %v973
        %v976 = vadd.f32 %v962, %v973
        %v977 = vadd.f32 %v963, %v973
        %v978 = vadd.f32 %v964, %v973
        %v979 = vadd.f32 %v965, %v973
        %v980 = vadd.f32 %v966, %v973
        %v981 = vadd.f32 %v967, %v973
        %v982 = vadd.f32 %v968, %v973
        %v983 = vadd.f32 %v975, %v371
        %v984 = vadd.f32 %v976, %v372
        %v985 = vadd.f32 %v977, %v373
        %v986 = vadd.f32 %v978, %v374
        %v987 = vadd.f32 %v979, %v375
        %v988 = vadd.f32 %v980, %v376
        %v989 = vadd.f32 %v981, %v377
        %v990 = vadd.f32 %v982, %v378
        %991 = vst [vmem:[%s338] sm:$0xff] %v983
        %992 = vst [vmem:[%s338 + $0x8] sm:$0xff] %v984
        %993 = vst [vmem:[%s338 + $0x10] sm:$0xff] %v985
        %994 = vst [vmem:[%s338 + $0x18] sm:$0xff] %v986
        %995 = vst [vmem:[%s338 + $0x20] sm:$0xff] %v987
        %996 = vst [vmem:[%s338 + $0x28] sm:$0xff] %v988
        %997 = vst [vmem:[%s338 + $0x30] sm:$0xff] %v989
        %998 = vst [vmem:[%s338 + $0x38] sm:$0xff] %v990
        %s999 = sand.u32 %s237, 1
        %s1000 = scalar_lea.sflag [#allocation7], %s999
        %s1001 = sand.u32 %s237, 1
        %s1002 = smul.addr %s1001, 64
        %s1003 = scalar_lea.vmem [#allocation6], %s1002
        // Predicated region
        $region71: #{graphcast_processor_forward.7} parent=55 // pred_check
          %p1004 = pneg %p247
        $region72: #{graphcast_processor_forward.7} parent=55 // pred_check_branch
          %1006 = sbr.rel (%p1004) target = $region74
        $region73: #{graphcast_processor_forward.7} parent=55 // pred_region
          %s1007 = smul.u32 8, %s35
          %s1009 = ssub.s32 1024, 1024
          %1010 = vsyncadd %s1000, %s1009
          %s1011 = smul.addr %s1007, 128
          %s1012 = scalar_lea.hbm %s11, %s1011
          %s1013 = sshll.u32 %s1003, 4
          %s1014 = int_to_ptr.vmem [resolvable:$true] %s1013
          %1019 = dma.vmem_to_hbm [thread:$0]  %s1014, 1024, %s1012, %s1000, 128, 128, 8
        $region74: #{graphcast_processor_forward.7} parent=55 // pred_fallthru
          _
      $region56: #{graphcast_processor_forward.7} parent=5 // pred_fallthru
        _
      %p1020 = scmp.le.s32.totalorder 2, %s30
      // Predicated region
      $region75: #{graphcast_processor_forward.7} parent=5 // pred_check
        %p1021 = pneg %p1020
      $region76: #{graphcast_processor_forward.7} parent=5 // pred_check_branch
        %1023 = sbr.rel (%p1021) target = $region78
      $region77: #{graphcast_processor_forward.7} parent=5 // pred_region
        %s1024 = ssub.s32 %s30, 2
        // Predicated region
        $region79: #{graphcast_processor_forward.7} parent=77 // pred_check
          %p1025 = pneg %p253
        $region80: #{graphcast_processor_forward.7} parent=77 // pred_check_branch
          %1027 = sbr.rel (%p1025) target = $region82
        $region81: #{graphcast_processor_forward.7} parent=77 // pred_region
          %s1028 = sand.u32 %s238, 1
          %s1029 = scalar_lea.sflag [#allocation7], %s1028
          %s1030 = sand.u32 %s238, 1
          %s1031 = smul.addr %s1030, 64
          %s1032 = scalar_lea.vmem [#allocation6], %s1031
          %1033 = dma.done %s1029, 1024
        $region82: #{graphcast_processor_forward.7} parent=77 // pred_fallthru
          _
      $region78: #{graphcast_processor_forward.7} parent=5 // pred_fallthru
        _
    $region6: #{graphcast_processor_forward.7} parent=1 // loop_footer
      %s34 = sadd.s32 1, %s30
    $region7: #{graphcast_processor_forward.7} parent=1 // loop_footer_branch
      %29 = sbr.rel target = $region3
    $region8: #{graphcast_processor_forward.7} parent=1 // loop_exit
      _
    %1034 = vsyncpa [#allocation7], 1
    %s1035 = scalar_lea.sflag [#allocation7], 1
    %1036 = vsyncpa %s1035, 1

// kernel: graphcast_processor_forward.4
$region0: #{graphcast_processor_forward.4}
  #allocation0 [shape = 'u32[]', space=smem, size = 0x4, offset = 0x4, fixed_abs, tag = 'smem constant byte address 0x4 - core index']
  #allocation1 [shape = 'u32[144,128]{1,0:T(1,128)}', space=vmem, size = 0x12000, scoped, tag = 'internal scratch']
  #allocation2 [shape = 'f32[128,128]{1,0:T(8,128)}', space=vmem, size = 0x10000, scoped, tag = 'scratch operand']
  #allocation3 [shape = 'f32[128,128]{1,0:T(8,128)}', space=vmem, size = 0x10000, scoped, tag = 'scratch operand']
  #allocation4 [shape = 's32[1]{0}', space=sflag, size = 0x4, scoped, tag = 'scoped memory for graphcast_processor_forward.4']
  #allocation5 [shape = 'u8[1024]{0}', space=smem, size = 0x400, scoped, tag = 'prefetched SMEM operand 0']
  #allocation6 [shape = 'u8[1024]{0}', space=smem, size = 0x400, scoped, tag = 'prefetched SMEM operand 1']
  %s0 = inlined_call_operand.vmem [shape: s32[256], index: 0, kind: input, shape index: {}]
  %s1 = inlined_call_operand.vmem [shape: s32[256], index: 1, kind: input, shape index: {}]
  %s2 = inlined_call_operand.vmem [shape: f32[256,128], index: 2, kind: input, shape index: {}]
  %s3 = inlined_call_operand.vmem [shape: f32[128,128], index: 3, kind: input, shape index: {}]
  %s4 = inlined_call_operand.vmem [shape: bf16[128,128], index: 4, kind: input, shape index: {}]
  %s5 = inlined_call_operand.vmem [shape: bf16[128,128], index: 5, kind: input, shape index: {}]
  %s6 = inlined_call_operand.vmem [shape: bf16[128,128], index: 6, kind: input, shape index: {}]
  %s7 = inlined_call_operand.vmem [shape: f32[1,128], index: 7, kind: input, shape index: {}]
  %s8 = inlined_call_operand.vmem [shape: bf16[128,128], index: 8, kind: input, shape index: {}]
  %s9 = inlined_call_operand.vmem [shape: f32[1,128], index: 9, kind: input, shape index: {}]
  %s10 = inlined_call_operand.vmem [shape: f32[1,128], index: 10, kind: input, shape index: {}]
  %s11 = inlined_call_operand.vmem [shape: f32[1,128], index: 11, kind: input, shape index: {}]
  %s12 = inlined_call_operand.vmem [shape: f32[256,128], index: 12, kind: output, shape index: {}]
  %s13 = sld [smem:[#allocation0]]
  $region80: #{graphcast_processor_forward.4} parent=0
    _
  %s15 = ssub.s32 1, %s13
  %s16 = scalar_select 0, %s15, %s13
  %s17 = sshll.u32 %s0, 4
  %s18 = int_to_ptr.vmem [resolvable:$true] %s17
  %20 = dma.vmem_to_smem %s18, 32, [#allocation5], [#allocation4]
  %s21 = sshll.u32 %s1, 4
  %s22 = int_to_ptr.vmem [resolvable:$true] %s21
  %24 = dma.vmem_to_smem %s22, 32, [#allocation6], [#allocation4]
  %25 = dma.done [#allocation4], 64
  %26 = sfence
  loop: start=0, step=1, limit=4
  $region2: #{graphcast_processor_forward.4} parent=0 // loop_pre_header
    _
  $region3: #{graphcast_processor_forward.4} parent=0 // loop_header
    %s28 = sphi 0, %s32
    %p29 = scmp.ge.s32.totalorder %s28, 4
    %s38 = sphi 0, %s40
    %s41 = sphi 0, %s38
    %s42 = sphi 0, %s41
    %s58 = sphi 0, %s42
    %s62 = sphi 0, %s62
    %s64 = sphi 0, %s62
    %s65 = sphi 0, %s64
    %s79 = sphi 0, %s65
    %s83 = sphi 0, %s83
    %s85 = sphi 0, %s83
    %s86 = sphi 0, %s85
    %s100 = sphi 0, %s86
    %s104 = sphi 0, %s104
    %s106 = sphi 0, %s104
    %s107 = sphi 0, %s106
    %s121 = sphi 0, %s107
    %s125 = sphi 0, %s125
    %s127 = sphi 0, %s125
    %s128 = sphi 0, %s127
    %s142 = sphi 0, %s128
    %s146 = sphi 0, %s146
    %s148 = sphi 0, %s146
    %s149 = sphi 0, %s148
    %s163 = sphi 0, %s149
    %s167 = sphi 0, %s167
    %s169 = sphi 0, %s167
    %s170 = sphi 0, %s169
    %s184 = sphi 0, %s170
    %s188 = sphi 0, %s188
    %s190 = sphi 0, %s188
    %s191 = sphi 0, %s190
    %s205 = sphi 0, %s191
    %s209 = sphi 0, %s209
    %s211 = sphi 0, %s209
    %s212 = sphi 0, %s211
    %s226 = sphi 0, %s212
    %s230 = sphi 0, %s230
    %s232 = sphi 0, %s230
    %s233 = sphi 0, %s232
    %s247 = sphi 0, %s233
    %s253 = sphi 0, %s255
    %s256 = sphi 0, %s253
    %s257 = sphi 0, %s256
    %s273 = sphi 0, %s257
  $region4: #{graphcast_processor_forward.4} parent=0 // loop_header_branch
    %31 = sbr.rel (%p29) target = $region8
  $region5: #{graphcast_processor_forward.4} parent=0 // loop_body
    %s33 = ssub.s32 %s28, 1
    %s34 = ssub.s32 %s28, 2
    %s35 = sadd.s32 %s28, 1
    %s36 = ssub.s32 %s28, %s35
    %p37 = scmp.eq.s32.totalorder %s36, 0
    %s39 = sadd.s32 %s38, 1
    %s40 = scalar_select %p37, %s38, %s39
    %p43 = pneg %p37
    %p44 = scmp.eq.s32.totalorder %s28, 1
    %p45 = por %p43, %p44
    %p46 = scmp.ne.s32.totalorder %s38, %s41
    %p47 = scmp.eq.s32.totalorder %s28, 0
    %p48 = por %p46, %p47
    %p49 = scmp.ne.s32.totalorder %s38, %s41
    %p50 = scmp.eq.s32.totalorder %s33, 1
    %p51 = por %p49, %p50
    %p52 = scmp.ne.s32.totalorder %s41, %s42
    %p53 = scmp.eq.s32.totalorder %s33, 0
    %p54 = por %p52, %p53
    %p55 = scmp.ne.s32.totalorder %s41, %s42
    %p56 = scmp.eq.s32.totalorder %s34, 1
    %p57 = por %p55, %p56
    %p59 = scmp.ne.s32.totalorder %s42, %s58
    %p60 = scmp.eq.s32.totalorder %s34, 0
    %p61 = por %p59, %p60
    %s63 = sadd.s32 %s62, 1
    %p66 = scmp.eq.s32.totalorder %s28, 1
    %p67 = scmp.ne.s32.totalorder %s62, %s64
    %p68 = scmp.eq.s32.totalorder %s28, 0
    %p69 = por %p67, %p68
    %p70 = scmp.ne.s32.totalorder %s62, %s64
    %p71 = scmp.eq.s32.totalorder %s33, 1
    %p72 = por %p70, %p71
    %p73 = scmp.ne.s32.totalorder %s64, %s65
    %p74 = scmp.eq.s32.totalorder %s33, 0
    %p75 = por %p73, %p74
    %p76 = scmp.ne.s32.totalorder %s64, %s65
    %p77 = scmp.eq.s32.totalorder %s34, 1
    %p78 = por %p76, %p77
    %p80 = scmp.ne.s32.totalorder %s65, %s79
    %p81 = scmp.eq.s32.totalorder %s34, 0
    %p82 = por %p80, %p81
    %s84 = sadd.s32 %s83, 1
    %p87 = scmp.eq.s32.totalorder %s28, 1
    %p88 = scmp.ne.s32.totalorder %s83, %s85
    %p89 = scmp.eq.s32.totalorder %s28, 0
    %p90 = por %p88, %p89
    %p91 = scmp.ne.s32.totalorder %s83, %s85
    %p92 = scmp.eq.s32.totalorder %s33, 1
    %p93 = por %p91, %p92
    %p94 = scmp.ne.s32.totalorder %s85, %s86
    %p95 = scmp.eq.s32.totalorder %s33, 0
    %p96 = por %p94, %p95
    %p97 = scmp.ne.s32.totalorder %s85, %s86
    %p98 = scmp.eq.s32.totalorder %s34, 1
    %p99 = por %p97, %p98
    %p101 = scmp.ne.s32.totalorder %s86, %s100
    %p102 = scmp.eq.s32.totalorder %s34, 0
    %p103 = por %p101, %p102
    %s105 = sadd.s32 %s104, 1
    %p108 = scmp.eq.s32.totalorder %s28, 1
    %p109 = scmp.ne.s32.totalorder %s104, %s106
    %p110 = scmp.eq.s32.totalorder %s28, 0
    %p111 = por %p109, %p110
    %p112 = scmp.ne.s32.totalorder %s104, %s106
    %p113 = scmp.eq.s32.totalorder %s33, 1
    %p114 = por %p112, %p113
    %p115 = scmp.ne.s32.totalorder %s106, %s107
    %p116 = scmp.eq.s32.totalorder %s33, 0
    %p117 = por %p115, %p116
    %p118 = scmp.ne.s32.totalorder %s106, %s107
    %p119 = scmp.eq.s32.totalorder %s34, 1
    %p120 = por %p118, %p119
    %p122 = scmp.ne.s32.totalorder %s107, %s121
    %p123 = scmp.eq.s32.totalorder %s34, 0
    %p124 = por %p122, %p123
    %s126 = sadd.s32 %s125, 1
    %p129 = scmp.eq.s32.totalorder %s28, 1
    %p130 = scmp.ne.s32.totalorder %s125, %s127
    %p131 = scmp.eq.s32.totalorder %s28, 0
    %p132 = por %p130, %p131
    %p133 = scmp.ne.s32.totalorder %s125, %s127
    %p134 = scmp.eq.s32.totalorder %s33, 1
    %p135 = por %p133, %p134
    %p136 = scmp.ne.s32.totalorder %s127, %s128
    %p137 = scmp.eq.s32.totalorder %s33, 0
    %p138 = por %p136, %p137
    %p139 = scmp.ne.s32.totalorder %s127, %s128
    %p140 = scmp.eq.s32.totalorder %s34, 1
    %p141 = por %p139, %p140
    %p143 = scmp.ne.s32.totalorder %s128, %s142
    %p144 = scmp.eq.s32.totalorder %s34, 0
    %p145 = por %p143, %p144
    %s147 = sadd.s32 %s146, 1
    %p150 = scmp.eq.s32.totalorder %s28, 1
    %p151 = scmp.ne.s32.totalorder %s146, %s148
    %p152 = scmp.eq.s32.totalorder %s28, 0
    %p153 = por %p151, %p152
    %p154 = scmp.ne.s32.totalorder %s146, %s148
    %p155 = scmp.eq.s32.totalorder %s33, 1
    %p156 = por %p154, %p155
    %p157 = scmp.ne.s32.totalorder %s148, %s149
    %p158 = scmp.eq.s32.totalorder %s33, 0
    %p159 = por %p157, %p158
    %p160 = scmp.ne.s32.totalorder %s148, %s149
    %p161 = scmp.eq.s32.totalorder %s34, 1
    %p162 = por %p160, %p161
    %p164 = scmp.ne.s32.totalorder %s149, %s163
    %p165 = scmp.eq.s32.totalorder %s34, 0
    %p166 = por %p164, %p165
    %s168 = sadd.s32 %s167, 1
    %p171 = scmp.eq.s32.totalorder %s28, 1
    %p172 = scmp.ne.s32.totalorder %s167, %s169
    %p173 = scmp.eq.s32.totalorder %s28, 0
    %p174 = por %p172, %p173
    %p175 = scmp.ne.s32.totalorder %s167, %s169
    %p176 = scmp.eq.s32.totalorder %s33, 1
    %p177 = por %p175, %p176
    %p178 = scmp.ne.s32.totalorder %s169, %s170
    %p179 = scmp.eq.s32.totalorder %s33, 0
    %p180 = por %p178, %p179
    %p181 = scmp.ne.s32.totalorder %s169, %s170
    %p182 = scmp.eq.s32.totalorder %s34, 1
    %p183 = por %p181, %p182
    %p185 = scmp.ne.s32.totalorder %s170, %s184
    %p186 = scmp.eq.s32.totalorder %s34, 0
    %p187 = por %p185, %p186
    %s189 = sadd.s32 %s188, 1
    %p192 = scmp.eq.s32.totalorder %s28, 1
    %p193 = scmp.ne.s32.totalorder %s188, %s190
    %p194 = scmp.eq.s32.totalorder %s28, 0
    %p195 = por %p193, %p194
    %p196 = scmp.ne.s32.totalorder %s188, %s190
    %p197 = scmp.eq.s32.totalorder %s33, 1
    %p198 = por %p196, %p197
    %p199 = scmp.ne.s32.totalorder %s190, %s191
    %p200 = scmp.eq.s32.totalorder %s33, 0
    %p201 = por %p199, %p200
    %p202 = scmp.ne.s32.totalorder %s190, %s191
    %p203 = scmp.eq.s32.totalorder %s34, 1
    %p204 = por %p202, %p203
    %p206 = scmp.ne.s32.totalorder %s191, %s205
    %p207 = scmp.eq.s32.totalorder %s34, 0
    %p208 = por %p206, %p207
    %s210 = sadd.s32 %s209, 1
    %p213 = scmp.eq.s32.totalorder %s28, 1
    %p214 = scmp.ne.s32.totalorder %s209, %s211
    %p215 = scmp.eq.s32.totalorder %s28, 0
    %p216 = por %p214, %p215
    %p217 = scmp.ne.s32.totalorder %s209, %s211
    %p218 = scmp.eq.s32.totalorder %s33, 1
    %p219 = por %p217, %p218
    %p220 = scmp.ne.s32.totalorder %s211, %s212
    %p221 = scmp.eq.s32.totalorder %s33, 0
    %p222 = por %p220, %p221
    %p223 = scmp.ne.s32.totalorder %s211, %s212
    %p224 = scmp.eq.s32.totalorder %s34, 1
    %p225 = por %p223, %p224
    %p227 = scmp.ne.s32.totalorder %s212, %s226
    %p228 = scmp.eq.s32.totalorder %s34, 0
    %p229 = por %p227, %p228
    %s231 = sadd.s32 %s230, 1
    %p234 = scmp.eq.s32.totalorder %s28, 1
    %p235 = scmp.ne.s32.totalorder %s230, %s232
    %p236 = scmp.eq.s32.totalorder %s28, 0
    %p237 = por %p235, %p236
    %p238 = scmp.ne.s32.totalorder %s230, %s232
    %p239 = scmp.eq.s32.totalorder %s33, 1
    %p240 = por %p238, %p239
    %p241 = scmp.ne.s32.totalorder %s232, %s233
    %p242 = scmp.eq.s32.totalorder %s33, 0
    %p243 = por %p241, %p242
    %p244 = scmp.ne.s32.totalorder %s232, %s233
    %p245 = scmp.eq.s32.totalorder %s34, 1
    %p246 = por %p244, %p245
    %p248 = scmp.ne.s32.totalorder %s233, %s247
    %p249 = scmp.eq.s32.totalorder %s34, 0
    %p250 = por %p248, %p249
    %s251 = ssub.s32 %s28, %s35
    %p252 = scmp.eq.s32.totalorder %s251, 0
    %s254 = sadd.s32 %s253, 1
    %s255 = scalar_select %p252, %s253, %s254
    %p258 = pneg %p252
    %p259 = scmp.eq.s32.totalorder %s28, 1
    %p260 = por %p258, %p259
    %p261 = scmp.ne.s32.totalorder %s253, %s256
    %p262 = scmp.eq.s32.totalorder %s28, 0
    %p263 = por %p261, %p262
    %p264 = scmp.ne.s32.totalorder %s253, %s256
    %p265 = scmp.eq.s32.totalorder %s33, 1
    %p266 = por %p264, %p265
    %p267 = scmp.ne.s32.totalorder %s256, %s257
    %p268 = scmp.eq.s32.totalorder %s33, 0
    %p269 = por %p267, %p268
    %p270 = scmp.ne.s32.totalorder %s256, %s257
    %p271 = scmp.eq.s32.totalorder %s34, 1
    %p272 = por %p270, %p271
    %p274 = scmp.ne.s32.totalorder %s257, %s273
    %p275 = scmp.eq.s32.totalorder %s34, 0
    %p276 = por %p274, %p275
    %p277 = scmp.le.s32.totalorder 1, %s28
    %p278 = scmp.lt.s32.totalorder %s28, 3
    %p279 = pnand %p277, %p278
    %p280 = pneg %p279
    // Predicated region
    $region9: #{graphcast_processor_forward.4} parent=5 // pred_check
      _
    $region10: #{graphcast_processor_forward.4} parent=5 // pred_check_branch
      %282 = sbr.rel (%p279) target = $region12
    $region11: #{graphcast_processor_forward.4} parent=5 // pred_region
      %s283 = ssub.s32 %s28, 1
      // Predicated region
      $region13: #{graphcast_processor_forward.4} parent=11 // pred_check
        %p284 = pneg %p75
      $region14: #{graphcast_processor_forward.4} parent=11 // pred_check_branch
        %286 = sbr.rel (%p284) target = $region16
      $region15: #{graphcast_processor_forward.4} parent=11 // pred_region
        _
      $region16: #{graphcast_processor_forward.4} parent=11 // pred_fallthru
        _
      // Predicated region
      $region17: #{graphcast_processor_forward.4} parent=11 // pred_check
        %p287 = pneg %p96
      $region18: #{graphcast_processor_forward.4} parent=11 // pred_check_branch
        %289 = sbr.rel (%p287) target = $region20
      $region19: #{graphcast_processor_forward.4} parent=11 // pred_region
        _
      $region20: #{graphcast_processor_forward.4} parent=11 // pred_fallthru
        _
      // Predicated region
      $region21: #{graphcast_processor_forward.4} parent=11 // pred_check
        %p290 = pneg %p117
      $region22: #{graphcast_processor_forward.4} parent=11 // pred_check_branch
        %292 = sbr.rel (%p290) target = $region24
      $region23: #{graphcast_processor_forward.4} parent=11 // pred_region
        _
      $region24: #{graphcast_processor_forward.4} parent=11 // pred_fallthru
        _
      // Predicated region
      $region25: #{graphcast_processor_forward.4} parent=11 // pred_check
        %p293 = pneg %p138
      $region26: #{graphcast_processor_forward.4} parent=11 // pred_check_branch
        %295 = sbr.rel (%p293) target = $region28
      $region27: #{graphcast_processor_forward.4} parent=11 // pred_region
        _
      $region28: #{graphcast_processor_forward.4} parent=11 // pred_fallthru
        _
      // Predicated region
      $region29: #{graphcast_processor_forward.4} parent=11 // pred_check
        %p296 = pneg %p159
      $region30: #{graphcast_processor_forward.4} parent=11 // pred_check_branch
        %298 = sbr.rel (%p296) target = $region32
      $region31: #{graphcast_processor_forward.4} parent=11 // pred_region
        _
      $region32: #{graphcast_processor_forward.4} parent=11 // pred_fallthru
        _
      // Predicated region
      $region33: #{graphcast_processor_forward.4} parent=11 // pred_check
        %p299 = pneg %p180
      $region34: #{graphcast_processor_forward.4} parent=11 // pred_check_branch
        %301 = sbr.rel (%p299) target = $region36
      $region35: #{graphcast_processor_forward.4} parent=11 // pred_region
        _
      $region36: #{graphcast_processor_forward.4} parent=11 // pred_fallthru
        _
      // Predicated region
      $region37: #{graphcast_processor_forward.4} parent=11 // pred_check
        %p302 = pneg %p201
      $region38: #{graphcast_processor_forward.4} parent=11 // pred_check_branch
        %304 = sbr.rel (%p302) target = $region40
      $region39: #{graphcast_processor_forward.4} parent=11 // pred_region
        _
      $region40: #{graphcast_processor_forward.4} parent=11 // pred_fallthru
        _
      // Predicated region
      $region41: #{graphcast_processor_forward.4} parent=11 // pred_check
        %p305 = pneg %p222
      $region42: #{graphcast_processor_forward.4} parent=11 // pred_check_branch
        %307 = sbr.rel (%p305) target = $region44
      $region43: #{graphcast_processor_forward.4} parent=11 // pred_region
        _
      $region44: #{graphcast_processor_forward.4} parent=11 // pred_fallthru
        _
      // Predicated region
      $region45: #{graphcast_processor_forward.4} parent=11 // pred_check
        %p308 = pneg %p243
      $region46: #{graphcast_processor_forward.4} parent=11 // pred_check_branch
        %310 = sbr.rel (%p308) target = $region48
      $region47: #{graphcast_processor_forward.4} parent=11 // pred_region
        _
      $region48: #{graphcast_processor_forward.4} parent=11 // pred_fallthru
        _
    $region12: #{graphcast_processor_forward.4} parent=5 // pred_fallthru
      _
    %p311 = scmp.lt.s32.totalorder %s28, 2
    // Predicated region
    $region49: #{graphcast_processor_forward.4} parent=5 // pred_check
      %p312 = pneg %p311
    $region50: #{graphcast_processor_forward.4} parent=5 // pred_check_branch
      %314 = sbr.rel (%p312) target = $region52
    $region51: #{graphcast_processor_forward.4} parent=5 // pred_region
      // Predicated region
      $region53: #{graphcast_processor_forward.4} parent=51 // pred_check
        %p315 = pneg %p48
      $region54: #{graphcast_processor_forward.4} parent=51 // pred_check_branch
        %317 = sbr.rel (%p315) target = $region56
      $region55: #{graphcast_processor_forward.4} parent=51 // pred_region
        %s318 = smul.u32 16, %s28
        %p319 = scmp.lt.s32.totalorder %s318, 31
        %s320 = scalar_select %p319, %s318, 31
        %s321 = smul.addr %s320, 8
        %s322 = scalar_lea.vmem %s2, %s321
        %s323 = smul.u32 16, %s28
      $region56: #{graphcast_processor_forward.4} parent=51 // pred_fallthru
        _
    $region52: #{graphcast_processor_forward.4} parent=5 // pred_fallthru
      _
    %p324 = scmp.le.s32.totalorder 1, %s28
    %p325 = scmp.lt.s32.totalorder %s28, 3
    %p326 = pnand %p324, %p325
    %p327 = pneg %p326
    // Predicated region
    $region57: #{graphcast_processor_forward.4} parent=5 // pred_check
      _
    $region58: #{graphcast_processor_forward.4} parent=5 // pred_check_branch
      %329 = sbr.rel (%p326) target = $region60
    $region59: #{graphcast_processor_forward.4} parent=5 // pred_region
      %s330 = ssub.s32 %s28, 1
      %s331 = smul.u32 16, %s33
      %p332 = scmp.lt.s32.totalorder %s331, 31
      %s333 = scalar_select %p332, %s331, 31
      %s334 = smul.addr %s333, 8
      %s335 = scalar_lea.vmem %s2, %s334
      %p336 = pneg %p54
      %p337 = pneg %p51
      %p338 = pneg %p75
      %p339 = pneg %p72
      %p340 = pneg %p96
      %p341 = pneg %p93
      %p342 = pneg %p117
      %p343 = pneg %p114
      %p344 = pneg %p138
      %p345 = pneg %p135
      %p346 = pneg %p159
      %p347 = pneg %p156
      %p348 = pneg %p180
      %p349 = pneg %p177
      %p350 = pneg %p201
      %p351 = pneg %p198
      %p352 = pneg %p222
      %p353 = pneg %p219
      %p354 = pneg %p243
      %p355 = pneg %p240
      %p356 = pneg %p269
      %p357 = pneg %p266
      %s358 = smul.u32 16, %s33
      %p359 = scmp.lt.s32.totalorder %s358, 31
      %s360 = scalar_select %p359, %s358, 31
      %s361 = smul.addr %s360, 8
      %s362 = scalar_lea.vmem %s12, %s361
      %s363 = smul.u32 16, %s33
      %p364 = scmp.lt.s32.totalorder %s363, 31
      %s365 = scalar_select %p364, %s363, 31
      %s366 = smul.addr %s365, 8
      %s367 = scalar_lea.vmem %s2, %s366
      %s368 = smul.u32 16, %s33
      %s369 = smul.u32 16, %s33
      %p370 = scmp.lt.s32.totalorder %s369, 31
      %s371 = scalar_select %p370, %s369, 31
      %s372 = smul.addr %s371, 8
      %s373 = scalar_lea.vmem %s12, %s372
      %s374 = smul.u32 16, %s33
      %s376 = smul.u32 %s33, 128
      loop: start=0, step=1, limit=128
      $region61: #{graphcast_processor_forward.4} parent=59 // loop_pre_header
        _
      $region62: #{graphcast_processor_forward.4} parent=59 // loop_header
        %s378 = sphi 0, %s382
        %p379 = scmp.ge.s32.totalorder %s378, 128
      $region63: #{graphcast_processor_forward.4} parent=59 // loop_header_branch
        %381 = sbr.rel (%p379) target = $region67
      $region64: #{graphcast_processor_forward.4} parent=59 // loop_body
        %s383 = sadd.s32 %s376, %s378
        %s384 = sld [smem:[#allocation5 + %s383]]
        %s385 = sld [smem:[#allocation6 + %s383]]
        %s386 = scalar_lea.vmem %s3, %s384
        %v387 = vld [vmem:[%s386] sm:$0x1]
        %s388 = scalar_lea.vmem [#allocation2], %s378
        %389 = vst [vmem:[%s388] sm:$0x1] %v387
        %s390 = scalar_lea.vmem %s3, %s385
        %v391 = vld [vmem:[%s390] sm:$0x1]
        %s392 = scalar_lea.vmem [#allocation3], %s378
        %393 = vst [vmem:[%s392] sm:$0x1] %v391
      $region65: #{graphcast_processor_forward.4} parent=59 // loop_footer
        %s382 = sadd.s32 1, %s378
      $region66: #{graphcast_processor_forward.4} parent=59 // loop_footer_branch
        %377 = sbr.rel target = $region62
      $region67: #{graphcast_processor_forward.4} parent=59 // loop_exit
        _
      %v394 = vld [vmem:[%s367] sm:$0xff]
      %v395 = vld [vmem:[%s367 + $0x8] sm:$0xff]
      %v396 = vld [vmem:[%s367 + $0x10] sm:$0xff]
      %v397 = vld [vmem:[%s367 + $0x18] sm:$0xff]
      %v398 = vld [vmem:[%s367 + $0x20] sm:$0xff]
      %v399 = vld [vmem:[%s367 + $0x28] sm:$0xff]
      %v400 = vld [vmem:[%s367 + $0x30] sm:$0xff]
      %v401 = vld [vmem:[%s367 + $0x38] sm:$0xff]
      %v402 = vld [vmem:[%s367 + $0x40] sm:$0xff]
      %v403 = vld [vmem:[%s367 + $0x48] sm:$0xff]
      %v404 = vld [vmem:[%s367 + $0x50] sm:$0xff]
      %v405 = vld [vmem:[%s367 + $0x58] sm:$0xff]
      %v406 = vld [vmem:[%s367 + $0x60] sm:$0xff]
      %v407 = vld [vmem:[%s367 + $0x68] sm:$0xff]
      %v408 = vld [vmem:[%s367 + $0x70] sm:$0xff]
      %v409 = vld [vmem:[%s367 + $0x78] sm:$0xff]
      %v410 = vld [vmem:[%s4] sm:$0xf]
      %v411 = vld [vmem:[%s4 + $0x4] sm:$0xf]
      %v412 = vld [vmem:[%s4 + $0x8] sm:$0xf]
      %v413 = vld [vmem:[%s4 + $0xc] sm:$0xf]
      %v414 = vld [vmem:[%s4 + $0x10] sm:$0xf]
      %v415 = vld [vmem:[%s4 + $0x14] sm:$0xf]
      %v416 = vld [vmem:[%s4 + $0x18] sm:$0xf]
      %v417 = vld [vmem:[%s4 + $0x1c] sm:$0xf]
      %v418 = vld [vmem:[%s4 + $0x20] sm:$0xf]
      %v419 = vld [vmem:[%s4 + $0x24] sm:$0xf]
      %v420 = vld [vmem:[%s4 + $0x28] sm:$0xf]
      %v421 = vld [vmem:[%s4 + $0x2c] sm:$0xf]
      %v422 = vld [vmem:[%s4 + $0x30] sm:$0xf]
      %v423 = vld [vmem:[%s4 + $0x34] sm:$0xf]
      %v424 = vld [vmem:[%s4 + $0x38] sm:$0xf]
      %v425 = vld [vmem:[%s4 + $0x3c] sm:$0xf]
      %v426 = vpack.c.bf16 %v395, %v394
      %v427 = vpack.c.bf16 %v397, %v396
      %v428 = vpack.c.bf16 %v399, %v398
      %v429 = vpack.c.bf16 %v401, %v400
      %v430 = vpack.c.bf16 %v403, %v402
      %v431 = vpack.c.bf16 %v405, %v404
      %v432 = vpack.c.bf16 %v407, %v406
      %v433 = vpack.c.bf16 %v409, %v408
      %v434 = vld [vmem:[#allocation2] sm:$0xff]
      %v435 = vld [vmem:[#allocation2 + $0x8] sm:$0xff]
      %v436 = vld [vmem:[#allocation2 + $0x10] sm:$0xff]
      %v437 = vld [vmem:[#allocation2 + $0x18] sm:$0xff]
      %v438 = vld [vmem:[#allocation2 + $0x20] sm:$0xff]
      %v439 = vld [vmem:[#allocation2 + $0x28] sm:$0xff]
      %v440 = vld [vmem:[#allocation2 + $0x30] sm:$0xff]
      %v441 = vld [vmem:[#allocation2 + $0x38] sm:$0xff]
      %v442 = vld [vmem:[#allocation2 + $0x40] sm:$0xff]
      %v443 = vld [vmem:[#allocation2 + $0x48] sm:$0xff]
      %v444 = vld [vmem:[#allocation2 + $0x50] sm:$0xff]
      %v445 = vld [vmem:[#allocation2 + $0x58] sm:$0xff]
      %v446 = vld [vmem:[#allocation2 + $0x60] sm:$0xff]
      %v447 = vld [vmem:[#allocation2 + $0x68] sm:$0xff]
      %v448 = vld [vmem:[#allocation2 + $0x70] sm:$0xff]
      %v449 = vld [vmem:[#allocation2 + $0x78] sm:$0xff]
      %v450 = vld [vmem:[%s5] sm:$0xf]
      %v451 = vld [vmem:[%s5 + $0x4] sm:$0xf]
      %v452 = vld [vmem:[%s5 + $0x8] sm:$0xf]
      %v453 = vld [vmem:[%s5 + $0xc] sm:$0xf]
      %v454 = vld [vmem:[%s5 + $0x10] sm:$0xf]
      %v455 = vld [vmem:[%s5 + $0x14] sm:$0xf]
      %v456 = vld [vmem:[%s5 + $0x18] sm:$0xf]
      %v457 = vld [vmem:[%s5 + $0x1c] sm:$0xf]
      %v458 = vld [vmem:[%s5 + $0x20] sm:$0xf]
      %v459 = vld [vmem:[%s5 + $0x24] sm:$0xf]
      %v460 = vld [vmem:[%s5 + $0x28] sm:$0xf]
      %v461 = vld [vmem:[%s5 + $0x2c] sm:$0xf]
      %v462 = vld [vmem:[%s5 + $0x30] sm:$0xf]
      %v463 = vld [vmem:[%s5 + $0x34] sm:$0xf]
      %v464 = vld [vmem:[%s5 + $0x38] sm:$0xf]
      %v465 = vld [vmem:[%s5 + $0x3c] sm:$0xf]
      %v466 = vpack.c.bf16 %v435, %v434
      %v467 = vpack.c.bf16 %v437, %v436
      %v468 = vpack.c.bf16 %v439, %v438
      %v469 = vpack.c.bf16 %v441, %v440
      %v470 = vpack.c.bf16 %v443, %v442
      %v471 = vpack.c.bf16 %v445, %v444
      %v472 = vpack.c.bf16 %v447, %v446
      %v473 = vpack.c.bf16 %v449, %v448
      %v490 = vunpack.c.l.b16 %v450
      %v491 = vunpack.c.l.b16 %v451
      %v492 = vunpack.c.l.b16 %v452
      %v493 = vunpack.c.l.b16 %v453
      %v494 = vunpack.c.l.b16 %v454
      %v495 = vunpack.c.l.b16 %v455
      %v496 = vunpack.c.l.b16 %v456
      %v497 = vunpack.c.l.b16 %v457
      %v498 = vunpack.c.l.b16 %v458
      %v499 = vunpack.c.l.b16 %v459
      %v500 = vunpack.c.l.b16 %v460
      %v501 = vunpack.c.l.b16 %v461
      %v502 = vunpack.c.l.b16 %v462
      %v503 = vunpack.c.l.b16 %v463
      %v504 = vunpack.c.l.b16 %v464
      %v505 = vunpack.c.l.b16 %v465
      %v506 = vpack.c.b16 %v491, %v490
      %v507 = vpack.c.b16 %v493, %v492
      %v508 = vpack.c.b16 %v495, %v494
      %v509 = vpack.c.b16 %v497, %v496
      %v510 = vpack.c.b16 %v499, %v498
      %v511 = vpack.c.b16 %v501, %v500
      %v512 = vpack.c.b16 %v503, %v502
      %v513 = vpack.c.b16 %v505, %v504
      %522 = vmatprep.subr.bf16.mxu0 0
      %523 = vmatpush1.bf16.msra.mxu0 %v506
      %524 = vmatprep.subr.bf16.mxu0 0
      %525 = vmatpush1.bf16.msra.mxu0 %v507
      %526 = vmatprep.subr.bf16.mxu0 0
      %527 = vmatpush1.bf16.msra.mxu0 %v508
      %528 = vmatprep.subr.bf16.mxu0 0
      %529 = vmatpush1.bf16.msra.mxu0 %v509
      %530 = vmatprep.subr.bf16.mxu0 0
      %531 = vmatpush1.bf16.msra.mxu0 %v510
      %532 = vmatprep.subr.bf16.mxu0 0
      %533 = vmatpush1.bf16.msra.mxu0 %v511
      %534 = vmatprep.subr.bf16.mxu0 0
      %535 = vmatpush1.bf16.msra.mxu0 %v512
      %536 = vmatprep.subr.bf16.mxu0 0
      %537 = vmatpush1.bf16.msra.mxu0 %v513
      %538 = vmatprep.subr.bf16.mxu0 0
      %539 = vmatpush1.bf16.msra.mxu0 0
      %540 = vmatprep.subr.bf16.mxu0 0
      %541 = vmatpush1.bf16.msra.mxu0 0
      %542 = vmatprep.subr.bf16.mxu0 0
      %543 = vmatpush1.bf16.msra.mxu0 0
      %544 = vmatprep.subr.bf16.mxu0 0
      %545 = vmatpush1.bf16.msra.mxu0 0
      %546 = vmatprep.subr.bf16.mxu0 0
      %547 = vmatpush1.bf16.msra.mxu0 0
      %548 = vmatprep.subr.bf16.mxu0 0
      %549 = vmatpush1.bf16.msra.mxu0 0
      %550 = vmatprep.subr.bf16.mxu0 0
      %551 = vmatpush1.bf16.msra.mxu0 0
      %552 = vmatprep.subr.bf16.mxu0 0
      %553 = vmatpush1.bf16.msra.mxu0 0
      %554 = vmatprep.mubr.bf16.mxu0 0
      %555 = vmatmul.mubr.bf16.gmra.mrb[0].mxu0 %v466
      %v556 = vpop.f32.mrb[0].mxu0
      %v557 = vadd.f32 0.0, %v556
      %v558 = vpop.f32.mrb[0].mxu0
      %v559 = vpop.f32.mrb[0].mxu0
      %v560 = vadd.f32 0.0, %v559
      %v561 = vpop.f32.mrb[0].mxu0
      %562 = vmatprep.mubr.bf16.mxu0 0
      %563 = vmatmul.mubr.bf16.gmra.mrb[0].mxu0 %v467
      %v564 = vpop.f32.mrb[0].mxu0
      %v565 = vadd.f32 0.0, %v564
      %v566 = vpop.f32.mrb[0].mxu0
      %v567 = vpop.f32.mrb[0].mxu0
      %v568 = vadd.f32 0.0, %v567
      %v569 = vpop.f32.mrb[0].mxu0
      %570 = vmatprep.mubr.bf16.mxu0 0
      %571 = vmatmul.mubr.bf16.gmra.mrb[0].mxu0 %v468
      %v572 = vpop.f32.mrb[0].mxu0
      %v573 = vadd.f32 0.0, %v572
      %v574 = vpop.f32.mrb[0].mxu0
      %v575 = vpop.f32.mrb[0].mxu0
      %v576 = vadd.f32 0.0, %v575
      %v577 = vpop.f32.mrb[0].mxu0
      %578 = vmatprep.mubr.bf16.mxu0 0
      %579 = vmatmul.mubr.bf16.gmra.mrb[0].mxu0 %v469
      %v580 = vpop.f32.mrb[0].mxu0
      %v581 = vadd.f32 0.0, %v580
      %v582 = vpop.f32.mrb[0].mxu0
      %v583 = vpop.f32.mrb[0].mxu0
      %v584 = vadd.f32 0.0, %v583
      %v585 = vpop.f32.mrb[0].mxu0
      %586 = vmatprep.mubr.bf16.mxu0 0
      %587 = vmatmul.mubr.bf16.gmra.mrb[0].mxu0 %v470
      %v588 = vpop.f32.mrb[0].mxu0
      %v589 = vadd.f32 0.0, %v588
      %v590 = vpop.f32.mrb[0].mxu0
      %v591 = vpop.f32.mrb[0].mxu0
      %v592 = vadd.f32 0.0, %v591
      %v593 = vpop.f32.mrb[0].mxu0
      %594 = vmatprep.mubr.bf16.mxu0 0
      %595 = vmatmul.mubr.bf16.gmra.mrb[0].mxu0 %v471
      %v596 = vpop.f32.mrb[0].mxu0
      %v597 = vadd.f32 0.0, %v596
      %v598 = vpop.f32.mrb[0].mxu0
      %v599 = vpop.f32.mrb[0].mxu0
      %v600 = vadd.f32 0.0, %v599
      %v601 = vpop.f32.mrb[0].mxu0
      %602 = vmatprep.mubr.bf16.mxu0 0
      %603 = vmatmul.mubr.bf16.gmra.mrb[0].mxu0 %v472
      %v604 = vpop.f32.mrb[0].mxu0
      %v605 = vadd.f32 0.0, %v604
      %v606 = vpop.f32.mrb[0].mxu0
      %v607 = vpop.f32.mrb[0].mxu0
      %v608 = vadd.f32 0.0, %v607
      %v609 = vpop.f32.mrb[0].mxu0
      %610 = vmatprep.mubr.bf16.mxu0 0
      %611 = vmatmul.mubr.bf16.gmra.mrb[0].mxu0 %v473
      %v612 = vpop.f32.mrb[0].mxu0
      %v613 = vadd.f32 0.0, %v612
      %v614 = vpop.f32.mrb[0].mxu0
      %v615 = vpop.f32.mrb[0].mxu0
      %v616 = vadd.f32 0.0, %v615
      %v617 = vpop.f32.mrb[0].mxu0
      %618 = vdwg.mxu0
      %v635 = vunpack.c.l.b16 %v410
      %v636 = vunpack.c.l.b16 %v411
      %v637 = vunpack.c.l.b16 %v412
      %v638 = vunpack.c.l.b16 %v413
      %v639 = vunpack.c.l.b16 %v414
      %v640 = vunpack.c.l.b16 %v415
      %v641 = vunpack.c.l.b16 %v416
      %v642 = vunpack.c.l.b16 %v417
      %v643 = vunpack.c.l.b16 %v418
      %v644 = vunpack.c.l.b16 %v419
      %v645 = vunpack.c.l.b16 %v420
      %v646 = vunpack.c.l.b16 %v421
      %v647 = vunpack.c.l.b16 %v422
      %v648 = vunpack.c.l.b16 %v423
      %v649 = vunpack.c.l.b16 %v424
      %v650 = vunpack.c.l.b16 %v425
      %v651 = vpack.c.b16 %v636, %v635
      %v652 = vpack.c.b16 %v638, %v637
      %v653 = vpack.c.b16 %v640, %v639
      %v654 = vpack.c.b16 %v642, %v641
      %v655 = vpack.c.b16 %v644, %v643
      %v656 = vpack.c.b16 %v646, %v645
      %v657 = vpack.c.b16 %v648, %v647
      %v658 = vpack.c.b16 %v650, %v649
      %667 = vmatprep.subr.bf16.mxu0 0
      %668 = vmatpush1.bf16.msra.mxu0 %v651
      %669 = vmatprep.subr.bf16.mxu0 0
      %670 = vmatpush1.bf16.msra.mxu0 %v652
      %671 = vmatprep.subr.bf16.mxu0 0
      %672 = vmatpush1.bf16.msra.mxu0 %v653
      %673 = vmatprep.subr.bf16.mxu0 0
      %674 = vmatpush1.bf16.msra.mxu0 %v654
      %675 = vmatprep.subr.bf16.mxu0 0
      %676 = vmatpush1.bf16.msra.mxu0 %v655
      %677 = vmatprep.subr.bf16.mxu0 0
      %678 = vmatpush1.bf16.msra.mxu0 %v656
      %679 = vmatprep.subr.bf16.mxu0 0
      %680 = vmatpush1.bf16.msra.mxu0 %v657
      %681 = vmatprep.subr.bf16.mxu0 0
      %682 = vmatpush1.bf16.msra.mxu0 %v658
      %683 = vmatprep.subr.bf16.mxu0 0
      %684 = vmatpush1.bf16.msra.mxu0 0
      %685 = vmatprep.subr.bf16.mxu0 0
      %686 = vmatpush1.bf16.msra.mxu0 0
      %687 = vmatprep.subr.bf16.mxu0 0
      %688 = vmatpush1.bf16.msra.mxu0 0
      %689 = vmatprep.subr.bf16.mxu0 0
      %690 = vmatpush1.bf16.msra.mxu0 0
      %691 = vmatprep.subr.bf16.mxu0 0
      %692 = vmatpush1.bf16.msra.mxu0 0
      %693 = vmatprep.subr.bf16.mxu0 0
      %694 = vmatpush1.bf16.msra.mxu0 0
      %695 = vmatprep.subr.bf16.mxu0 0
      %696 = vmatpush1.bf16.msra.mxu0 0
      %697 = vmatprep.subr.bf16.mxu0 0
      %698 = vmatpush1.bf16.msra.mxu0 0
      %699 = vmatprep.mubr.bf16.mxu0 0
      %700 = vmatmul.mubr.bf16.gmra.mrb[0].mxu0 %v426
      %v701 = vpop.f32.mrb[0].mxu0
      %v702 = vadd.f32 %v557, %v701
      %v703 = vpop.f32.mrb[0].mxu0
      %v704 = vpop.f32.mrb[0].mxu0
      %v705 = vadd.f32 %v560, %v704
      %v706 = vpop.f32.mrb[0].mxu0
      %707 = vmatprep.mubr.bf16.mxu0 0
      %708 = vmatmul.mubr.bf16.gmra.mrb[0].mxu0 %v427
      %v709 = vpop.f32.mrb[0].mxu0
      %v710 = vadd.f32 %v565, %v709
      %v711 = vpop.f32.mrb[0].mxu0
      %v712 = vpop.f32.mrb[0].mxu0
      %v713 = vadd.f32 %v568, %v712
      %v714 = vpop.f32.mrb[0].mxu0
      %715 = vmatprep.mubr.bf16.mxu0 0
      %716 = vmatmul.mubr.bf16.gmra.mrb[0].mxu0 %v428
      %v717 = vpop.f32.mrb[0].mxu0
      %v718 = vadd.f32 %v573, %v717
      %v719 = vpop.f32.mrb[0].mxu0
      %v720 = vpop.f32.mrb[0].mxu0
      %v721 = vadd.f32 %v576, %v720
      %v722 = vpop.f32.mrb[0].mxu0
      %723 = vmatprep.mubr.bf16.mxu0 0
      %724 = vmatmul.mubr.bf16.gmra.mrb[0].mxu0 %v429
      %v725 = vpop.f32.mrb[0].mxu0
      %v726 = vadd.f32 %v581, %v725
      %v727 = vpop.f32.mrb[0].mxu0
      %v728 = vpop.f32.mrb[0].mxu0
      %v729 = vadd.f32 %v584, %v728
      %v730 = vpop.f32.mrb[0].mxu0
      %731 = vmatprep.mubr.bf16.mxu0 0
      %732 = vmatmul.mubr.bf16.gmra.mrb[0].mxu0 %v430
      %v733 = vpop.f32.mrb[0].mxu0
      %v734 = vadd.f32 %v589, %v733
      %v735 = vpop.f32.mrb[0].mxu0
      %v736 = vpop.f32.mrb[0].mxu0
      %v737 = vadd.f32 %v592, %v736
      %v738 = vpop.f32.mrb[0].mxu0
      %739 = vmatprep.mubr.bf16.mxu0 0
      %740 = vmatmul.mubr.bf16.gmra.mrb[0].mxu0 %v431
      %v741 = vpop.f32.mrb[0].mxu0
      %v742 = vadd.f32 %v597, %v741
      %v743 = vpop.f32.mrb[0].mxu0
      %v744 = vpop.f32.mrb[0].mxu0
      %v745 = vadd.f32 %v600, %v744
      %v746 = vpop.f32.mrb[0].mxu0
      %747 = vmatprep.mubr.bf16.mxu0 0
      %748 = vmatmul.mubr.bf16.gmra.mrb[0].mxu0 %v432
      %v749 = vpop.f32.mrb[0].mxu0
      %v750 = vadd.f32 %v605, %v749
      %v751 = vpop.f32.mrb[0].mxu0
      %v752 = vpop.f32.mrb[0].mxu0
      %v753 = vadd.f32 %v608, %v752
      %v754 = vpop.f32.mrb[0].mxu0
      %755 = vmatprep.mubr.bf16.mxu0 0
      %756 = vmatmul.mubr.bf16.gmra.mrb[0].mxu0 %v433
      %v757 = vpop.f32.mrb[0].mxu0
      %v758 = vadd.f32 %v613, %v757
      %v759 = vpop.f32.mrb[0].mxu0
      %v760 = vpop.f32.mrb[0].mxu0
      %v761 = vadd.f32 %v616, %v760
      %v762 = vpop.f32.mrb[0].mxu0
      %763 = vdwg.mxu0
      %v764 = vld [vmem:[#allocation3] sm:$0xff]
      %v765 = vld [vmem:[#allocation3 + $0x8] sm:$0xff]
      %v766 = vld [vmem:[#allocation3 + $0x10] sm:$0xff]
      %v767 = vld [vmem:[#allocation3 + $0x18] sm:$0xff]
      %v768 = vld [vmem:[#allocation3 + $0x20] sm:$0xff]
      %v769 = vld [vmem:[#allocation3 + $0x28] sm:$0xff]
      %v770 = vld [vmem:[#allocation3 + $0x30] sm:$0xff]
      %v771 = vld [vmem:[#allocation3 + $0x38] sm:$0xff]
      %v772 = vld [vmem:[#allocation3 + $0x40] sm:$0xff]
      %v773 = vld [vmem:[#allocation3 + $0x48] sm:$0xff]
      %v774 = vld [vmem:[#allocation3 + $0x50] sm:$0xff]
      %v775 = vld [vmem:[#allocation3 + $0x58] sm:$0xff]
      %v776 = vld [vmem:[#allocation3 + $0x60] sm:$0xff]
      %v777 = vld [vmem:[#allocation3 + $0x68] sm:$0xff]
      %v778 = vld [vmem:[#allocation3 + $0x70] sm:$0xff]
      %v779 = vld [vmem:[#allocation3 + $0x78] sm:$0xff]
      %v780 = vld [vmem:[%s6] sm:$0xf]
      %v781 = vld [vmem:[%s6 + $0x4] sm:$0xf]
      %v782 = vld [vmem:[%s6 + $0x8] sm:$0xf]
      %v783 = vld [vmem:[%s6 + $0xc] sm:$0xf]
      %v784 = vld [vmem:[%s6 + $0x10] sm:$0xf]
      %v785 = vld [vmem:[%s6 + $0x14] sm:$0xf]
      %v786 = vld [vmem:[%s6 + $0x18] sm:$0xf]
      %v787 = vld [vmem:[%s6 + $0x1c] sm:$0xf]
      %v788 = vld [vmem:[%s6 + $0x20] sm:$0xf]
      %v789 = vld [vmem:[%s6 + $0x24] sm:$0xf]
      %v790 = vld [vmem:[%s6 + $0x28] sm:$0xf]
      %v791 = vld [vmem:[%s6 + $0x2c] sm:$0xf]
      %v792 = vld [vmem:[%s6 + $0x30] sm:$0xf]
      %v793 = vld [vmem:[%s6 + $0x34] sm:$0xf]
      %v794 = vld [vmem:[%s6 + $0x38] sm:$0xf]
      %v795 = vld [vmem:[%s6 + $0x3c] sm:$0xf]
      %v796 = vpack.c.bf16 %v765, %v764
      %v797 = vpack.c.bf16 %v767, %v766
      %v798 = vpack.c.bf16 %v769, %v768
      %v799 = vpack.c.bf16 %v771, %v770
      %v800 = vpack.c.bf16 %v773, %v772
      %v801 = vpack.c.bf16 %v775, %v774
      %v802 = vpack.c.bf16 %v777, %v776
      %v803 = vpack.c.bf16 %v779, %v778
      %v820 = vunpack.c.l.b16 %v780
      %v821 = vunpack.c.l.b16 %v781
      %v822 = vunpack.c.l.b16 %v782
      %v823 = vunpack.c.l.b16 %v783
      %v824 = vunpack.c.l.b16 %v784
      %v825 = vunpack.c.l.b16 %v785
      %v826 = vunpack.c.l.b16 %v786
      %v827 = vunpack.c.l.b16 %v787
      %v828 = vunpack.c.l.b16 %v788
      %v829 = vunpack.c.l.b16 %v789
      %v830 = vunpack.c.l.b16 %v790
      %v831 = vunpack.c.l.b16 %v791
      %v832 = vunpack.c.l.b16 %v792
      %v833 = vunpack.c.l.b16 %v793
      %v834 = vunpack.c.l.b16 %v794
      %v835 = vunpack.c.l.b16 %v795
      %v836 = vpack.c.b16 %v821, %v820
      %v837 = vpack.c.b16 %v823, %v822
      %v838 = vpack.c.b16 %v825, %v824
      %v839 = vpack.c.b16 %v827, %v826
      %v840 = vpack.c.b16 %v829, %v828
      %v841 = vpack.c.b16 %v831, %v830
      %v842 = vpack.c.b16 %v833, %v832
      %v843 = vpack.c.b16 %v835, %v834
      %852 = vmatprep.subr.bf16.mxu0 0
      %853 = vmatpush1.bf16.msra.mxu0 %v836
      %854 = vmatprep.subr.bf16.mxu0 0
      %855 = vmatpush1.bf16.msra.mxu0 %v837
      %856 = vmatprep.subr.bf16.mxu0 0
      %857 = vmatpush1.bf16.msra.mxu0 %v838
      %858 = vmatprep.subr.bf16.mxu0 0
      %859 = vmatpush1.bf16.msra.mxu0 %v839
      %860 = vmatprep.subr.bf16.mxu0 0
      %861 = vmatpush1.bf16.msra.mxu0 %v840
      %862 = vmatprep.subr.bf16.mxu0 0
      %863 = vmatpush1.bf16.msra.mxu0 %v841
      %864 = vmatprep.subr.bf16.mxu0 0
      %865 = vmatpush1.bf16.msra.mxu0 %v842
      %866 = vmatprep.subr.bf16.mxu0 0
      %867 = vmatpush1.bf16.msra.mxu0 %v843
      %868 = vmatprep.subr.bf16.mxu0 0
      %869 = vmatpush1.bf16.msra.mxu0 0
      %870 = vmatprep.subr.bf16.mxu0 0
      %871 = vmatpush1.bf16.msra.mxu0 0
      %872 = vmatprep.subr.bf16.mxu0 0
      %873 = vmatpush1.bf16.msra.mxu0 0
      %874 = vmatprep.subr.bf16.mxu0 0
      %875 = vmatpush1.bf16.msra.mxu0 0
      %876 = vmatprep.subr.bf16.mxu0 0
      %877 = vmatpush1.bf16.msra.mxu0 0
      %878 = vmatprep.subr.bf16.mxu0 0
      %879 = vmatpush1.bf16.msra.mxu0 0
      %880 = vmatprep.subr.bf16.mxu0 0
      %881 = vmatpush1.bf16.msra.mxu0 0
      %882 = vmatprep.subr.bf16.mxu0 0
      %883 = vmatpush1.bf16.msra.mxu0 0
      %884 = vmatprep.mubr.bf16.mxu0 0
      %885 = vmatmul.mubr.bf16.gmra.mrb[0].mxu0 %v796
      %v886 = vpop.f32.mrb[0].mxu0
      %v887 = vadd.f32 0.0, %v886
      %v888 = vpop.f32.mrb[0].mxu0
      %v889 = vpop.f32.mrb[0].mxu0
      %v890 = vadd.f32 0.0, %v889
      %v891 = vpop.f32.mrb[0].mxu0
      %892 = vmatprep.mubr.bf16.mxu0 0
      %893 = vmatmul.mubr.bf16.gmra.mrb[0].mxu0 %v797
      %v894 = vpop.f32.mrb[0].mxu0
      %v895 = vadd.f32 0.0, %v894
      %v896 = vpop.f32.mrb[0].mxu0
      %v897 = vpop.f32.mrb[0].mxu0
      %v898 = vadd.f32 0.0, %v897
      %v899 = vpop.f32.mrb[0].mxu0
      %900 = vmatprep.mubr.bf16.mxu0 0
      %901 = vmatmul.mubr.bf16.gmra.mrb[0].mxu0 %v798
      %v902 = vpop.f32.mrb[0].mxu0
      %v903 = vadd.f32 0.0, %v902
      %v904 = vpop.f32.mrb[0].mxu0
      %v905 = vpop.f32.mrb[0].mxu0
      %v906 = vadd.f32 0.0, %v905
      %v907 = vpop.f32.mrb[0].mxu0
      %908 = vmatprep.mubr.bf16.mxu0 0
      %909 = vmatmul.mubr.bf16.gmra.mrb[0].mxu0 %v799
      %v910 = vpop.f32.mrb[0].mxu0
      %v911 = vadd.f32 0.0, %v910
      %v912 = vpop.f32.mrb[0].mxu0
      %v913 = vpop.f32.mrb[0].mxu0
      %v914 = vadd.f32 0.0, %v913
      %v915 = vpop.f32.mrb[0].mxu0
      %916 = vmatprep.mubr.bf16.mxu0 0
      %917 = vmatmul.mubr.bf16.gmra.mrb[0].mxu0 %v800
      %v918 = vpop.f32.mrb[0].mxu0
      %v919 = vadd.f32 0.0, %v918
      %v920 = vpop.f32.mrb[0].mxu0
      %v921 = vpop.f32.mrb[0].mxu0
      %v922 = vadd.f32 0.0, %v921
      %v923 = vpop.f32.mrb[0].mxu0
      %924 = vmatprep.mubr.bf16.mxu0 0
      %925 = vmatmul.mubr.bf16.gmra.mrb[0].mxu0 %v801
      %v926 = vpop.f32.mrb[0].mxu0
      %v927 = vadd.f32 0.0, %v926
      %v928 = vpop.f32.mrb[0].mxu0
      %v929 = vpop.f32.mrb[0].mxu0
      %v930 = vadd.f32 0.0, %v929
      %v931 = vpop.f32.mrb[0].mxu0
      %932 = vmatprep.mubr.bf16.mxu0 0
      %933 = vmatmul.mubr.bf16.gmra.mrb[0].mxu0 %v802
      %v934 = vpop.f32.mrb[0].mxu0
      %v935 = vadd.f32 0.0, %v934
      %v936 = vpop.f32.mrb[0].mxu0
      %v937 = vpop.f32.mrb[0].mxu0
      %v938 = vadd.f32 0.0, %v937
      %v939 = vpop.f32.mrb[0].mxu0
      %940 = vmatprep.mubr.bf16.mxu0 0
      %941 = vmatmul.mubr.bf16.gmra.mrb[0].mxu0 %v803
      %v942 = vpop.f32.mrb[0].mxu0
      %v943 = vadd.f32 0.0, %v942
      %v944 = vpop.f32.mrb[0].mxu0
      %v945 = vpop.f32.mrb[0].mxu0
      %v946 = vadd.f32 0.0, %v945
      %v947 = vpop.f32.mrb[0].mxu0
      %948 = vdwg.mxu0
      %v949 = vadd.f32 %v702, %v887
      %v950 = vadd.f32 %v705, %v890
      %v951 = vadd.f32 %v710, %v895
      %v952 = vadd.f32 %v713, %v898
      %v953 = vadd.f32 %v718, %v903
      %v954 = vadd.f32 %v721, %v906
      %v955 = vadd.f32 %v726, %v911
      %v956 = vadd.f32 %v729, %v914
      %v957 = vadd.f32 %v734, %v919
      %v958 = vadd.f32 %v737, %v922
      %v959 = vadd.f32 %v742, %v927
      %v960 = vadd.f32 %v745, %v930
      %v961 = vadd.f32 %v750, %v935
      %v962 = vadd.f32 %v753, %v938
      %v963 = vadd.f32 %v758, %v943
      %v964 = vadd.f32 %v761, %v946
      %v965 = vld [vmem:[%s7] sm:$0x1]
      %v967 = vlaneseq
      %v968 = vshrl.u32 %v967, 7
      %v969 = vsub.s32 0, %v968
      %v970 = vrot.slane %v965, %v969
      %v972 = vadd.f32 %v949, %v970
      %v973 = vadd.f32 %v950, %v970
      %v974 = vadd.f32 %v951, %v970
      %v975 = vadd.f32 %v952, %v970
      %v976 = vadd.f32 %v953, %v970
      %v977 = vadd.f32 %v954, %v970
      %v978 = vadd.f32 %v955, %v970
      %v979 = vadd.f32 %v956, %v970
      %v980 = vadd.f32 %v957, %v970
      %v981 = vadd.f32 %v958, %v970
      %v982 = vadd.f32 %v959, %v970
      %v983 = vadd.f32 %v960, %v970
      %v984 = vadd.f32 %v961, %v970
      %v985 = vadd.f32 %v962, %v970
      %v986 = vadd.f32 %v963, %v970
      %v987 = vadd.f32 %v964, %v970
      %v988 = vxor.u32 %v972, 2147483648
      %v989 = vxor.u32 %v973, 2147483648
      %v990 = vxor.u32 %v974, 2147483648
      %v991 = vxor.u32 %v975, 2147483648
      %v992 = vxor.u32 %v976, 2147483648
      %v993 = vxor.u32 %v977, 2147483648
      %v994 = vxor.u32 %v978, 2147483648
      %v995 = vxor.u32 %v979, 2147483648
      %v996 = vxor.u32 %v980, 2147483648
      %v997 = vxor.u32 %v981, 2147483648
      %v998 = vxor.u32 %v982, 2147483648
      %v999 = vxor.u32 %v983, 2147483648
      %v1000 = vxor.u32 %v984, 2147483648
      %v1001 = vxor.u32 %v985, 2147483648
      %v1002 = vxor.u32 %v986, 2147483648
      %v1003 = vxor.u32 %v987, 2147483648
      %v1004 = vmul.f32 %v988, 1.442695
      %v1005 = vpow.pop %v1004
      %v1006 = vmul.f32 %v989, 1.442695
      %v1007 = vpow.pop %v1006
      %v1008 = vmul.f32 %v990, 1.442695
      %v1009 = vpow.pop %v1008
      %v1010 = vmul.f32 %v991, 1.442695
      %v1011 = vpow.pop %v1010
      %v1012 = vmul.f32 %v992, 1.442695
      %v1013 = vpow.pop %v1012
      %v1014 = vmul.f32 %v993, 1.442695
      %v1015 = vpow.pop %v1014
      %v1016 = vmul.f32 %v994, 1.442695
      %v1017 = vpow.pop %v1016
      %v1018 = vmul.f32 %v995, 1.442695
      %v1019 = vpow.pop %v1018
      %v1020 = vmul.f32 %v996, 1.442695
      %v1021 = vpow.pop %v1020
      %v1022 = vmul.f32 %v997, 1.442695
      %v1023 = vpow.pop %v1022
      %v1024 = vmul.f32 %v998, 1.442695
      %v1025 = vpow.pop %v1024
      %v1026 = vmul.f32 %v999, 1.442695
      %v1027 = vpow.pop %v1026
      %v1028 = vmul.f32 %v1000, 1.442695
      %v1029 = vpow.pop %v1028
      %v1030 = vmul.f32 %v1001, 1.442695
      %v1031 = vpow.pop %v1030
      %v1032 = vmul.f32 %v1002, 1.442695
      %v1033 = vpow.pop %v1032
      %v1034 = vmul.f32 %v1003, 1.442695
      %v1035 = vpow.pop %v1034
      %v1036 = vadd.f32 %v1005, 1.0
      %v1037 = vadd.f32 %v1007, 1.0
      %v1038 = vadd.f32 %v1009, 1.0
      %v1039 = vadd.f32 %v1011, 1.0
      %v1040 = vadd.f32 %v1013, 1.0
      %v1041 = vadd.f32 %v1015, 1.0
      %v1042 = vadd.f32 %v1017, 1.0
      %v1043 = vadd.f32 %v1019, 1.0
      %v1044 = vadd.f32 %v1021, 1.0
      %v1045 = vadd.f32 %v1023, 1.0
      %v1046 = vadd.f32 %v1025, 1.0
      %v1047 = vadd.f32 %v1027, 1.0
      %v1048 = vadd.f32 %v1029, 1.0
      %v1049 = vadd.f32 %v1031, 1.0
      %v1050 = vadd.f32 %v1033, 1.0
      %v1051 = vadd.f32 %v1035, 1.0
      %v1052 = vrcp.pop %v1036
      %v1053 = vmul.f32 1.0, %v1052
      %v1054 = vrcp.pop %v1037
      %v1055 = vmul.f32 1.0, %v1054
      %v1056 = vrcp.pop %v1038
      %v1057 = vmul.f32 1.0, %v1056
      %v1058 = vrcp.pop %v1039
      %v1059 = vmul.f32 1.0, %v1058
      %v1060 = vrcp.pop %v1040
      %v1061 = vmul.f32 1.0, %v1060
      %v1062 = vrcp.pop %v1041
      %v1063 = vmul.f32 1.0, %v1062
      %v1064 = vrcp.pop %v1042
      %v1065 = vmul.f32 1.0, %v1064
      %v1066 = vrcp.pop %v1043
      %v1067 = vmul.f32 1.0, %v1066
      %v1068 = vrcp.pop %v1044
      %v1069 = vmul.f32 1.0, %v1068
      %v1070 = vrcp.pop %v1045
      %v1071 = vmul.f32 1.0, %v1070
      %v1072 = vrcp.pop %v1046
      %v1073 = vmul.f32 1.0, %v1072
      %v1074 = vrcp.pop %v1047
      %v1075 = vmul.f32 1.0, %v1074
      %v1076 = vrcp.pop %v1048
      %v1077 = vmul.f32 1.0, %v1076
      %v1078 = vrcp.pop %v1049
      %v1079 = vmul.f32 1.0, %v1078
      %v1080 = vrcp.pop %v1050
      %v1081 = vmul.f32 1.0, %v1080
      %v1082 = vrcp.pop %v1051
      %v1083 = vmul.f32 1.0, %v1082
      %v1084 = vmul.f32 %v972, %v1053
      %v1085 = vmul.f32 %v973, %v1055
      %v1086 = vmul.f32 %v974, %v1057
      %v1087 = vmul.f32 %v975, %v1059
      %v1088 = vmul.f32 %v976, %v1061
      %v1089 = vmul.f32 %v977, %v1063
      %v1090 = vmul.f32 %v978, %v1065
      %v1091 = vmul.f32 %v979, %v1067
      %v1092 = vmul.f32 %v980, %v1069
      %v1093 = vmul.f32 %v981, %v1071
      %v1094 = vmul.f32 %v982, %v1073
      %v1095 = vmul.f32 %v983, %v1075
      %v1096 = vmul.f32 %v984, %v1077
      %v1097 = vmul.f32 %v985, %v1079
      %v1098 = vmul.f32 %v986, %v1081
      %v1099 = vmul.f32 %v987, %v1083
      %v1100 = vld [vmem:[%s8] sm:$0xf]
      %v1101 = vld [vmem:[%s8 + $0x4] sm:$0xf]
      %v1102 = vld [vmem:[%s8 + $0x8] sm:$0xf]
      %v1103 = vld [vmem:[%s8 + $0xc] sm:$0xf]
      %v1104 = vld [vmem:[%s8 + $0x10] sm:$0xf]
      %v1105 = vld [vmem:[%s8 + $0x14] sm:$0xf]
      %v1106 = vld [vmem:[%s8 + $0x18] sm:$0xf]
      %v1107 = vld [vmem:[%s8 + $0x1c] sm:$0xf]
      %v1108 = vld [vmem:[%s8 + $0x20] sm:$0xf]
      %v1109 = vld [vmem:[%s8 + $0x24] sm:$0xf]
      %v1110 = vld [vmem:[%s8 + $0x28] sm:$0xf]
      %v1111 = vld [vmem:[%s8 + $0x2c] sm:$0xf]
      %v1112 = vld [vmem:[%s8 + $0x30] sm:$0xf]
      %v1113 = vld [vmem:[%s8 + $0x34] sm:$0xf]
      %v1114 = vld [vmem:[%s8 + $0x38] sm:$0xf]
      %v1115 = vld [vmem:[%s8 + $0x3c] sm:$0xf]
      %v1116 = vpack.c.bf16 %v1085, %v1084
      %v1117 = vpack.c.bf16 %v1087, %v1086
      %v1118 = vpack.c.bf16 %v1089, %v1088
      %v1119 = vpack.c.bf16 %v1091, %v1090
      %v1120 = vpack.c.bf16 %v1093, %v1092
      %v1121 = vpack.c.bf16 %v1095, %v1094
      %v1122 = vpack.c.bf16 %v1097, %v1096
      %v1123 = vpack.c.bf16 %v1099, %v1098
      %v1124 = vld [vmem:[%s9] sm:$0x1]
      %v1126 = vlaneseq
      %v1127 = vshrl.u32 %v1126, 7
      %v1128 = vsub.s32 0, %v1127
      %v1129 = vrot.slane %v1124, %v1128
      %v1147 = vunpack.c.l.b16 %v1100
      %v1148 = vunpack.c.l.b16 %v1101
      %v1149 = vunpack.c.l.b16 %v1102
      %v1150 = vunpack.c.l.b16 %v1103
      %v1151 = vunpack.c.l.b16 %v1104
      %v1152 = vunpack.c.l.b16 %v1105
      %v1153 = vunpack.c.l.b16 %v1106
      %v1154 = vunpack.c.l.b16 %v1107
      %v1155 = vunpack.c.l.b16 %v1108
      %v1156 = vunpack.c.l.b16 %v1109
      %v1157 = vunpack.c.l.b16 %v1110
      %v1158 = vunpack.c.l.b16 %v1111
      %v1159 = vunpack.c.l.b16 %v1112
      %v1160 = vunpack.c.l.b16 %v1113
      %v1161 = vunpack.c.l.b16 %v1114
      %v1162 = vunpack.c.l.b16 %v1115
      %v1163 = vpack.c.b16 %v1148, %v1147
      %v1164 = vpack.c.b16 %v1150, %v1149
      %v1165 = vpack.c.b16 %v1152, %v1151
      %v1166 = vpack.c.b16 %v1154, %v1153
      %v1167 = vpack.c.b16 %v1156, %v1155
      %v1168 = vpack.c.b16 %v1158, %v1157
      %v1169 = vpack.c.b16 %v1160, %v1159
      %v1170 = vpack.c.b16 %v1162, %v1161
      %1179 = vmatprep.subr.bf16.mxu0 0
      %1180 = vmatpush1.bf16.msra.mxu0 %v1163
      %1181 = vmatprep.subr.bf16.mxu0 0
      %1182 = vmatpush1.bf16.msra.mxu0 %v1164
      %1183 = vmatprep.subr.bf16.mxu0 0
      %1184 = vmatpush1.bf16.msra.mxu0 %v1165
      %1185 = vmatprep.subr.bf16.mxu0 0
      %1186 = vmatpush1.bf16.msra.mxu0 %v1166
      %1187 = vmatprep.subr.bf16.mxu0 0
      %1188 = vmatpush1.bf16.msra.mxu0 %v1167
      %1189 = vmatprep.subr.bf16.mxu0 0
      %1190 = vmatpush1.bf16.msra.mxu0 %v1168
      %1191 = vmatprep.subr.bf16.mxu0 0
      %1192 = vmatpush1.bf16.msra.mxu0 %v1169
      %1193 = vmatprep.subr.bf16.mxu0 0
      %1194 = vmatpush1.bf16.msra.mxu0 %v1170
      %1195 = vmatprep.subr.bf16.mxu0 0
      %1196 = vmatpush1.bf16.msra.mxu0 0
      %1197 = vmatprep.subr.bf16.mxu0 0
      %1198 = vmatpush1.bf16.msra.mxu0 0
      %1199 = vmatprep.subr.bf16.mxu0 0
      %1200 = vmatpush1.bf16.msra.mxu0 0
      %1201 = vmatprep.subr.bf16.mxu0 0
      %1202 = vmatpush1.bf16.msra.mxu0 0
      %1203 = vmatprep.subr.bf16.mxu0 0
      %1204 = vmatpush1.bf16.msra.mxu0 0
      %1205 = vmatprep.subr.bf16.mxu0 0
      %1206 = vmatpush1.bf16.msra.mxu0 0
      %1207 = vmatprep.subr.bf16.mxu0 0
      %1208 = vmatpush1.bf16.msra.mxu0 0
      %1209 = vmatprep.subr.bf16.mxu0 0
      %1210 = vmatpush1.bf16.msra.mxu0 0
      %1211 = vmatprep.mubr.bf16.mxu0 0
      %1212 = vmatmul.mubr.bf16.gmra.mrb[0].mxu0 %v1116
      %v1213 = vpop.f32.mrb[0].mxu0
      %v1214 = vadd.f32 %v1129, %v1213
      %v1215 = vpop.f32.mrb[0].mxu0
      %v1216 = vpop.f32.mrb[0].mxu0
      %v1217 = vadd.f32 %v1129, %v1216
      %v1218 = vpop.f32.mrb[0].mxu0
      %1219 = vmatprep.mubr.bf16.mxu0 0
      %1220 = vmatmul.mubr.bf16.gmra.mrb[0].mxu0 %v1117
      %v1221 = vpop.f32.mrb[0].mxu0
      %v1222 = vadd.f32 %v1129, %v1221
      %v1223 = vpop.f32.mrb[0].mxu0
      %v1224 = vpop.f32.mrb[0].mxu0
      %v1225 = vadd.f32 %v1129, %v1224
      %v1226 = vpop.f32.mrb[0].mxu0
      %1227 = vmatprep.mubr.bf16.mxu0 0
      %1228 = vmatmul.mubr.bf16.gmra.mrb[0].mxu0 %v1118
      %v1229 = vpop.f32.mrb[0].mxu0
      %v1230 = vadd.f32 %v1129, %v1229
      %v1231 = vpop.f32.mrb[0].mxu0
      %v1232 = vpop.f32.mrb[0].mxu0
      %v1233 = vadd.f32 %v1129, %v1232
      %v1234 = vpop.f32.mrb[0].mxu0
      %1235 = vmatprep.mubr.bf16.mxu0 0
      %1236 = vmatmul.mubr.bf16.gmra.mrb[0].mxu0 %v1119
      %v1237 = vpop.f32.mrb[0].mxu0
      %v1238 = vadd.f32 %v1129, %v1237
      %v1239 = vpop.f32.mrb[0].mxu0
      %v1240 = vpop.f32.mrb[0].mxu0
      %v1241 = vadd.f32 %v1129, %v1240
      %v1242 = vpop.f32.mrb[0].mxu0
      %1243 = vmatprep.mubr.bf16.mxu0 0
      %1244 = vmatmul.mubr.bf16.gmra.mrb[0].mxu0 %v1120
      %v1245 = vpop.f32.mrb[0].mxu0
      %v1246 = vadd.f32 %v1129, %v1245
      %v1247 = vpop.f32.mrb[0].mxu0
      %v1248 = vpop.f32.mrb[0].mxu0
      %v1249 = vadd.f32 %v1129, %v1248
      %v1250 = vpop.f32.mrb[0].mxu0
      %1251 = vmatprep.mubr.bf16.mxu0 0
      %1252 = vmatmul.mubr.bf16.gmra.mrb[0].mxu0 %v1121
      %v1253 = vpop.f32.mrb[0].mxu0
      %v1254 = vadd.f32 %v1129, %v1253
      %v1255 = vpop.f32.mrb[0].mxu0
      %v1256 = vpop.f32.mrb[0].mxu0
      %v1257 = vadd.f32 %v1129, %v1256
      %v1258 = vpop.f32.mrb[0].mxu0
      %1259 = vmatprep.mubr.bf16.mxu0 0
      %1260 = vmatmul.mubr.bf16.gmra.mrb[0].mxu0 %v1122
      %v1261 = vpop.f32.mrb[0].mxu0
      %v1262 = vadd.f32 %v1129, %v1261
      %v1263 = vpop.f32.mrb[0].mxu0
      %v1264 = vpop.f32.mrb[0].mxu0
      %v1265 = vadd.f32 %v1129, %v1264
      %v1266 = vpop.f32.mrb[0].mxu0
      %1267 = vmatprep.mubr.bf16.mxu0 0
      %1268 = vmatmul.mubr.bf16.gmra.mrb[0].mxu0 %v1123
      %v1269 = vpop.f32.mrb[0].mxu0
      %v1270 = vadd.f32 %v1129, %v1269
      %v1271 = vpop.f32.mrb[0].mxu0
      %v1272 = vpop.f32.mrb[0].mxu0
      %v1273 = vadd.f32 %v1129, %v1272
      %v1274 = vpop.f32.mrb[0].mxu0
      %1275 = vdwg.mxu0
      %v1276 = vld [vmem:[%s10] sm:$0x1]
      %v1277 = vld [vmem:[%s11] sm:$0x1]
      %1278 = vadd.xlane.f32.xlu0 %v1214
      %v1279 = vpop.xlane.xlu0 %1278
      %1280 = vadd.xlane.f32.xlu0 %v1217
      %v1281 = vpop.xlane.xlu0 %1280
      %1282 = vadd.xlane.f32.xlu0 %v1222
      %v1283 = vpop.xlane.xlu0 %1282
      %1284 = vadd.xlane.f32.xlu0 %v1225
      %v1285 = vpop.xlane.xlu0 %1284
      %1286 = vadd.xlane.f32.xlu0 %v1230
      %v1287 = vpop.xlane.xlu0 %1286
      %1288 = vadd.xlane.f32.xlu0 %v1233
      %v1289 = vpop.xlane.xlu0 %1288
      %1290 = vadd.xlane.f32.xlu0 %v1238
      %v1291 = vpop.xlane.xlu0 %1290
      %1292 = vadd.xlane.f32.xlu0 %v1241
      %v1293 = vpop.xlane.xlu0 %1292
      %1294 = vadd.xlane.f32.xlu0 %v1246
      %v1295 = vpop.xlane.xlu0 %1294
      %1296 = vadd.xlane.f32.xlu0 %v1249
      %v1297 = vpop.xlane.xlu0 %1296
      %1298 = vadd.xlane.f32.xlu0 %v1254
      %v1299 = vpop.xlane.xlu0 %1298
      %1300 = vadd.xlane.f32.xlu0 %v1257
      %v1301 = vpop.xlane.xlu0 %1300
      %1302 = vadd.xlane.f32.xlu0 %v1262
      %v1303 = vpop.xlane.xlu0 %1302
      %1304 = vadd.xlane.f32.xlu0 %v1265
      %v1305 = vpop.xlane.xlu0 %1304
      %1306 = vadd.xlane.f32.xlu0 %v1270
      %v1307 = vpop.xlane.xlu0 %1306
      %1308 = vadd.xlane.f32.xlu0 %v1273
      %v1309 = vpop.xlane.xlu0 %1308
      %v1310 = vrcp.pop 128.0
      %v1311 = vmul.f32 %v1279, %v1310
      %v1312 = vmul.f32 %v1281, %v1310
      %v1313 = vmul.f32 %v1283, %v1310
      %v1314 = vmul.f32 %v1285, %v1310
      %v1315 = vmul.f32 %v1287, %v1310
      %v1316 = vmul.f32 %v1289, %v1310
      %v1317 = vmul.f32 %v1291, %v1310
      %v1318 = vmul.f32 %v1293, %v1310
      %v1319 = vmul.f32 %v1295, %v1310
      %v1320 = vmul.f32 %v1297, %v1310
      %v1321 = vmul.f32 %v1299, %v1310
      %v1322 = vmul.f32 %v1301, %v1310
      %v1323 = vmul.f32 %v1303, %v1310
      %v1324 = vmul.f32 %v1305, %v1310
      %v1325 = vmul.f32 %v1307, %v1310
      %v1326 = vmul.f32 %v1309, %v1310
      %v1327 = vsub.f32 %v1214, %v1311
      %v1328 = vsub.f32 %v1217, %v1312
      %v1329 = vsub.f32 %v1222, %v1313
      %v1330 = vsub.f32 %v1225, %v1314
      %v1331 = vsub.f32 %v1230, %v1315
      %v1332 = vsub.f32 %v1233, %v1316
      %v1333 = vsub.f32 %v1238, %v1317
      %v1334 = vsub.f32 %v1241, %v1318
      %v1335 = vsub.f32 %v1246, %v1319
      %v1336 = vsub.f32 %v1249, %v1320
      %v1337 = vsub.f32 %v1254, %v1321
      %v1338 = vsub.f32 %v1257, %v1322
      %v1339 = vsub.f32 %v1262, %v1323
      %v1340 = vsub.f32 %v1265, %v1324
      %v1341 = vsub.f32 %v1270, %v1325
      %v1342 = vsub.f32 %v1273, %v1326
      %v1343 = vmul.f32 %v1327, %v1327
      %v1344 = vmul.f32 %v1328, %v1328
      %v1345 = vmul.f32 %v1329, %v1329
      %v1346 = vmul.f32 %v1330, %v1330
      %v1347 = vmul.f32 %v1331, %v1331
      %v1348 = vmul.f32 %v1332, %v1332
      %v1349 = vmul.f32 %v1333, %v1333
      %v1350 = vmul.f32 %v1334, %v1334
      %v1351 = vmul.f32 %v1335, %v1335
      %v1352 = vmul.f32 %v1336, %v1336
      %v1353 = vmul.f32 %v1337, %v1337
      %v1354 = vmul.f32 %v1338, %v1338
      %v1355 = vmul.f32 %v1339, %v1339
      %v1356 = vmul.f32 %v1340, %v1340
      %v1357 = vmul.f32 %v1341, %v1341
      %v1358 = vmul.f32 %v1342, %v1342
      %1359 = vadd.xlane.f32.xlu0 %v1343
      %v1360 = vpop.xlane.xlu0 %1359
      %1361 = vadd.xlane.f32.xlu0 %v1344
      %v1362 = vpop.xlane.xlu0 %1361
      %1363 = vadd.xlane.f32.xlu0 %v1345
      %v1364 = vpop.xlane.xlu0 %1363
      %1365 = vadd.xlane.f32.xlu0 %v1346
      %v1366 = vpop.xlane.xlu0 %1365
      %1367 = vadd.xlane.f32.xlu0 %v1347
      %v1368 = vpop.xlane.xlu0 %1367
      %1369 = vadd.xlane.f32.xlu0 %v1348
      %v1370 = vpop.xlane.xlu0 %1369
      %1371 = vadd.xlane.f32.xlu0 %v1349
      %v1372 = vpop.xlane.xlu0 %1371
      %1373 = vadd.xlane.f32.xlu0 %v1350
      %v1374 = vpop.xlane.xlu0 %1373
      %1375 = vadd.xlane.f32.xlu0 %v1351
      %v1376 = vpop.xlane.xlu0 %1375
      %1377 = vadd.xlane.f32.xlu0 %v1352
      %v1378 = vpop.xlane.xlu0 %1377
      %1379 = vadd.xlane.f32.xlu0 %v1353
      %v1380 = vpop.xlane.xlu0 %1379
      %1381 = vadd.xlane.f32.xlu0 %v1354
      %v1382 = vpop.xlane.xlu0 %1381
      %1383 = vadd.xlane.f32.xlu0 %v1355
      %v1384 = vpop.xlane.xlu0 %1383
      %1385 = vadd.xlane.f32.xlu0 %v1356
      %v1386 = vpop.xlane.xlu0 %1385
      %1387 = vadd.xlane.f32.xlu0 %v1357
      %v1388 = vpop.xlane.xlu0 %1387
      %1389 = vadd.xlane.f32.xlu0 %v1358
      %v1390 = vpop.xlane.xlu0 %1389
      %v1391 = vmul.f32 %v1360, %v1310
      %v1392 = vmul.f32 %v1362, %v1310
      %v1393 = vmul.f32 %v1364, %v1310
      %v1394 = vmul.f32 %v1366, %v1310
      %v1395 = vmul.f32 %v1368, %v1310
      %v1396 = vmul.f32 %v1370, %v1310
      %v1397 = vmul.f32 %v1372, %v1310
      %v1398 = vmul.f32 %v1374, %v1310
      %v1399 = vmul.f32 %v1376, %v1310
      %v1400 = vmul.f32 %v1378, %v1310
      %v1401 = vmul.f32 %v1380, %v1310
      %v1402 = vmul.f32 %v1382, %v1310
      %v1403 = vmul.f32 %v1384, %v1310
      %v1404 = vmul.f32 %v1386, %v1310
      %v1405 = vmul.f32 %v1388, %v1310
      %v1406 = vmul.f32 %v1390, %v1310
      %v1407 = vadd.f32 %v1391, 1e-05
      %v1408 = vadd.f32 %v1392, 1e-05
      %v1409 = vadd.f32 %v1393, 1e-05
      %v1410 = vadd.f32 %v1394, 1e-05
      %v1411 = vadd.f32 %v1395, 1e-05
      %v1412 = vadd.f32 %v1396, 1e-05
      %v1413 = vadd.f32 %v1397, 1e-05
      %v1414 = vadd.f32 %v1398, 1e-05
      %v1415 = vadd.f32 %v1399, 1e-05
      %v1416 = vadd.f32 %v1400, 1e-05
      %v1417 = vadd.f32 %v1401, 1e-05
      %v1418 = vadd.f32 %v1402, 1e-05
      %v1419 = vadd.f32 %v1403, 1e-05
      %v1420 = vadd.f32 %v1404, 1e-05
      %v1421 = vadd.f32 %v1405, 1e-05
      %v1422 = vadd.f32 %v1406, 1e-05
      %v1423 = vrsqrt.pop %v1407
      %v1424 = vrsqrt.pop %v1408
      %v1425 = vrsqrt.pop %v1409
      %v1426 = vrsqrt.pop %v1410
      %v1427 = vrsqrt.pop %v1411
      %v1428 = vrsqrt.pop %v1412
      %v1429 = vrsqrt.pop %v1413
      %v1430 = vrsqrt.pop %v1414
      %v1431 = vrsqrt.pop %v1415
      %v1432 = vrsqrt.pop %v1416
      %v1433 = vrsqrt.pop %v1417
      %v1434 = vrsqrt.pop %v1418
      %v1435 = vrsqrt.pop %v1419
      %v1436 = vrsqrt.pop %v1420
      %v1437 = vrsqrt.pop %v1421
      %v1438 = vrsqrt.pop %v1422
      %v1439 = vmul.f32 %v1327, %v1423
      %v1440 = vmul.f32 %v1328, %v1424
      %v1441 = vmul.f32 %v1329, %v1425
      %v1442 = vmul.f32 %v1330, %v1426
      %v1443 = vmul.f32 %v1331, %v1427
      %v1444 = vmul.f32 %v1332, %v1428
      %v1445 = vmul.f32 %v1333, %v1429
      %v1446 = vmul.f32 %v1334, %v1430
      %v1447 = vmul.f32 %v1335, %v1431
      %v1448 = vmul.f32 %v1336, %v1432
      %v1449 = vmul.f32 %v1337, %v1433
      %v1450 = vmul.f32 %v1338, %v1434
      %v1451 = vmul.f32 %v1339, %v1435
      %v1452 = vmul.f32 %v1340, %v1436
      %v1453 = vmul.f32 %v1341, %v1437
      %v1454 = vmul.f32 %v1342, %v1438
      %v1456 = vlaneseq
      %v1457 = vshrl.u32 %v1456, 7
      %v1458 = vsub.s32 0, %v1457
      %v1459 = vrot.slane %v1276, %v1458
      %v1461 = vmul.f32 %v1439, %v1459
      %v1462 = vmul.f32 %v1440, %v1459
      %v1463 = vmul.f32 %v1441, %v1459
      %v1464 = vmul.f32 %v1442, %v1459
      %v1465 = vmul.f32 %v1443, %v1459
      %v1466 = vmul.f32 %v1444, %v1459
      %v1467 = vmul.f32 %v1445, %v1459
      %v1468 = vmul.f32 %v1446, %v1459
      %v1469 = vmul.f32 %v1447, %v1459
      %v1470 = vmul.f32 %v1448, %v1459
      %v1471 = vmul.f32 %v1449, %v1459
      %v1472 = vmul.f32 %v1450, %v1459
      %v1473 = vmul.f32 %v1451, %v1459
      %v1474 = vmul.f32 %v1452, %v1459
      %v1475 = vmul.f32 %v1453, %v1459
      %v1476 = vmul.f32 %v1454, %v1459
      %v1478 = vlaneseq
      %v1479 = vshrl.u32 %v1478, 7
      %v1480 = vsub.s32 0, %v1479
      %v1481 = vrot.slane %v1277, %v1480
      %v1483 = vadd.f32 %v1461, %v1481
      %v1484 = vadd.f32 %v1462, %v1481
      %v1485 = vadd.f32 %v1463, %v1481
      %v1486 = vadd.f32 %v1464, %v1481
      %v1487 = vadd.f32 %v1465, %v1481
      %v1488 = vadd.f32 %v1466, %v1481
      %v1489 = vadd.f32 %v1467, %v1481
      %v1490 = vadd.f32 %v1468, %v1481
      %v1491 = vadd.f32 %v1469, %v1481
      %v1492 = vadd.f32 %v1470, %v1481
      %v1493 = vadd.f32 %v1471, %v1481
      %v1494 = vadd.f32 %v1472, %v1481
      %v1495 = vadd.f32 %v1473, %v1481
      %v1496 = vadd.f32 %v1474, %v1481
      %v1497 = vadd.f32 %v1475, %v1481
      %v1498 = vadd.f32 %v1476, %v1481
      %v1499 = vadd.f32 %v1483, %v394
      %v1500 = vadd.f32 %v1484, %v395
      %v1501 = vadd.f32 %v1485, %v396
      %v1502 = vadd.f32 %v1486, %v397
      %v1503 = vadd.f32 %v1487, %v398
      %v1504 = vadd.f32 %v1488, %v399
      %v1505 = vadd.f32 %v1489, %v400
      %v1506 = vadd.f32 %v1490, %v401
      %v1507 = vadd.f32 %v1491, %v402
      %v1508 = vadd.f32 %v1492, %v403
      %v1509 = vadd.f32 %v1493, %v404
      %v1510 = vadd.f32 %v1494, %v405
      %v1511 = vadd.f32 %v1495, %v406
      %v1512 = vadd.f32 %v1496, %v407
      %v1513 = vadd.f32 %v1497, %v408
      %v1514 = vadd.f32 %v1498, %v409
      %1515 = vst [vmem:[%s373] sm:$0xff] %v1499
      %1516 = vst [vmem:[%s373 + $0x8] sm:$0xff] %v1500
      %1517 = vst [vmem:[%s373 + $0x10] sm:$0xff] %v1501
      %1518 = vst [vmem:[%s373 + $0x18] sm:$0xff] %v1502
      %1519 = vst [vmem:[%s373 + $0x20] sm:$0xff] %v1503
      %1520 = vst [vmem:[%s373 + $0x28] sm:$0xff] %v1504
      %1521 = vst [vmem:[%s373 + $0x30] sm:$0xff] %v1505
      %1522 = vst [vmem:[%s373 + $0x38] sm:$0xff] %v1506
      %1523 = vst [vmem:[%s373 + $0x40] sm:$0xff] %v1507
      %1524 = vst [vmem:[%s373 + $0x48] sm:$0xff] %v1508
      %1525 = vst [vmem:[%s373 + $0x50] sm:$0xff] %v1509
      %1526 = vst [vmem:[%s373 + $0x58] sm:$0xff] %v1510
      %1527 = vst [vmem:[%s373 + $0x60] sm:$0xff] %v1511
      %1528 = vst [vmem:[%s373 + $0x68] sm:$0xff] %v1512
      %1529 = vst [vmem:[%s373 + $0x70] sm:$0xff] %v1513
      %1530 = vst [vmem:[%s373 + $0x78] sm:$0xff] %v1514
      %s1531 = smul.u32 16, %s33
      %p1532 = scmp.lt.s32.totalorder %s1531, 31
      %s1533 = scalar_select %p1532, %s1531, 31
      %s1534 = smul.addr %s1533, 8
      %s1535 = scalar_lea.vmem %s12, %s1534
      // Predicated region
      $region68: #{graphcast_processor_forward.4} parent=59 // pred_check
        %p1536 = pneg %p266
      $region69: #{graphcast_processor_forward.4} parent=59 // pred_check_branch
        %1538 = sbr.rel (%p1536) target = $region71
      $region70: #{graphcast_processor_forward.4} parent=59 // pred_region
        %s1539 = smul.u32 16, %s33
      $region71: #{graphcast_processor_forward.4} parent=59 // pred_fallthru
        _
    $region60: #{graphcast_processor_forward.4} parent=5 // pred_fallthru
      _
    %p1540 = scmp.le.s32.totalorder 2, %s28
    // Predicated region
    $region72: #{graphcast_processor_forward.4} parent=5 // pred_check
      %p1541 = pneg %p1540
    $region73: #{graphcast_processor_forward.4} parent=5 // pred_check_branch
      %1543 = sbr.rel (%p1541) target = $region75
    $region74: #{graphcast_processor_forward.4} parent=5 // pred_region
      %s1544 = ssub.s32 %s28, 2
      // Predicated region
      $region76: #{graphcast_processor_forward.4} parent=74 // pred_check
        %p1545 = pneg %p272
      $region77: #{graphcast_processor_forward.4} parent=74 // pred_check_branch
        %1547 = sbr.rel (%p1545) target = $region79
      $region78: #{graphcast_processor_forward.4} parent=74 // pred_region
        %s1548 = smul.u32 16, %s34
        %p1549 = scmp.lt.s32.totalorder %s1548, 31
        %s1550 = scalar_select %p1549, %s1548, 31
        %s1551 = smul.addr %s1550, 8
        %s1552 = scalar_lea.vmem %s12, %s1551
      $region79: #{graphcast_processor_forward.4} parent=74 // pred_fallthru
        _
    $region75: #{graphcast_processor_forward.4} parent=5 // pred_fallthru
      _
  $region6: #{graphcast_processor_forward.4} parent=0 // loop_footer
    %s32 = sadd.s32 1, %s28
  $region7: #{graphcast_processor_forward.4} parent=0 // loop_footer_branch
    %27 = sbr.rel target = $region3
  $region8: #{graphcast_processor_forward.4} parent=0 // loop_exit
    _

</llo_original>
